<compile_context>
chip_gen: v7x
topology: tpu7x:2x2x1
jax: 0.10.0
libtpu: 0.0.40
codegen_flags: <defaults>
</compile_context>

<pallas_src>
import jax
import jax.numpy as jnp
from jax import lax
from jax.experimental import pallas as pl
from jax.experimental.pallas import tpu as pltpu

# ------------------------- static model dimensions -------------------------
T_IN = 750                  # time samples (32 * (750 // 4 // 8) == 736)
K1, P1 = 51, 25             # firstconv kernel / pad (time axis)
K3, P3 = 15, 7              # separableConv kernel / pad (time axis)
T1 = T_IN                   # after conv1 (same padding)
T2 = T1 // 4                # 187 after AvgPool(1,4)
T3 = T2 // 8                # 23  after AvgPool(1,8)
C1, C2 = 16, 32
ALPHA = 0.06
EPS = 1e-5
HIGH = lax.Precision.HIGHEST        # reference path only

# ----------------------------- kernel tiling --------------------------------
B_BLK = 8                   # samples per grid step
K1P = 56                    # conv1 taps padded to a multiple of 8 (zero weights)
N_GRP = K1P // 8            # 7 groups of (8 taps x 2 rows) = 16 sublanes each
XW = 800                    # lane width of the pre-shifted input (>= 48 + 750)


def _elu(x, alpha=ALPHA):
    # matches nn.ELU(alpha): x if x > 0 else alpha * (exp(x) - 1)
    return jnp.where(x > 0, x, alpha * (jnp.exp(jnp.minimum(x, 0.0)) - 1.0))


# ------------------------------ Pallas kernel ------------------------------
def eegnet_kernel(x2_ref, wc_ref, b2_ref, p2_ref, w3_ref, b3_ref, p3_ref,
                  wfc_ref, bfc_ref, out_ref, xp_ref, xp3_ref, h4_ref):
    # ---- per-sample pipeline: fused conv1/BN1/depthwise/BN2 -> ELU -> pool4
    # ---- -> separableConv/BN3 -> ELU -> pool8; everything on the MXU.
    @pl.loop(0, B_BLK)
    def _sample(s):
        xs = x2_ref[s]                                    # (16, XW) bf16
        # im2col for the fused (1,51)+(2,1) conv: patch row 2k+r holds
        # x[row r, t+k]. Shifts 0..7 are baked onto sublanes by the wrapper,
        # the remaining multiples of 8 are static lane offsets, so the build
        # is 7 aligned (16, 750) ref->ref copies (no per-tap VPU work).
        for g in range(N_GRP):
            xp_ref[16 * g:16 * (g + 1), :] = xs[:, 8 * g:8 * g + T1]
        h2 = jnp.dot(wc_ref[...], xp_ref[...],
                     preferred_element_type=jnp.float32)  # (32, 750) f32
        h2 = _elu(h2 + b2_ref[...])                       # BN2 bias folded
        # AvgPool(1,4); conv3's zero padding is folded into the pooling matrix
        # so no scratch zero-fill / pad round-trip is needed.
        h2p = jnp.dot(h2.astype(jnp.bfloat16), p2_ref[...],
                      preferred_element_type=jnp.float32)  # (32, 201)
        h2p = h2p.astype(jnp.bfloat16)
        # im2col for separableConv: 15 taps stacked along K -> one MXU matmul.
        for k in range(K3):
            xp3_ref[C2 * k:C2 * (k + 1), :] = h2p[:, k:k + T2]
        h3 = jnp.dot(w3_ref[...], xp3_ref[...],
                     preferred_element_type=jnp.float32)  # (32, 187), BN3 scale folded
        h3 = _elu(h3 + b3_ref[...])
        # AvgPool(1,8) as matmul.
        h4_ref[s] = jnp.dot(h3.astype(jnp.bfloat16), p3_ref[...],
                            preferred_element_type=jnp.float32)   # (32, 23) f32

    # ---- classifier: Linear(736, 2), evaluated for the whole block, one
    # ---- (B_BLK, 2) store per grid step (not one masked store per sample).
    h4 = h4_ref[...]                                      # (B_BLK, 32, 23) f32
    l0 = jnp.sum(jnp.sum(h4 * wfc_ref[0][None], axis=2), axis=1, keepdims=True)
    l1 = jnp.sum(jnp.sum(h4 * wfc_ref[1][None], axis=2), axis=1, keepdims=True)
    out_ref[...] = jnp.concatenate([l0, l1], axis=1) + bfc_ref[...]


# ------------------------------ wrapper (glue) ------------------------------
def eegnet_forward(x, kparams):
    """x: (B, 1, 2, T_IN) float32 (PyTorch NCHW).  Returns (B, 2) logits."""
    (wc, b2, p2pad, w3r, b3, p3, wfc_r, bfc) = kparams
    B = x.shape[0]
    nblk = -(-B // B_BLK)
    Bp = nblk * B_BLK

    x0 = x[:, 0, :, :].astype(jnp.float32)                 # (B, 2, 750)
    x0 = jnp.pad(x0, ((0, Bp - B), (0, 0), (0, 0)))        # pad batch to block
    pad_r = XW + (16 // 2 - 1) - P1 - T_IN                 # 32 right zeros
    xt = jnp.pad(x0, ((0, 0), (0, 0), (P1, pad_r)))        # (Bp, 2, 807)
    # interleave (row r, shift d) for d = 0..7 onto 16 sublanes (sublane j
    # holds x[row j%2, t + j//2]) -> dense vreg/DMA utilisation.
    x2 = jnp.stack([xt[:, j % 2, (j // 2):(j // 2) + XW] for j in range(16)],
                   axis=1).astype(jnp.bfloat16)            # (Bp, 16, 800)

    def const(shape):
        n = len(shape)
        return pl.BlockSpec(shape, lambda b, n=n: (0,) * n)

    out = pl.pallas_call(
        eegnet_kernel,
        out_shape=jax.ShapeDtypeStruct((Bp, 2), jnp.float32),
        grid_spec=pltpu.PrefetchScalarGridSpec(
            num_scalar_prefetch=0,
            grid=(nblk,),
            in_specs=[
                pl.BlockSpec((B_BLK, 16, XW), lambda b: (b, 0, 0)),
                const((C2, 2 * K1P)),            # fused conv1 weight (bf16)
                const((C2, 1)),                  # fused BN1/BN2 bias (f32)
                const((T1, T2 + 2 * P3)),        # pool4 + conv3-pad matrix
                const((C2, K3 * C2)),            # separableConv weight (bf16)
                const((C2, 1)),                  # BN3 bias (f32)
                const((T2, T3)),                 # pool8 matrix
                const((2, C2, T3)),              # FC weight (c-major flatten)
                const((1, 2)),                   # FC bias
            ],
            out_specs=pl.BlockSpec((B_BLK, 2), lambda b: (b, 0)),
            scratch_shapes=[
                pltpu.VMEM((2 * K1P, T1), jnp.bfloat16),   # conv1 im2col
                pltpu.VMEM((K3 * C2, T2), jnp.bfloat16),   # conv3 im2col
                pltpu.VMEM((B_BLK, C2, T3), jnp.float32),  # pooled features
            ]),
        compiler_params=pltpu.CompilerParams(
            dimension_semantics=("parallel",),
            vmem_limit_bytes=32 * 1024 * 1024),
    )(x2, wc, b2, p2pad, w3r, b3, p3, wfc_r, bfc)
    return out[:B]


# --------------------- deterministic parameter synthesis --------------------
def init_params(key):
    ks = jax.random.split(key, 8)

    def nrm(k, shape, scale=0.1):
        return (scale * jax.random.normal(k, shape)).astype(jnp.float32)

    def bn(k, c):
        k1, k2, k3, k4 = jax.random.split(k, 4)
        gamma = (1.0 + 0.1 * jax.random.normal(k1, (c,))).astype(jnp.float32)
        beta = nrm(k2, (c,))
        mean = nrm(k3, (c,))
        var = jax.random.uniform(k4, (c,), minval=0.5, maxval=1.5).astype(jnp.float32)
        return gamma, beta, mean, var

    return dict(
        w1=nrm(ks[0], (16, 1, 1, 51)),      # Conv2d(1,16,(1,51))  OIHW
        w2=nrm(ks[1], (32, 1, 2, 1)),       # Conv2d(16,32,(2,1),groups=16)
        w3=nrm(ks[2], (32, 32, 1, 15)),     # Conv2d(32,32,(1,15))
        wfc=nrm(ks[3], (2, 736)),           # Linear(736, 2)
        bfc=nrm(ks[4], (2,)),
        bn1=bn(ks[5], 16), bn2=bn(ks[6], 32), bn3=bn(ks[7], 32),
    )


def _fold_bn(bn):
    g, b, m, v = bn
    s = g / jnp.sqrt(v + EPS)
    return s, b - m * s


def prepare_kernel_params(p):
    s1, b1 = _fold_bn(p['bn1'])
    s2, b2 = _fold_bn(p['bn2'])
    s3, b3 = _fold_bn(p['bn3'])

    w1 = p['w1'][:, 0, 0, :]                # (16, 51)
    w2 = p['w2'][:, 0, :, 0]                # (32, 2)
    w3 = p['w3'][:, :, 0, :]                # (32, 32, 15)
    grp = jnp.arange(C2) // 2               # depthwise: out chan o reads in chan o//2

    # fused conv1 + BN1 + depthwise conv2 + BN2-scale weight; column = 2*k + r
    wc = (s2[:, None, None] * w2[:, :, None] *
          s1[grp][:, None, None] * w1[grp][:, None, :])          # (32, 2, 51)
    wc = jnp.transpose(wc, (0, 2, 1)).reshape(C2, 2 * K1)
    wc = jnp.pad(wc, ((0, 0), (0, 2 * (K1P - K1))))              # zero taps 51..55
    b2eff = s2 * (w2[:, 0] + w2[:, 1]) * b1[grp] + b2            # (32,)

    # AvgPool(1,4) + conv3 zero-padding folded into one (750, 201) matrix
    pool2 = ((jnp.arange(T1)[:, None] // 4 == jnp.arange(T2)[None, :])
             .astype(jnp.float32) * 0.25)
    p2pad = jnp.pad(pool2, ((0, 0), (P3, P3)))                   # (750, 201)

    # separableConv weight with BN3 scale folded; im2col row order 32*k + c
    w3r = jnp.transpose(s3[:, None, None] * w3, (0, 2, 1)).reshape(C2, K3 * C2)

    # AvgPool(1,8) matrix
    pool3 = ((jnp.arange(T2)[:, None] // 8 == jnp.arange(T3)[None, :])
             .astype(jnp.float32) * 0.125)                       # (187, 23)

    wfc_r = p['wfc'].reshape(2, C2, T3)                          # flatten is C-major
    bfc = p['bfc'][None, :]                                      # (1, 2)

    return (wc.astype(jnp.bfloat16),
            b2eff[:, None].astype(jnp.float32),
            p2pad.astype(jnp.bfloat16),
            w3r.astype(jnp.bfloat16),
            b3[:, None].astype(jnp.float32),
            pool3.astype(jnp.bfloat16),
            wfc_r.astype(jnp.float32),
            bfc.astype(jnp.float32))


# ------------------------- plain-JAX reference check ------------------------
def reference_forward(x, p):
    def bn_apply(y, bn):
        g, b, m, v = bn
        s = g / jnp.sqrt(v + EPS)
        return y * s[None, :, None, None] + (b - m * s)[None, :, None, None]

    dn = ('NCHW', 'OIHW', 'NCHW')
    B = x.shape[0]
    y = lax.conv_general_dilated(x, p['w1'], (1, 1), ((0, 0), (P1, P1)),
                                 dimension_numbers=dn, precision=HIGH)
    y = bn_apply(y, p['bn1'])
    y = lax.conv_general_dilated(y, p['w2'], (1, 1), ((0, 0), (0, 0)),
                                 dimension_numbers=dn, feature_group_count=16,
                                 precision=HIGH)
    y = _elu(bn_apply(y, p['bn2']))
    y = y[..., :T2 * 4].reshape(B, C2, 1, T2, 4).mean(-1)
    y = lax.conv_general_dilated(y, p['w3'], (1, 1), ((0, 0), (P3, P3)),
                                 dimension_numbers=dn, precision=HIGH)
    y = _elu(bn_apply(y, p['bn3']))
    y = y[..., :T3 * 8].reshape(B, C2, 1, T3, 8).mean(-1)
    flat = y.reshape(B, -1)
    return jnp.dot(flat, p['wfc'].T, precision=HIGH) + p['bfc'][None, :]


# ----------------------------------- main -----------------------------------
if __name__ == "__main__":
    key = jax.random.PRNGKey(0)
    kx, kp = jax.random.split(key)
    B = 2
    x = jax.random.normal(kx, (B, 1, 2, T_IN), dtype=jnp.float32)

    params = init_params(kp)
    kparams = prepare_kernel_params(params)

    out = eegnet_forward(x, kparams)
    out = jax.block_until_ready(out)

    ref = reference_forward(x, params)
    err = float(jnp.max(jnp.abs(out - ref)))
    assert out.shape == (B, 2)
    assert bool(jnp.all(jnp.isfinite(out)))
    # bf16 matmul operands (f32 accumulation) -> slightly looser tolerance
    assert err < 2e-2, f"mismatch vs reference: max_abs_err={err}"
    print("KERNEL_OK")
</pallas_src>

<mosaic_0001>
module attributes {stable_mosaic.version = 11 : i64} {
  func.func @eegnet_kernel(%arg0: i32, %arg1: memref<8x16x800xbf16, #tpu.memory_space<vmem>>, %arg2: memref<32x112xbf16, #tpu.memory_space<vmem>>, %arg3: memref<32x1xf32, #tpu.memory_space<vmem>>, %arg4: memref<750x201xbf16, #tpu.memory_space<vmem>>, %arg5: memref<32x480xbf16, #tpu.memory_space<vmem>>, %arg6: memref<32x1xf32, #tpu.memory_space<vmem>>, %arg7: memref<187x23xbf16, #tpu.memory_space<vmem>>, %arg8: memref<2x32x23xf32, #tpu.memory_space<vmem>>, %arg9: memref<1x2xf32, #tpu.memory_space<vmem>>, %arg10: memref<8x2xf32, #tpu.memory_space<vmem>>, %arg11: memref<112x750xbf16, #tpu.memory_space<vmem>>, %arg12: memref<480x187xbf16, #tpu.memory_space<vmem>>, %arg13: memref<8x32x23xf32, #tpu.memory_space<vmem>>) attributes {dimension_semantics = [#tpu.dimension_semantics<parallel>], iteration_bounds = array<i64: 1>, scalar_prefetch = 0 : i64, scratch_operands = 3 : i64, tpu.core_type = #tpu.core_type<tc>, window_params = [{transform_indices = @transform_0, window_bounds = array<i64: 8, 16, 800>}, {pipeline_mode = #tpu.pipeline_mode<synchronous>, transform_indices = @transform_1, window_bounds = array<i64: 32, 112>}, {pipeline_mode = #tpu.pipeline_mode<synchronous>, transform_indices = @transform_2, window_bounds = array<i64: 32, 1>}, {pipeline_mode = #tpu.pipeline_mode<synchronous>, transform_indices = @transform_3, window_bounds = array<i64: 750, 201>}, {pipeline_mode = #tpu.pipeline_mode<synchronous>, transform_indices = @transform_4, window_bounds = array<i64: 32, 480>}, {pipeline_mode = #tpu.pipeline_mode<synchronous>, transform_indices = @transform_5, window_bounds = array<i64: 32, 1>}, {pipeline_mode = #tpu.pipeline_mode<synchronous>, transform_indices = @transform_6, window_bounds = array<i64: 187, 23>}, {pipeline_mode = #tpu.pipeline_mode<synchronous>, transform_indices = @transform_7, window_bounds = array<i64: 2, 32, 23>}, {pipeline_mode = #tpu.pipeline_mode<synchronous>, transform_indices = @transform_8, window_bounds = array<i64: 1, 2>}, {transform_indices = @transform_9, window_bounds = array<i64: 8, 2>}]} {
    %c0_i32 = arith.constant 0 : i32
    %c8_i32 = arith.constant 8 : i32
    %0 = arith.addi %c0_i32, %c8_i32 : i32
    %c1_i32 = arith.constant 1 : i32
    scf.for %arg14 = %c0_i32 to %0 step %c1_i32  : i32 {
      %c1_i32_15 = arith.constant 1 : i32
      %23 = arith.muli %arg14, %c1_i32_15 : i32
      %c0_i32_16 = arith.constant 0 : i32
      %24 = arith.addi %c0_i32_16, %23 : i32
      %25 = arith.index_cast %24 : i32 to index
      %c0_17 = arith.constant 0 : index
      %c0_18 = arith.constant 0 : index
      %26 = vector.load %arg1[%25, %c0_17, %c0_18] : memref<8x16x800xbf16, #tpu.memory_space<vmem>>, vector<1x16x800xbf16>
      %27 = vector.shape_cast %26 : vector<1x16x800xbf16> to vector<16x800xbf16>
      %28 = vector.extract_strided_slice %27 {offsets = [0, 0], sizes = [16, 750], strides = [1, 1]} : vector<16x800xbf16> to vector<16x750xbf16>
      %c0_19 = arith.constant 0 : index
      %c0_20 = arith.constant 0 : index
      %29 = vector.load %arg11[%c0_19, %c0_20] : memref<112x750xbf16, #tpu.memory_space<vmem>>, vector<16x750xbf16>
      tpu.vector_store %arg11[%c0_19, %c0_20], %28 {strides = array<i32>} : memref<112x750xbf16, #tpu.memory_space<vmem>>, vector<16x750xbf16>,
      %30 = vector.extract_strided_slice %27 {offsets = [0, 8], sizes = [16, 750], strides = [1, 1]} : vector<16x800xbf16> to vector<16x750xbf16>
      %c16 = arith.constant 16 : index
      %c0_21 = arith.constant 0 : index
      %31 = vector.load %arg11[%c16, %c0_21] : memref<112x750xbf16, #tpu.memory_space<vmem>>, vector<16x750xbf16>
      tpu.vector_store %arg11[%c16, %c0_21], %30 {strides = array<i32>} : memref<112x750xbf16, #tpu.memory_space<vmem>>, vector<16x750xbf16>,
      %32 = vector.extract_strided_slice %27 {offsets = [0, 16], sizes = [16, 750], strides = [1, 1]} : vector<16x800xbf16> to vector<16x750xbf16>
      %c32 = arith.constant 32 : index
      %c0_22 = arith.constant 0 : index
      %33 = vector.load %arg11[%c32, %c0_22] : memref<112x750xbf16, #tpu.memory_space<vmem>>, vector<16x750xbf16>
      tpu.vector_store %arg11[%c32, %c0_22], %32 {strides = array<i32>} : memref<112x750xbf16, #tpu.memory_space<vmem>>, vector<16x750xbf16>,
      %34 = vector.extract_strided_slice %27 {offsets = [0, 24], sizes = [16, 750], strides = [1, 1]} : vector<16x800xbf16> to vector<16x750xbf16>
      %c48 = arith.constant 48 : index
      %c0_23 = arith.constant 0 : index
      %35 = vector.load %arg11[%c48, %c0_23] : memref<112x750xbf16, #tpu.memory_space<vmem>>, vector<16x750xbf16>
      tpu.vector_store %arg11[%c48, %c0_23], %34 {strides = array<i32>} : memref<112x750xbf16, #tpu.memory_space<vmem>>, vector<16x750xbf16>,
      %36 = vector.extract_strided_slice %27 {offsets = [0, 32], sizes = [16, 750], strides = [1, 1]} : vector<16x800xbf16> to vector<16x750xbf16>
      %c64 = arith.constant 64 : index
      %c0_24 = arith.constant 0 : index
      %37 = vector.load %arg11[%c64, %c0_24] : memref<112x750xbf16, #tpu.memory_space<vmem>>, vector<16x750xbf16>
      tpu.vector_store %arg11[%c64, %c0_24], %36 {strides = array<i32>} : memref<112x750xbf16, #tpu.memory_space<vmem>>, vector<16x750xbf16>,
      %38 = vector.extract_strided_slice %27 {offsets = [0, 40], sizes = [16, 750], strides = [1, 1]} : vector<16x800xbf16> to vector<16x750xbf16>
      %c80 = arith.constant 80 : index
      %c0_25 = arith.constant 0 : index
      %39 = vector.load %arg11[%c80, %c0_25] : memref<112x750xbf16, #tpu.memory_space<vmem>>, vector<16x750xbf16>
      tpu.vector_store %arg11[%c80, %c0_25], %38 {strides = array<i32>} : memref<112x750xbf16, #tpu.memory_space<vmem>>, vector<16x750xbf16>,
      %40 = vector.extract_strided_slice %27 {offsets = [0, 48], sizes = [16, 750], strides = [1, 1]} : vector<16x800xbf16> to vector<16x750xbf16>
      %c96 = arith.constant 96 : index
      %c0_26 = arith.constant 0 : index
      %41 = vector.load %arg11[%c96, %c0_26] : memref<112x750xbf16, #tpu.memory_space<vmem>>, vector<16x750xbf16>
      tpu.vector_store %arg11[%c96, %c0_26], %40 {strides = array<i32>} : memref<112x750xbf16, #tpu.memory_space<vmem>>, vector<16x750xbf16>,
      %c0_27 = arith.constant 0 : index
      %c0_28 = arith.constant 0 : index
      %42 = vector.load %arg2[%c0_27, %c0_28] : memref<32x112xbf16, #tpu.memory_space<vmem>>, vector<32x112xbf16>
      %c0_29 = arith.constant 0 : index
      %c0_30 = arith.constant 0 : index
      %43 = vector.load %arg11[%c0_29, %c0_30] : memref<112x750xbf16, #tpu.memory_space<vmem>>, vector<112x750xbf16>
      %cst_31 = arith.constant dense<0.000000e+00> : vector<32x750xf32>
      %44 = tpu.matmul %42, %43, %cst_31 {dimension_numbers = #tpu.dot_dimension_numbers<[1], [0], [0], [1], [0, 0, 1, 1], [], []>} : vector<32x112xbf16>, vector<112x750xbf16>, vector<32x750xf32> -> vector<32x750xf32>
      %c0_32 = arith.constant 0 : index
      %c0_33 = arith.constant 0 : index
      %45 = vector.load %arg3[%c0_32, %c0_33] : memref<32x1xf32, #tpu.memory_space<vmem>>, vector<32x1xf32>
      %46 = vector.broadcast %45 : vector<32x1xf32> to vector<32x750xf32>
      %47 = arith.addf %44, %46 : vector<32x750xf32>
      %cst_34 = arith.constant 0.000000e+00 : f32
      %48 = vector.broadcast %cst_34 : f32 to vector<32x750xf32>
      %49 = arith.cmpf ogt, %47, %48 : vector<32x750xf32>
      %cst_35 = arith.constant 0.000000e+00 : f32
      %50 = vector.broadcast %cst_35 : f32 to vector<32x750xf32>
      %51 = arith.minimumf %47, %50 : vector<32x750xf32>
      %52 = math.exp %51 : vector<32x750xf32>
      %cst_36 = arith.constant 1.000000e+00 : f32
      %53 = vector.broadcast %cst_36 : f32 to vector<32x750xf32>
      %54 = arith.subf %52, %53 : vector<32x750xf32>
      %cst_37 = arith.constant 6.000000e-02 : f32
      %55 = vector.broadcast %cst_37 : f32 to vector<32x750xf32>
      %56 = arith.mulf %55, %54 : vector<32x750xf32>
      %57 = arith.select %49, %47, %56 : vector<32x750xi1>, vector<32x750xf32>
      %58 = arith.truncf %57 : vector<32x750xf32> to vector<32x750xbf16>
      %c0_38 = arith.constant 0 : index
      %c0_39 = arith.constant 0 : index
      %59 = vector.load %arg4[%c0_38, %c0_39] : memref<750x201xbf16, #tpu.memory_space<vmem>>, vector<750x201xbf16>
      %cst_40 = arith.constant dense<0.000000e+00> : vector<32x201xf32>
      %60 = tpu.matmul %58, %59, %cst_40 {dimension_numbers = #tpu.dot_dimension_numbers<[1], [0], [0], [1], [0, 0, 1, 1], [], []>} : vector<32x750xbf16>, vector<750x201xbf16>, vector<32x201xf32> -> vector<32x201xf32>
      %61 = arith.truncf %60 : vector<32x201xf32> to vector<32x201xbf16>
      %62 = vector.extract_strided_slice %61 {offsets = [0, 0], sizes = [32, 187], strides = [1, 1]} : vector<32x201xbf16> to vector<32x187xbf16>
      %c0_41 = arith.constant 0 : index
      %c0_42 = arith.constant 0 : index
      %63 = vector.load %arg12[%c0_41, %c0_42] : memref<480x187xbf16, #tpu.memory_space<vmem>>, vector<32x187xbf16>
      tpu.vector_store %arg12[%c0_41, %c0_42], %62 {strides = array<i32>} : memref<480x187xbf16, #tpu.memory_space<vmem>>, vector<32x187xbf16>,
      %64 = vector.extract_strided_slice %61 {offsets = [0, 1], sizes = [32, 187], strides = [1, 1]} : vector<32x201xbf16> to vector<32x187xbf16>
      %c32_43 = arith.constant 32 : index
      %c0_44 = arith.constant 0 : index
      %65 = vector.load %arg12[%c32_43, %c0_44] : memref<480x187xbf16, #tpu.memory_space<vmem>>, vector<32x187xbf16>
      tpu.vector_store %arg12[%c32_43, %c0_44], %64 {strides = array<i32>} : memref<480x187xbf16, #tpu.memory_space<vmem>>, vector<32x187xbf16>,
      %66 = vector.extract_strided_slice %61 {offsets = [0, 2], sizes = [32, 187], strides = [1, 1]} : vector<32x201xbf16> to vector<32x187xbf16>
      %c64_45 = arith.constant 64 : index
      %c0_46 = arith.constant 0 : index
      %67 = vector.load %arg12[%c64_45, %c0_46] : memref<480x187xbf16, #tpu.memory_space<vmem>>, vector<32x187xbf16>
      tpu.vector_store %arg12[%c64_45, %c0_46], %66 {strides = array<i32>} : memref<480x187xbf16, #tpu.memory_space<vmem>>, vector<32x187xbf16>,
      %68 = vector.extract_strided_slice %61 {offsets = [0, 3], sizes = [32, 187], strides = [1, 1]} : vector<32x201xbf16> to vector<32x187xbf16>
      %c96_47 = arith.constant 96 : index
      %c0_48 = arith.constant 0 : index
      %69 = vector.load %arg12[%c96_47, %c0_48] : memref<480x187xbf16, #tpu.memory_space<vmem>>, vector<32x187xbf16>
      tpu.vector_store %arg12[%c96_47, %c0_48], %68 {strides = array<i32>} : memref<480x187xbf16, #tpu.memory_space<vmem>>, vector<32x187xbf16>,
      %70 = vector.extract_strided_slice %61 {offsets = [0, 4], sizes = [32, 187], strides = [1, 1]} : vector<32x201xbf16> to vector<32x187xbf16>
      %c128 = arith.constant 128 : index
      %c0_49 = arith.constant 0 : index
      %71 = vector.load %arg12[%c128, %c0_49] : memref<480x187xbf16, #tpu.memory_space<vmem>>, vector<32x187xbf16>
      tpu.vector_store %arg12[%c128, %c0_49], %70 {strides = array<i32>} : memref<480x187xbf16, #tpu.memory_space<vmem>>, vector<32x187xbf16>,
      %72 = vector.extract_strided_slice %61 {offsets = [0, 5], sizes = [32, 187], strides = [1, 1]} : vector<32x201xbf16> to vector<32x187xbf16>
      %c160 = arith.constant 160 : index
      %c0_50 = arith.constant 0 : index
      %73 = vector.load %arg12[%c160, %c0_50] : memref<480x187xbf16, #tpu.memory_space<vmem>>, vector<32x187xbf16>
      tpu.vector_store %arg12[%c160, %c0_50], %72 {strides = array<i32>} : memref<480x187xbf16, #tpu.memory_space<vmem>>, vector<32x187xbf16>,
      %74 = vector.extract_strided_slice %61 {offsets = [0, 6], sizes = [32, 187], strides = [1, 1]} : vector<32x201xbf16> to vector<32x187xbf16>
      %c192 = arith.constant 192 : index
      %c0_51 = arith.constant 0 : index
      %75 = vector.load %arg12[%c192, %c0_51] : memref<480x187xbf16, #tpu.memory_space<vmem>>, vector<32x187xbf16>
      tpu.vector_store %arg12[%c192, %c0_51], %74 {strides = array<i32>} : memref<480x187xbf16, #tpu.memory_space<vmem>>, vector<32x187xbf16>,
      %76 = vector.extract_strided_slice %61 {offsets = [0, 7], sizes = [32, 187], strides = [1, 1]} : vector<32x201xbf16> to vector<32x187xbf16>
      %c224 = arith.constant 224 : index
      %c0_52 = arith.constant 0 : index
      %77 = vector.load %arg12[%c224, %c0_52] : memref<480x187xbf16, #tpu.memory_space<vmem>>, vector<32x187xbf16>
      tpu.vector_store %arg12[%c224, %c0_52], %76 {strides = array<i32>} : memref<480x187xbf16, #tpu.memory_space<vmem>>, vector<32x187xbf16>,
      %78 = vector.extract_strided_slice %61 {offsets = [0, 8], sizes = [32, 187], strides = [1, 1]} : vector<32x201xbf16> to vector<32x187xbf16>
      %c256 = arith.constant 256 : index
      %c0_53 = arith.constant 0 : index
      %79 = vector.load %arg12[%c256, %c0_53] : memref<480x187xbf16, #tpu.memory_space<vmem>>, vector<32x187xbf16>
      tpu.vector_store %arg12[%c256, %c0_53], %78 {strides = array<i32>} : memref<480x187xbf16, #tpu.memory_space<vmem>>, vector<32x187xbf16>,
      %80 = vector.extract_strided_slice %61 {offsets = [0, 9], sizes = [32, 187], strides = [1, 1]} : vector<32x201xbf16> to vector<32x187xbf16>
      %c288 = arith.constant 288 : index
      %c0_54 = arith.constant 0 : index
      %81 = vector.load %arg12[%c288, %c0_54] : memref<480x187xbf16, #tpu.memory_space<vmem>>, vector<32x187xbf16>
      tpu.vector_store %arg12[%c288, %c0_54], %80 {strides = array<i32>} : memref<480x187xbf16, #tpu.memory_space<vmem>>, vector<32x187xbf16>,
      %82 = vector.extract_strided_slice %61 {offsets = [0, 10], sizes = [32, 187], strides = [1, 1]} : vector<32x201xbf16> to vector<32x187xbf16>
      %c320 = arith.constant 320 : index
      %c0_55 = arith.constant 0 : index
      %83 = vector.load %arg12[%c320, %c0_55] : memref<480x187xbf16, #tpu.memory_space<vmem>>, vector<32x187xbf16>
      tpu.vector_store %arg12[%c320, %c0_55], %82 {strides = array<i32>} : memref<480x187xbf16, #tpu.memory_space<vmem>>, vector<32x187xbf16>,
      %84 = vector.extract_strided_slice %61 {offsets = [0, 11], sizes = [32, 187], strides = [1, 1]} : vector<32x201xbf16> to vector<32x187xbf16>
      %c352 = arith.constant 352 : index
      %c0_56 = arith.constant 0 : index
      %85 = vector.load %arg12[%c352, %c0_56] : memref<480x187xbf16, #tpu.memory_space<vmem>>, vector<32x187xbf16>
      tpu.vector_store %arg12[%c352, %c0_56], %84 {strides = array<i32>} : memref<480x187xbf16, #tpu.memory_space<vmem>>, vector<32x187xbf16>,
      %86 = vector.extract_strided_slice %61 {offsets = [0, 12], sizes = [32, 187], strides = [1, 1]} : vector<32x201xbf16> to vector<32x187xbf16>
      %c384 = arith.constant 384 : index
      %c0_57 = arith.constant 0 : index
      %87 = vector.load %arg12[%c384, %c0_57] : memref<480x187xbf16, #tpu.memory_space<vmem>>, vector<32x187xbf16>
      tpu.vector_store %arg12[%c384, %c0_57], %86 {strides = array<i32>} : memref<480x187xbf16, #tpu.memory_space<vmem>>, vector<32x187xbf16>,
      %88 = vector.extract_strided_slice %61 {offsets = [0, 13], sizes = [32, 187], strides = [1, 1]} : vector<32x201xbf16> to vector<32x187xbf16>
      %c416 = arith.constant 416 : index
      %c0_58 = arith.constant 0 : index
      %89 = vector.load %arg12[%c416, %c0_58] : memref<480x187xbf16, #tpu.memory_space<vmem>>, vector<32x187xbf16>
      tpu.vector_store %arg12[%c416, %c0_58], %88 {strides = array<i32>} : memref<480x187xbf16, #tpu.memory_space<vmem>>, vector<32x187xbf16>,
      %90 = vector.extract_strided_slice %61 {offsets = [0, 14], sizes = [32, 187], strides = [1, 1]} : vector<32x201xbf16> to vector<32x187xbf16>
      %c448 = arith.constant 448 : index
      %c0_59 = arith.constant 0 : index
      %91 = vector.load %arg12[%c448, %c0_59] : memref<480x187xbf16, #tpu.memory_space<vmem>>, vector<32x187xbf16>
      tpu.vector_store %arg12[%c448, %c0_59], %90 {strides = array<i32>} : memref<480x187xbf16, #tpu.memory_space<vmem>>, vector<32x187xbf16>,
      %c0_60 = arith.constant 0 : index
      %c0_61 = arith.constant 0 : index
      %92 = vector.load %arg5[%c0_60, %c0_61] : memref<32x480xbf16, #tpu.memory_space<vmem>>, vector<32x480xbf16>
      %c0_62 = arith.constant 0 : index
      %c0_63 = arith.constant 0 : index
      %93 = vector.load %arg12[%c0_62, %c0_63] : memref<480x187xbf16, #tpu.memory_space<vmem>>, vector<480x187xbf16>
      %cst_64 = arith.constant dense<0.000000e+00> : vector<32x187xf32>
      %94 = tpu.matmul %92, %93, %cst_64 {dimension_numbers = #tpu.dot_dimension_numbers<[1], [0], [0], [1], [0, 0, 1, 1], [], []>} : vector<32x480xbf16>, vector<480x187xbf16>, vector<32x187xf32> -> vector<32x187xf32>
      %c0_65 = arith.constant 0 : index
      %c0_66 = arith.constant 0 : index
      %95 = vector.load %arg6[%c0_65, %c0_66] : memref<32x1xf32, #tpu.memory_space<vmem>>, vector<32x1xf32>
      %96 = vector.broadcast %95 : vector<32x1xf32> to vector<32x187xf32>
      %97 = arith.addf %94, %96 : vector<32x187xf32>
      %cst_67 = arith.constant 0.000000e+00 : f32
      %98 = vector.broadcast %cst_67 : f32 to vector<32x187xf32>
      %99 = arith.cmpf ogt, %97, %98 : vector<32x187xf32>
      %cst_68 = arith.constant 0.000000e+00 : f32
      %100 = vector.broadcast %cst_68 : f32 to vector<32x187xf32>
      %101 = arith.minimumf %97, %100 : vector<32x187xf32>
      %102 = math.exp %101 : vector<32x187xf32>
      %cst_69 = arith.constant 1.000000e+00 : f32
      %103 = vector.broadcast %cst_69 : f32 to vector<32x187xf32>
      %104 = arith.subf %102, %103 : vector<32x187xf32>
      %cst_70 = arith.constant 6.000000e-02 : f32
      %105 = vector.broadcast %cst_70 : f32 to vector<32x187xf32>
      %106 = arith.mulf %105, %104 : vector<32x187xf32>
      %107 = arith.select %99, %97, %106 : vector<32x187xi1>, vector<32x187xf32>
      %108 = arith.truncf %107 : vector<32x187xf32> to vector<32x187xbf16>
      %c0_71 = arith.constant 0 : index
      %c0_72 = arith.constant 0 : index
      %109 = vector.load %arg7[%c0_71, %c0_72] : memref<187x23xbf16, #tpu.memory_space<vmem>>, vector<187x23xbf16>
      %cst_73 = arith.constant dense<0.000000e+00> : vector<32x23xf32>
      %110 = tpu.matmul %108, %109, %cst_73 {dimension_numbers = #tpu.dot_dimension_numbers<[1], [0], [0], [1], [0, 0, 1, 1], [], []>} : vector<32x187xbf16>, vector<187x23xbf16>, vector<32x23xf32> -> vector<32x23xf32>
      %111 = arith.index_cast %24 : i32 to index
      %c0_74 = arith.constant 0 : index
      %c0_75 = arith.constant 0 : index
      %112 = vector.load %arg13[%111, %c0_74, %c0_75] : memref<8x32x23xf32, #tpu.memory_space<vmem>>, vector<1x32x23xf32>
      %113 = vector.shape_cast %112 : vector<1x32x23xf32> to vector<32x23xf32>
      %114 = vector.shape_cast %110 : vector<32x23xf32> to vector<1x32x23xf32>
      tpu.vector_store %arg13[%111, %c0_74, %c0_75], %114 {strides = array<i32>} : memref<8x32x23xf32, #tpu.memory_space<vmem>>, vector<1x32x23xf32>,
    }
    %c8_i32_0 = arith.constant 8 : i32
    %c0 = arith.constant 0 : index
    %c0_1 = arith.constant 0 : index
    %c0_2 = arith.constant 0 : index
    %1 = vector.load %arg13[%c0, %c0_1, %c0_2] : memref<8x32x23xf32, #tpu.memory_space<vmem>>, vector<8x32x23xf32>
    %c0_3 = arith.constant 0 : index
    %c0_4 = arith.constant 0 : index
    %c0_5 = arith.constant 0 : index
    %2 = vector.load %arg8[%c0_3, %c0_4, %c0_5] : memref<2x32x23xf32, #tpu.memory_space<vmem>>, vector<1x32x23xf32>
    %3 = vector.shape_cast %2 : vector<1x32x23xf32> to vector<32x23xf32>
    %4 = vector.shape_cast %3 : vector<32x23xf32> to vector<1x32x23xf32>
    %5 = vector.broadcast %4 : vector<1x32x23xf32> to vector<8x32x23xf32>
    %6 = arith.mulf %1, %5 : vector<8x32x23xf32>
    %cst = arith.constant dense<0.000000e+00> : vector<8x32xf32>
    %7 = vector.multi_reduction <add>, %6, %cst [2] : vector<8x32x23xf32> to vector<8x32xf32>
    %cst_6 = arith.constant dense<0.000000e+00> : vector<8xf32>
    %8 = vector.multi_reduction <add>, %7, %cst_6 [1] : vector<8x32xf32> to vector<8xf32>
    %9 = vector.shape_cast %8 : vector<8xf32> to vector<8x1xf32>
    %c1 = arith.constant 1 : index
    %c0_7 = arith.constant 0 : index
    %c0_8 = arith.constant 0 : index
    %10 = vector.load %arg8[%c1, %c0_7, %c0_8] : memref<2x32x23xf32, #tpu.memory_space<vmem>>, vector<1x32x23xf32>
    %11 = vector.shape_cast %10 : vector<1x32x23xf32> to vector<32x23xf32>
    %12 = vector.shape_cast %11 : vector<32x23xf32> to vector<1x32x23xf32>
    %13 = vector.broadcast %12 : vector<1x32x23xf32> to vector<8x32x23xf32>
    %14 = arith.mulf %1, %13 : vector<8x32x23xf32>
    %cst_9 = arith.constant dense<0.000000e+00> : vector<8x32xf32>
    %15 = vector.multi_reduction <add>, %14, %cst_9 [2] : vector<8x32x23xf32> to vector<8x32xf32>
    %cst_10 = arith.constant dense<0.000000e+00> : vector<8xf32>
    %16 = vector.multi_reduction <add>, %15, %cst_10 [1] : vector<8x32xf32> to vector<8xf32>
    %17 = vector.shape_cast %16 : vector<8xf32> to vector<8x1xf32>
    %18 = tpu.concatenate %9, %17 in 1 : vector<8x1xf32>, vector<8x1xf32> -> vector<8x2xf32>
    %c0_11 = arith.constant 0 : index
    %c0_12 = arith.constant 0 : index
    %19 = vector.load %arg9[%c0_11, %c0_12] : memref<1x2xf32, #tpu.memory_space<vmem>>, vector<1x2xf32>
    %20 = vector.broadcast %19 : vector<1x2xf32> to vector<8x2xf32>
    %21 = arith.addf %18, %20 : vector<8x2xf32>
    %c0_13 = arith.constant 0 : index
    %c0_14 = arith.constant 0 : index
    %22 = vector.load %arg10[%c0_13, %c0_14] : memref<8x2xf32, #tpu.memory_space<vmem>>, vector<8x2xf32>
    tpu.vector_store %arg10[%c0_13, %c0_14], %21 {strides = array<i32>} : memref<8x2xf32, #tpu.memory_space<vmem>>, vector<8x2xf32>,
    return
  }
  func.func @transform_0(%arg0: i32) -> (i32, i32, i32) {
    %c0_i32 = arith.constant 0 : i32
    %c0_i32_0 = arith.constant 0 : i32
    %c0_i32_1 = arith.constant 0 : i32
    return %arg0, %c0_i32, %c0_i32_0 : i32, i32, i32
  }
  func.func @transform_1(%arg0: i32) -> (i32, i32) {
    %c0_i32 = arith.constant 0 : i32
    %c0_i32_0 = arith.constant 0 : i32
    %c0_i32_1 = arith.constant 0 : i32
    return %c0_i32, %c0_i32_0 : i32, i32
  }
  func.func @transform_2(%arg0: i32) -> (i32, i32) {
    %c0_i32 = arith.constant 0 : i32
    %c0_i32_0 = arith.constant 0 : i32
    %c0_i32_1 = arith.constant 0 : i32
    return %c0_i32, %c0_i32_0 : i32, i32
  }
  func.func @transform_3(%arg0: i32) -> (i32, i32) {
    %c0_i32 = arith.constant 0 : i32
    %c0_i32_0 = arith.constant 0 : i32
    %c0_i32_1 = arith.constant 0 : i32
    return %c0_i32, %c0_i32_0 : i32, i32
  }
  func.func @transform_4(%arg0: i32) -> (i32, i32) {
    %c0_i32 = arith.constant 0 : i32
    %c0_i32_0 = arith.constant 0 : i32
    %c0_i32_1 = arith.constant 0 : i32
    return %c0_i32, %c0_i32_0 : i32, i32
  }
  func.func @transform_5(%arg0: i32) -> (i32, i32) {
    %c0_i32 = arith.constant 0 : i32
    %c0_i32_0 = arith.constant 0 : i32
    %c0_i32_1 = arith.constant 0 : i32
    return %c0_i32, %c0_i32_0 : i32, i32
  }
  func.func @transform_6(%arg0: i32) -> (i32, i32) {
    %c0_i32 = arith.constant 0 : i32
    %c0_i32_0 = arith.constant 0 : i32
    %c0_i32_1 = arith.constant 0 : i32
    return %c0_i32, %c0_i32_0 : i32, i32
  }
  func.func @transform_7(%arg0: i32) -> (i32, i32, i32) {
    %c0_i32 = arith.constant 0 : i32
    %c0_i32_0 = arith.constant 0 : i32
    %c0_i32_1 = arith.constant 0 : i32
    %c0_i32_2 = arith.constant 0 : i32
    return %c0_i32, %c0_i32_0, %c0_i32_1 : i32, i32, i32
  }
  func.func @transform_8(%arg0: i32) -> (i32, i32) {
    %c0_i32 = arith.constant 0 : i32
    %c0_i32_0 = arith.constant 0 : i32
    %c0_i32_1 = arith.constant 0 : i32
    return %c0_i32, %c0_i32_0 : i32, i32
  }
  func.func @transform_9(%arg0: i32) -> (i32, i32) {
    %c0_i32 = arith.constant 0 : i32
    %c0_i32_0 = arith.constant 0 : i32
    return %arg0, %c0_i32 : i32, i32
  }
}

</mosaic_0001>

<llo_original>
// kernel: tpu_custom_call.1
$region0: #{tpu_custom_call.1}
  #allocation0 [shape = 'u32[]', space=smem, size = 0x4, offset = 0x4, fixed_abs, tag = 'smem constant byte address 0x4 - core index']
  #allocation1 [shape = 'u32[144,128]{1,0:T(1,128)}', space=vmem, size = 0x12000, scoped, tag = 'internal scratch']
  #allocation2 [shape = 'bf16[112,750]{1,0:T(16,128)(2,1)}', space=vmem, size = 0x2a000, scoped, tag = 'scratch operand']
  #allocation3 [shape = 'bf16[480,187]{1,0:T(16,128)(2,1)}', space=vmem, size = 0x3c000, scoped, tag = 'scratch operand']
  #allocation4 [shape = 'f32[8,32,23]{2,1,0:T(8,128)}', space=vmem, size = 0x20000, scoped, tag = 'scratch operand']
  %s0 = inlined_call_operand.vmem [shape: bf16[8,16,800], index: 0, kind: input, shape index: {}]
  %s1 = inlined_call_operand.vmem [shape: bf16[32,112], index: 1, kind: input, shape index: {}]
  %s2 = inlined_call_operand.vmem [shape: f32[32,1], index: 2, kind: input, shape index: {}]
  %s3 = inlined_call_operand.vmem [shape: bf16[750,201], index: 3, kind: input, shape index: {}]
  %s4 = inlined_call_operand.vmem [shape: bf16[32,480], index: 4, kind: input, shape index: {}]
  %s5 = inlined_call_operand.vmem [shape: f32[32,1], index: 5, kind: input, shape index: {}]
  %s6 = inlined_call_operand.vmem [shape: bf16[187,23], index: 6, kind: input, shape index: {}]
  %s7 = inlined_call_operand.vmem [shape: f32[2,32,23], index: 7, kind: input, shape index: {}]
  %s8 = inlined_call_operand.vmem [shape: f32[1,2], index: 8, kind: input, shape index: {}]
  %s9 = inlined_call_operand.vmem [shape: f32[8,2], index: 9, kind: output, shape index: {}]
  %s10 = sld [smem:[#allocation0]]
  $region53: #{tpu_custom_call.1} parent=0
    _
  %s12 = ssub.s32 1, %s10
  %s13 = scalar_select 0, %s12, %s10
  // Predicated region
  $region2: #{tpu_custom_call.1} parent=0 // pred_check
    _
  $region3: #{tpu_custom_call.1} parent=0 // pred_check_branch
    %15 = sbr.rel (0) target = $region5
  $region4: #{tpu_custom_call.1} parent=0 // pred_region
    _
  $region5: #{tpu_custom_call.1} parent=0 // pred_fallthru
    _
  // Predicated region
  $region6: #{tpu_custom_call.1} parent=0 // pred_check
    _
  $region7: #{tpu_custom_call.1} parent=0 // pred_check_branch
    %17 = sbr.rel (0) target = $region9
  $region8: #{tpu_custom_call.1} parent=0 // pred_region
    _
  $region9: #{tpu_custom_call.1} parent=0 // pred_fallthru
    _
  // Predicated region
  $region10: #{tpu_custom_call.1} parent=0 // pred_check
    _
  $region11: #{tpu_custom_call.1} parent=0 // pred_check_branch
    %19 = sbr.rel (0) target = $region13
  $region12: #{tpu_custom_call.1} parent=0 // pred_region
    _
  $region13: #{tpu_custom_call.1} parent=0 // pred_fallthru
    _
  // Predicated region
  $region14: #{tpu_custom_call.1} parent=0 // pred_check
    _
  $region15: #{tpu_custom_call.1} parent=0 // pred_check_branch
    %21 = sbr.rel (0) target = $region17
  $region16: #{tpu_custom_call.1} parent=0 // pred_region
    _
  $region17: #{tpu_custom_call.1} parent=0 // pred_fallthru
    _
  // Predicated region
  $region18: #{tpu_custom_call.1} parent=0 // pred_check
    _
  $region19: #{tpu_custom_call.1} parent=0 // pred_check_branch
    %23 = sbr.rel (0) target = $region21
  $region20: #{tpu_custom_call.1} parent=0 // pred_region
    _
  $region21: #{tpu_custom_call.1} parent=0 // pred_fallthru
    _
  // Predicated region
  $region22: #{tpu_custom_call.1} parent=0 // pred_check
    _
  $region23: #{tpu_custom_call.1} parent=0 // pred_check_branch
    %25 = sbr.rel (0) target = $region25
  $region24: #{tpu_custom_call.1} parent=0 // pred_region
    _
  $region25: #{tpu_custom_call.1} parent=0 // pred_fallthru
    _
  // Predicated region
  $region26: #{tpu_custom_call.1} parent=0 // pred_check
    _
  $region27: #{tpu_custom_call.1} parent=0 // pred_check_branch
    %27 = sbr.rel (0) target = $region29
  $region28: #{tpu_custom_call.1} parent=0 // pred_region
    _
  $region29: #{tpu_custom_call.1} parent=0 // pred_fallthru
    _
  // Predicated region
  $region30: #{tpu_custom_call.1} parent=0 // pred_check
    _
  $region31: #{tpu_custom_call.1} parent=0 // pred_check_branch
    %29 = sbr.rel (0) target = $region33
  $region32: #{tpu_custom_call.1} parent=0 // pred_region
    _
  $region33: #{tpu_custom_call.1} parent=0 // pred_fallthru
    _
  // Predicated region
  $region34: #{tpu_custom_call.1} parent=0 // pred_check
    _
  $region35: #{tpu_custom_call.1} parent=0 // pred_check_branch
    %31 = sbr.rel (0) target = $region37
  $region36: #{tpu_custom_call.1} parent=0 // pred_region
    _
  $region37: #{tpu_custom_call.1} parent=0 // pred_fallthru
    _
  loop: start=0, step=1, limit=8
  $region38: #{tpu_custom_call.1} parent=0 // loop_pre_header
    _
  $region39: #{tpu_custom_call.1} parent=0 // loop_header
    %s34 = sphi 0, %s38
    %p35 = scmp.ge.s32.totalorder %s34, 8
  $region40: #{tpu_custom_call.1} parent=0 // loop_header_branch
    %37 = sbr.rel (%p35) target = $region44
  $region41: #{tpu_custom_call.1} parent=0 // loop_body
    %s39 = smul.u32 %s34, 14
    %s40 = smul.addr %s39, 4
    %s41 = scalar_lea.vmem %s0, %s40
    %v42 = vld [vmem:[%s41] sm:$0xff]
    %v43 = vld [vmem:[%s41 + $0x8] sm:$0xff]
    %v44 = vld [vmem:[%s41 + $0x10] sm:$0xff]
    %v45 = vld [vmem:[%s41 + $0x18] sm:$0xf]
    %v46 = vld [vmem:[%s41 + $0x1c] sm:$0xff]
    %v47 = vld [vmem:[%s41 + $0x24] sm:$0xff]
    %v48 = vld [vmem:[%s41 + $0x2c] sm:$0xff]
    %v49 = vld [vmem:[%s41 + $0x34] sm:$0xf]
    %v56 = vunpack.c.l.b16 %v42
    %v57 = vunpack.c.h.b16 %v42
    %v58 = vunpack.c.l.b16 %v43
    %v59 = vunpack.c.h.b16 %v43
    %v60 = vunpack.c.l.b16 %v44
    %v61 = vunpack.c.h.b16 %v44
    %v62 = vunpack.c.l.b16 %v46
    %v63 = vunpack.c.h.b16 %v46
    %v64 = vunpack.c.l.b16 %v47
    %v65 = vunpack.c.h.b16 %v47
    %v66 = vunpack.c.l.b16 %v48
    %v67 = vunpack.c.h.b16 %v48
    %v68 = vpack.c.b16 %v62, %v56
    %v69 = vpack.c.b16 %v63, %v57
    %v70 = vpack.c.b16 %v64, %v58
    %v71 = vpack.c.b16 %v65, %v59
    %v72 = vpack.c.b16 %v66, %v60
    %v73 = vpack.c.b16 %v67, %v61
    %80 = vst [vmem:[#allocation2] sm:$0xff] %v68
    %81 = vst [vmem:[#allocation2 + $0x8] sm:$0xff] %v69
    %82 = vst [vmem:[#allocation2 + $0x10] sm:$0xff] %v70
    %83 = vst [vmem:[#allocation2 + $0x18] sm:$0xff] %v71
    %84 = vst [vmem:[#allocation2 + $0x20] sm:$0xff] %v72
    %vm85 = vcmask 900096
    %86 = vst.msk [vmem:[#allocation2 + $0x28] sm:$0xff] %vm85, %v73
    %87 = vrot.lane.b32.xlu0 %v68, 120
    %v88 = vpop.permute.xlu0 %87
    %89 = vrot.lane.b32.xlu0 %v69, 120
    %v90 = vpop.permute.xlu0 %89
    %91 = vrot.lane.b32.xlu0 %v70, 120
    %v92 = vpop.permute.xlu0 %91
    %93 = vrot.lane.b32.xlu0 %v71, 120
    %v94 = vpop.permute.xlu0 %93
    %95 = vrot.lane.b32.xlu0 %v72, 120
    %v96 = vpop.permute.xlu0 %95
    %97 = vrot.lane.b32.xlu0 %v73, 120
    %v98 = vpop.permute.xlu0 %97
    %vm99 = vcmask 982016
    %v100 = vsel %vm99, %v88, %v90
    %v101 = vsel %vm99, %v90, %v92
    %v102 = vsel %vm99, %v92, %v94
    %v103 = vsel %vm99, %v94, %v96
    %v104 = vsel %vm99, %v96, %v98
    %111 = vst [vmem:[#allocation2 + $0x30] sm:$0xff] %v100
    %112 = vst [vmem:[#allocation2 + $0x38] sm:$0xff] %v101
    %113 = vst [vmem:[#allocation2 + $0x40] sm:$0xff] %v102
    %114 = vst [vmem:[#allocation2 + $0x48] sm:$0xff] %v103
    %115 = vst [vmem:[#allocation2 + $0x50] sm:$0xff] %v104
    %116 = vst.msk [vmem:[#allocation2 + $0x58] sm:$0xff] %vm85, %v98
    %117 = vrot.lane.b32.xlu0 %v68, 112
    %v118 = vpop.permute.xlu0 %117
    %119 = vrot.lane.b32.xlu0 %v69, 112
    %v120 = vpop.permute.xlu0 %119
    %121 = vrot.lane.b32.xlu0 %v70, 112
    %v122 = vpop.permute.xlu0 %121
    %123 = vrot.lane.b32.xlu0 %v71, 112
    %v124 = vpop.permute.xlu0 %123
    %125 = vrot.lane.b32.xlu0 %v72, 112
    %v126 = vpop.permute.xlu0 %125
    %127 = vrot.lane.b32.xlu0 %v73, 112
    %v128 = vpop.permute.xlu0 %127
    %vm129 = vcmask 916480
    %v130 = vsel %vm129, %v118, %v120
    %v131 = vsel %vm129, %v120, %v122
    %v132 = vsel %vm129, %v122, %v124
    %v133 = vsel %vm129, %v124, %v126
    %v134 = vsel %vm129, %v126, %v128
    %141 = vst [vmem:[#allocation2 + $0x60] sm:$0xff] %v130
    %142 = vst [vmem:[#allocation2 + $0x68] sm:$0xff] %v131
    %143 = vst [vmem:[#allocation2 + $0x70] sm:$0xff] %v132
    %144 = vst [vmem:[#allocation2 + $0x78] sm:$0xff] %v133
    %145 = vst [vmem:[#allocation2 + $0x80] sm:$0xff] %v134
    %146 = vst.msk [vmem:[#allocation2 + $0x88] sm:$0xff] %vm85, %v128
    %v149 = vunpack.c.l.b16 %v45
    %v150 = vunpack.c.l.b16 %v49
    %v151 = vpack.c.b16 %v150, %v149
    %152 = vrot.lane.b32.xlu0 %v68, 104
    %v153 = vpop.permute.xlu0 %152
    %154 = vrot.lane.b32.xlu0 %v69, 104
    %v155 = vpop.permute.xlu0 %154
    %156 = vrot.lane.b32.xlu0 %v70, 104
    %v157 = vpop.permute.xlu0 %156
    %158 = vrot.lane.b32.xlu0 %v71, 104
    %v159 = vpop.permute.xlu0 %158
    %160 = vrot.lane.b32.xlu0 %v72, 104
    %v161 = vpop.permute.xlu0 %160
    %162 = vrot.lane.b32.xlu0 %v73, 104
    %v163 = vpop.permute.xlu0 %162
    %164 = vrot.lane.b32.xlu0 %v151, 104
    %v165 = vpop.permute.xlu0 %164
    %vm166 = vcmask 850944
    %v167 = vsel %vm166, %v153, %v155
    %v168 = vsel %vm166, %v155, %v157
    %v169 = vsel %vm166, %v157, %v159
    %v170 = vsel %vm166, %v159, %v161
    %v171 = vsel %vm166, %v161, %v163
    %v172 = vsel %vm166, %v163, %v165
    %179 = vst [vmem:[#allocation2 + $0x90] sm:$0xff] %v167
    %180 = vst [vmem:[#allocation2 + $0x98] sm:$0xff] %v168
    %181 = vst [vmem:[#allocation2 + $0xa0] sm:$0xff] %v169
    %182 = vst [vmem:[#allocation2 + $0xa8] sm:$0xff] %v170
    %183 = vst [vmem:[#allocation2 + $0xb0] sm:$0xff] %v171
    %184 = vst.msk [vmem:[#allocation2 + $0xb8] sm:$0xff] %vm85, %v172
    %185 = vrot.lane.b32.xlu0 %v68, 96
    %v186 = vpop.permute.xlu0 %185
    %187 = vrot.lane.b32.xlu0 %v69, 96
    %v188 = vpop.permute.xlu0 %187
    %189 = vrot.lane.b32.xlu0 %v70, 96
    %v190 = vpop.permute.xlu0 %189
    %191 = vrot.lane.b32.xlu0 %v71, 96
    %v192 = vpop.permute.xlu0 %191
    %193 = vrot.lane.b32.xlu0 %v72, 96
    %v194 = vpop.permute.xlu0 %193
    %195 = vrot.lane.b32.xlu0 %v73, 96
    %v196 = vpop.permute.xlu0 %195
    %197 = vrot.lane.b32.xlu0 %v151, 96
    %v198 = vpop.permute.xlu0 %197
    %vm199 = vcmask 785408
    %v200 = vsel %vm199, %v186, %v188
    %v201 = vsel %vm199, %v188, %v190
    %v202 = vsel %vm199, %v190, %v192
    %v203 = vsel %vm199, %v192, %v194
    %v204 = vsel %vm199, %v194, %v196
    %v205 = vsel %vm199, %v196, %v198
    %212 = vst [vmem:[#allocation2 + $0xc0] sm:$0xff] %v200
    %213 = vst [vmem:[#allocation2 + $0xc8] sm:$0xff] %v201
    %214 = vst [vmem:[#allocation2 + $0xd0] sm:$0xff] %v202
    %215 = vst [vmem:[#allocation2 + $0xd8] sm:$0xff] %v203
    %216 = vst [vmem:[#allocation2 + $0xe0] sm:$0xff] %v204
    %217 = vst.msk [vmem:[#allocation2 + $0xe8] sm:$0xff] %vm85, %v205
    %218 = vrot.lane.b32.xlu0 %v68, 88
    %v219 = vpop.permute.xlu0 %218
    %220 = vrot.lane.b32.xlu0 %v69, 88
    %v221 = vpop.permute.xlu0 %220
    %222 = vrot.lane.b32.xlu0 %v70, 88
    %v223 = vpop.permute.xlu0 %222
    %224 = vrot.lane.b32.xlu0 %v71, 88
    %v225 = vpop.permute.xlu0 %224
    %226 = vrot.lane.b32.xlu0 %v72, 88
    %v227 = vpop.permute.xlu0 %226
    %228 = vrot.lane.b32.xlu0 %v73, 88
    %v229 = vpop.permute.xlu0 %228
    %230 = vrot.lane.b32.xlu0 %v151, 88
    %v231 = vpop.permute.xlu0 %230
    %vm232 = vcmask 719872
    %v233 = vsel %vm232, %v219, %v221
    %v234 = vsel %vm232, %v221, %v223
    %v235 = vsel %vm232, %v223, %v225
    %v236 = vsel %vm232, %v225, %v227
    %v237 = vsel %vm232, %v227, %v229
    %v238 = vsel %vm232, %v229, %v231
    %245 = vst [vmem:[#allocation2 + $0xf0] sm:$0xff] %v233
    %246 = vst [vmem:[#allocation2 + $0xf8] sm:$0xff] %v234
    %247 = vst [vmem:[#allocation2 + $0x100] sm:$0xff] %v235
    %248 = vst [vmem:[#allocation2 + $0x108] sm:$0xff] %v236
    %249 = vst [vmem:[#allocation2 + $0x110] sm:$0xff] %v237
    %250 = vst.msk [vmem:[#allocation2 + $0x118] sm:$0xff] %vm85, %v238
    %251 = vrot.lane.b32.xlu0 %v68, 80
    %v252 = vpop.permute.xlu0 %251
    %253 = vrot.lane.b32.xlu0 %v69, 80
    %v254 = vpop.permute.xlu0 %253
    %255 = vrot.lane.b32.xlu0 %v70, 80
    %v256 = vpop.permute.xlu0 %255
    %257 = vrot.lane.b32.xlu0 %v71, 80
    %v258 = vpop.permute.xlu0 %257
    %259 = vrot.lane.b32.xlu0 %v72, 80
    %v260 = vpop.permute.xlu0 %259
    %261 = vrot.lane.b32.xlu0 %v73, 80
    %v262 = vpop.permute.xlu0 %261
    %263 = vrot.lane.b32.xlu0 %v151, 80
    %v264 = vpop.permute.xlu0 %263
    %vm265 = vcmask 654336
    %v266 = vsel %vm265, %v252, %v254
    %v267 = vsel %vm265, %v254, %v256
    %v268 = vsel %vm265, %v256, %v258
    %v269 = vsel %vm265, %v258, %v260
    %v270 = vsel %vm265, %v260, %v262
    %v271 = vsel %vm265, %v262, %v264
    %278 = vst [vmem:[#allocation2 + $0x120] sm:$0xff] %v266
    %279 = vst [vmem:[#allocation2 + $0x128] sm:$0xff] %v267
    %280 = vst [vmem:[#allocation2 + $0x130] sm:$0xff] %v268
    %281 = vst [vmem:[#allocation2 + $0x138] sm:$0xff] %v269
    %282 = vst [vmem:[#allocation2 + $0x140] sm:$0xff] %v270
    %283 = vst.msk [vmem:[#allocation2 + $0x148] sm:$0xff] %vm85, %v271
    %v284 = vld [vmem:[%s1] sm:$0xf]
    %v285 = vld [vmem:[%s1 + $0x4] sm:$0xf]
    %v286 = vld [vmem:[%s1 + $0x8] sm:$0xf]
    %v287 = vld [vmem:[%s1 + $0xc] sm:$0xf]
    %v288 = vld [vmem:[#allocation2] sm:$0xff]
    %v289 = vld [vmem:[#allocation2 + $0x8] sm:$0xff]
    %v290 = vld [vmem:[#allocation2 + $0x10] sm:$0xff]
    %v291 = vld [vmem:[#allocation2 + $0x18] sm:$0xff]
    %v292 = vld [vmem:[#allocation2 + $0x20] sm:$0xff]
    %v293 = vld [vmem:[#allocation2 + $0x28] sm:$0xff]
    %v294 = vld [vmem:[#allocation2 + $0x30] sm:$0xff]
    %v295 = vld [vmem:[#allocation2 + $0x38] sm:$0xff]
    %v296 = vld [vmem:[#allocation2 + $0x40] sm:$0xff]
    %v297 = vld [vmem:[#allocation2 + $0x48] sm:$0xff]
    %v298 = vld [vmem:[#allocation2 + $0x50] sm:$0xff]
    %v299 = vld [vmem:[#allocation2 + $0x58] sm:$0xff]
    %v300 = vld [vmem:[#allocation2 + $0x60] sm:$0xff]
    %v301 = vld [vmem:[#allocation2 + $0x68] sm:$0xff]
    %v302 = vld [vmem:[#allocation2 + $0x70] sm:$0xff]
    %v303 = vld [vmem:[#allocation2 + $0x78] sm:$0xff]
    %v304 = vld [vmem:[#allocation2 + $0x80] sm:$0xff]
    %v305 = vld [vmem:[#allocation2 + $0x88] sm:$0xff]
    %v306 = vld [vmem:[#allocation2 + $0x90] sm:$0xff]
    %v307 = vld [vmem:[#allocation2 + $0x98] sm:$0xff]
    %v308 = vld [vmem:[#allocation2 + $0xa0] sm:$0xff]
    %v309 = vld [vmem:[#allocation2 + $0xa8] sm:$0xff]
    %v310 = vld [vmem:[#allocation2 + $0xb0] sm:$0xff]
    %v311 = vld [vmem:[#allocation2 + $0xb8] sm:$0xff]
    %v312 = vld [vmem:[#allocation2 + $0xc0] sm:$0xff]
    %v313 = vld [vmem:[#allocation2 + $0xc8] sm:$0xff]
    %v314 = vld [vmem:[#allocation2 + $0xd0] sm:$0xff]
    %v315 = vld [vmem:[#allocation2 + $0xd8] sm:$0xff]
    %v316 = vld [vmem:[#allocation2 + $0xe0] sm:$0xff]
    %v317 = vld [vmem:[#allocation2 + $0xe8] sm:$0xff]
    %v318 = vld [vmem:[#allocation2 + $0xf0] sm:$0xff]
    %v319 = vld [vmem:[#allocation2 + $0xf8] sm:$0xff]
    %v320 = vld [vmem:[#allocation2 + $0x100] sm:$0xff]
    %v321 = vld [vmem:[#allocation2 + $0x108] sm:$0xff]
    %v322 = vld [vmem:[#allocation2 + $0x110] sm:$0xff]
    %v323 = vld [vmem:[#allocation2 + $0x118] sm:$0xff]
    %v324 = vld [vmem:[#allocation2 + $0x120] sm:$0xff]
    %v325 = vld [vmem:[#allocation2 + $0x128] sm:$0xff]
    %v326 = vld [vmem:[#allocation2 + $0x130] sm:$0xff]
    %v327 = vld [vmem:[#allocation2 + $0x138] sm:$0xff]
    %v328 = vld [vmem:[#allocation2 + $0x140] sm:$0xff]
    %v329 = vld [vmem:[#allocation2 + $0x148] sm:$0xff]
    %v330 = vld [vmem:[%s2] sm:$0xff]
    %v331 = vld [vmem:[%s2 + $0x8] sm:$0xff]
    %v332 = vld [vmem:[%s2 + $0x10] sm:$0xff]
    %v333 = vld [vmem:[%s2 + $0x18] sm:$0xff]
    %335 = vset.pattern.permute.xlu0 0
    %336 = vperm.xlu0 %335, %v330
    %v337 = vpop.permute.xlu0 %336
    %340 = vset.pattern.permute.xlu0 0
    %341 = vperm.xlu0 %340, %v331
    %v342 = vpop.permute.xlu0 %341
    %345 = vset.pattern.permute.xlu0 0
    %346 = vperm.xlu0 %345, %v332
    %v347 = vpop.permute.xlu0 %346
    %350 = vset.pattern.permute.xlu0 0
    %351 = vperm.xlu0 %350, %v333
    %v352 = vpop.permute.xlu0 %351
    %v358 = vunpack.c.l.b16 %v284
    %v359 = vunpack.c.l.b16 %v285
    %v360 = vunpack.c.l.b16 %v286
    %v361 = vunpack.c.l.b16 %v287
    %v362 = vpack.c.b16 %v359, %v358
    %v363 = vpack.c.b16 %v361, %v360
    %vm364 = vcmask 916480
    %v366 = vsel %vm364, %v362, 0
    %v369 = vsel %vm364, %v363, 0
    %371 = vmatprep.subr.bf16.mxu0 %v289
    %372 = vmatpush1.bf16.msra.mxu0 %v288
    %373 = vmatprep.subr.bf16.mxu0 %v295
    %374 = vmatpush1.bf16.msra.mxu0 %v294
    %375 = vmatprep.subr.bf16.mxu0 %v301
    %376 = vmatpush1.bf16.msra.mxu0 %v300
    %377 = vmatprep.subr.bf16.mxu0 %v307
    %378 = vmatpush1.bf16.msra.mxu0 %v306
    %379 = vmatprep.subr.bf16.mxu0 %v313
    %380 = vmatpush1.bf16.msra.mxu0 %v312
    %381 = vmatprep.subr.bf16.mxu0 %v319
    %382 = vmatpush1.bf16.msra.mxu0 %v318
    %383 = vmatprep.subr.bf16.mxu0 %v325
    %384 = vmatpush1.bf16.msra.mxu0 %v324
    %385 = vmatprep.subr.bf16.mxu0 0
    %386 = vmatpush1.bf16.msra.mxu0 0
    %387 = vmatprep.subr.bf16.mxu0 0
    %388 = vmatpush1.bf16.msra.mxu0 0
    %389 = vmatprep.subr.bf16.mxu0 0
    %390 = vmatpush1.bf16.msra.mxu0 0
    %391 = vmatprep.subr.bf16.mxu0 0
    %392 = vmatpush1.bf16.msra.mxu0 0
    %393 = vmatprep.subr.bf16.mxu0 0
    %394 = vmatpush1.bf16.msra.mxu0 0
    %395 = vmatprep.subr.bf16.mxu0 0
    %396 = vmatpush1.bf16.msra.mxu0 0
    %397 = vmatprep.subr.bf16.mxu0 0
    %398 = vmatpush1.bf16.msra.mxu0 0
    %399 = vmatprep.subr.bf16.mxu0 0
    %400 = vmatpush1.bf16.msra.mxu0 0
    %401 = vmatprep.subr.bf16.mxu0 0
    %402 = vmatpush1.bf16.msra.mxu0 0
    %403 = vmatprep.mubr.bf16.mxu0 0
    %404 = vmatmul.mubr.bf16.gmra.mrb[0].mxu0 %v366
    %v405 = vpop.f32.mrb[0].mxu0
    %v406 = vadd.f32 %v337, %v405
    %v407 = vpop.f32.mrb[0].mxu0
    %v408 = vadd.f32 %v337, %v407
    %v409 = vpop.f32.mrb[0].mxu0
    %v410 = vadd.f32 %v342, %v409
    %v411 = vpop.f32.mrb[0].mxu0
    %v412 = vadd.f32 %v342, %v411
    %413 = vmatprep.mubr.bf16.mxu0 0
    %414 = vmatmul.mubr.bf16.gmra.mrb[0].mxu0 %v369
    %v415 = vpop.f32.mrb[0].mxu0
    %v416 = vadd.f32 %v347, %v415
    %v417 = vpop.f32.mrb[0].mxu0
    %v418 = vadd.f32 %v347, %v417
    %v419 = vpop.f32.mrb[0].mxu0
    %v420 = vadd.f32 %v352, %v419
    %v421 = vpop.f32.mrb[0].mxu0
    %v422 = vadd.f32 %v352, %v421
    %423 = vdwg.mxu0
    %424 = vmatprep.subr.bf16.mxu0 %v291
    %425 = vmatpush1.bf16.msra.mxu0 %v290
    %426 = vmatprep.subr.bf16.mxu0 %v297
    %427 = vmatpush1.bf16.msra.mxu0 %v296
    %428 = vmatprep.subr.bf16.mxu0 %v303
    %429 = vmatpush1.bf16.msra.mxu0 %v302
    %430 = vmatprep.subr.bf16.mxu0 %v309
    %431 = vmatpush1.bf16.msra.mxu0 %v308
    %432 = vmatprep.subr.bf16.mxu0 %v315
    %433 = vmatpush1.bf16.msra.mxu0 %v314
    %434 = vmatprep.subr.bf16.mxu0 %v321
    %435 = vmatpush1.bf16.msra.mxu0 %v320
    %436 = vmatprep.subr.bf16.mxu0 %v327
    %437 = vmatpush1.bf16.msra.mxu0 %v326
    %438 = vmatprep.subr.bf16.mxu0 0
    %439 = vmatpush1.bf16.msra.mxu0 0
    %440 = vmatprep.subr.bf16.mxu0 0
    %441 = vmatpush1.bf16.msra.mxu0 0
    %442 = vmatprep.subr.bf16.mxu0 0
    %443 = vmatpush1.bf16.msra.mxu0 0
    %444 = vmatprep.subr.bf16.mxu0 0
    %445 = vmatpush1.bf16.msra.mxu0 0
    %446 = vmatprep.subr.bf16.mxu0 0
    %447 = vmatpush1.bf16.msra.mxu0 0
    %448 = vmatprep.subr.bf16.mxu0 0
    %449 = vmatpush1.bf16.msra.mxu0 0
    %450 = vmatprep.subr.bf16.mxu0 0
    %451 = vmatpush1.bf16.msra.mxu0 0
    %452 = vmatprep.subr.bf16.mxu0 0
    %453 = vmatpush1.bf16.msra.mxu0 0
    %454 = vmatprep.subr.bf16.mxu0 0
    %455 = vmatpush1.bf16.msra.mxu0 0
    %456 = vmatprep.mubr.bf16.mxu0 0
    %457 = vmatmul.mubr.bf16.gmra.mrb[0].mxu0 %v366
    %v458 = vpop.f32.mrb[0].mxu0
    %v459 = vadd.f32 %v337, %v458
    %v460 = vpop.f32.mrb[0].mxu0
    %v461 = vadd.f32 %v337, %v460
    %v462 = vpop.f32.mrb[0].mxu0
    %v463 = vadd.f32 %v342, %v462
    %v464 = vpop.f32.mrb[0].mxu0
    %v465 = vadd.f32 %v342, %v464
    %466 = vmatprep.mubr.bf16.mxu0 0
    %467 = vmatmul.mubr.bf16.gmra.mrb[0].mxu0 %v369
    %v468 = vpop.f32.mrb[0].mxu0
    %v469 = vadd.f32 %v347, %v468
    %v470 = vpop.f32.mrb[0].mxu0
    %v471 = vadd.f32 %v347, %v470
    %v472 = vpop.f32.mrb[0].mxu0
    %v473 = vadd.f32 %v352, %v472
    %v474 = vpop.f32.mrb[0].mxu0
    %v475 = vadd.f32 %v352, %v474
    %476 = vdwg.mxu0
    %477 = vmatprep.subr.bf16.mxu0 %v293
    %478 = vmatpush1.bf16.msra.mxu0 %v292
    %479 = vmatprep.subr.bf16.mxu0 %v299
    %480 = vmatpush1.bf16.msra.mxu0 %v298
    %481 = vmatprep.subr.bf16.mxu0 %v305
    %482 = vmatpush1.bf16.msra.mxu0 %v304
    %483 = vmatprep.subr.bf16.mxu0 %v311
    %484 = vmatpush1.bf16.msra.mxu0 %v310
    %485 = vmatprep.subr.bf16.mxu0 %v317
    %486 = vmatpush1.bf16.msra.mxu0 %v316
    %487 = vmatprep.subr.bf16.mxu0 %v323
    %488 = vmatpush1.bf16.msra.mxu0 %v322
    %489 = vmatprep.subr.bf16.mxu0 %v329
    %490 = vmatpush1.bf16.msra.mxu0 %v328
    %491 = vmatprep.subr.bf16.mxu0 0
    %492 = vmatpush1.bf16.msra.mxu0 0
    %493 = vmatprep.subr.bf16.mxu0 0
    %494 = vmatpush1.bf16.msra.mxu0 0
    %495 = vmatprep.subr.bf16.mxu0 0
    %496 = vmatpush1.bf16.msra.mxu0 0
    %497 = vmatprep.subr.bf16.mxu0 0
    %498 = vmatpush1.bf16.msra.mxu0 0
    %499 = vmatprep.subr.bf16.mxu0 0
    %500 = vmatpush1.bf16.msra.mxu0 0
    %501 = vmatprep.subr.bf16.mxu0 0
    %502 = vmatpush1.bf16.msra.mxu0 0
    %503 = vmatprep.subr.bf16.mxu0 0
    %504 = vmatpush1.bf16.msra.mxu0 0
    %505 = vmatprep.subr.bf16.mxu0 0
    %506 = vmatpush1.bf16.msra.mxu0 0
    %507 = vmatprep.subr.bf16.mxu0 0
    %508 = vmatpush1.bf16.msra.mxu0 0
    %509 = vmatprep.mubr.bf16.mxu0 0
    %510 = vmatmul.mubr.bf16.gmra.mrb[0].mxu0 %v366
    %v511 = vpop.f32.mrb[0].mxu0
    %v512 = vadd.f32 %v337, %v511
    %v513 = vpop.f32.mrb[0].mxu0
    %v514 = vadd.f32 %v337, %v513
    %v515 = vpop.f32.mrb[0].mxu0
    %v516 = vadd.f32 %v342, %v515
    %v517 = vpop.f32.mrb[0].mxu0
    %v518 = vadd.f32 %v342, %v517
    %519 = vmatprep.mubr.bf16.mxu0 0
    %520 = vmatmul.mubr.bf16.gmra.mrb[0].mxu0 %v369
    %v521 = vpop.f32.mrb[0].mxu0
    %v522 = vadd.f32 %v347, %v521
    %v523 = vpop.f32.mrb[0].mxu0
    %v524 = vadd.f32 %v347, %v523
    %v525 = vpop.f32.mrb[0].mxu0
    %v526 = vadd.f32 %v352, %v525
    %v527 = vpop.f32.mrb[0].mxu0
    %v528 = vadd.f32 %v352, %v527
    %529 = vdwg.mxu0
    %vm530 = vcmp.gt.f32.partialorder %v406, 0.0
    %vm531 = vcmp.gt.f32.partialorder %v408, 0.0
    %vm532 = vcmp.gt.f32.partialorder %v459, 0.0
    %vm533 = vcmp.gt.f32.partialorder %v461, 0.0
    %vm534 = vcmp.gt.f32.partialorder %v512, 0.0
    %vm535 = vcmp.gt.f32.partialorder %v514, 0.0
    %vm536 = vcmp.gt.f32.partialorder %v410, 0.0
    %vm537 = vcmp.gt.f32.partialorder %v412, 0.0
    %vm538 = vcmp.gt.f32.partialorder %v463, 0.0
    %vm539 = vcmp.gt.f32.partialorder %v465, 0.0
    %vm540 = vcmp.gt.f32.partialorder %v516, 0.0
    %vm541 = vcmp.gt.f32.partialorder %v518, 0.0
    %vm542 = vcmp.gt.f32.partialorder %v416, 0.0
    %vm543 = vcmp.gt.f32.partialorder %v418, 0.0
    %vm544 = vcmp.gt.f32.partialorder %v469, 0.0
    %vm545 = vcmp.gt.f32.partialorder %v471, 0.0
    %vm546 = vcmp.gt.f32.partialorder %v522, 0.0
    %vm547 = vcmp.gt.f32.partialorder %v524, 0.0
    %vm548 = vcmp.gt.f32.partialorder %v420, 0.0
    %vm549 = vcmp.gt.f32.partialorder %v422, 0.0
    %vm550 = vcmp.gt.f32.partialorder %v473, 0.0
    %vm551 = vcmp.gt.f32.partialorder %v475, 0.0
    %vm552 = vcmp.gt.f32.partialorder %v526, 0.0
    %vm553 = vcmp.gt.f32.partialorder %v528, 0.0
    %v554 = vmin.f32 %v406, 0.0
    %v555 = vmin.f32 %v408, 0.0
    %v556 = vmin.f32 %v459, 0.0
    %v557 = vmin.f32 %v461, 0.0
    %v558 = vmin.f32 %v512, 0.0
    %v559 = vmin.f32 %v514, 0.0
    %v560 = vmin.f32 %v410, 0.0
    %v561 = vmin.f32 %v412, 0.0
    %v562 = vmin.f32 %v463, 0.0
    %v563 = vmin.f32 %v465, 0.0
    %v564 = vmin.f32 %v516, 0.0
    %v565 = vmin.f32 %v518, 0.0
    %v566 = vmin.f32 %v416, 0.0
    %v567 = vmin.f32 %v418, 0.0
    %v568 = vmin.f32 %v469, 0.0
    %v569 = vmin.f32 %v471, 0.0
    %v570 = vmin.f32 %v522, 0.0
    %v571 = vmin.f32 %v524, 0.0
    %v572 = vmin.f32 %v420, 0.0
    %v573 = vmin.f32 %v422, 0.0
    %v574 = vmin.f32 %v473, 0.0
    %v575 = vmin.f32 %v475, 0.0
    %v576 = vmin.f32 %v526, 0.0
    %v577 = vmin.f32 %v528, 0.0
    %v578 = vmul.f32 %v554, 1.442695
    %v579 = vpow.pop %v578
    %v580 = vmul.f32 %v555, 1.442695
    %v581 = vpow.pop %v580
    %v582 = vmul.f32 %v556, 1.442695
    %v583 = vpow.pop %v582
    %v584 = vmul.f32 %v557, 1.442695
    %v585 = vpow.pop %v584
    %v586 = vmul.f32 %v558, 1.442695
    %v587 = vpow.pop %v586
    %v588 = vmul.f32 %v559, 1.442695
    %v589 = vpow.pop %v588
    %v590 = vmul.f32 %v560, 1.442695
    %v591 = vpow.pop %v590
    %v592 = vmul.f32 %v561, 1.442695
    %v593 = vpow.pop %v592
    %v594 = vmul.f32 %v562, 1.442695
    %v595 = vpow.pop %v594
    %v596 = vmul.f32 %v563, 1.442695
    %v597 = vpow.pop %v596
    %v598 = vmul.f32 %v564, 1.442695
    %v599 = vpow.pop %v598
    %v600 = vmul.f32 %v565, 1.442695
    %v601 = vpow.pop %v600
    %v602 = vmul.f32 %v566, 1.442695
    %v603 = vpow.pop %v602
    %v604 = vmul.f32 %v567, 1.442695
    %v605 = vpow.pop %v604
    %v606 = vmul.f32 %v568, 1.442695
    %v607 = vpow.pop %v606
    %v608 = vmul.f32 %v569, 1.442695
    %v609 = vpow.pop %v608
    %v610 = vmul.f32 %v570, 1.442695
    %v611 = vpow.pop %v610
    %v612 = vmul.f32 %v571, 1.442695
    %v613 = vpow.pop %v612
    %v614 = vmul.f32 %v572, 1.442695
    %v615 = vpow.pop %v614
    %v616 = vmul.f32 %v573, 1.442695
    %v617 = vpow.pop %v616
    %v618 = vmul.f32 %v574, 1.442695
    %v619 = vpow.pop %v618
    %v620 = vmul.f32 %v575, 1.442695
    %v621 = vpow.pop %v620
    %v622 = vmul.f32 %v576, 1.442695
    %v623 = vpow.pop %v622
    %v624 = vmul.f32 %v577, 1.442695
    %v625 = vpow.pop %v624
    %v626 = vsub.f32 %v579, 1.0
    %v627 = vsub.f32 %v581, 1.0
    %v628 = vsub.f32 %v583, 1.0
    %v629 = vsub.f32 %v585, 1.0
    %v630 = vsub.f32 %v587, 1.0
    %v631 = vsub.f32 %v589, 1.0
    %v632 = vsub.f32 %v591, 1.0
    %v633 = vsub.f32 %v593, 1.0
    %v634 = vsub.f32 %v595, 1.0
    %v635 = vsub.f32 %v597, 1.0
    %v636 = vsub.f32 %v599, 1.0
    %v637 = vsub.f32 %v601, 1.0
    %v638 = vsub.f32 %v603, 1.0
    %v639 = vsub.f32 %v605, 1.0
    %v640 = vsub.f32 %v607, 1.0
    %v641 = vsub.f32 %v609, 1.0
    %v642 = vsub.f32 %v611, 1.0
    %v643 = vsub.f32 %v613, 1.0
    %v644 = vsub.f32 %v615, 1.0
    %v645 = vsub.f32 %v617, 1.0
    %v646 = vsub.f32 %v619, 1.0
    %v647 = vsub.f32 %v621, 1.0
    %v648 = vsub.f32 %v623, 1.0
    %v649 = vsub.f32 %v625, 1.0
    %v650 = vmul.f32 %v626, 0.06
    %v651 = vmul.f32 %v627, 0.06
    %v652 = vmul.f32 %v628, 0.06
    %v653 = vmul.f32 %v629, 0.06
    %v654 = vmul.f32 %v630, 0.06
    %v655 = vmul.f32 %v631, 0.06
    %v656 = vmul.f32 %v632, 0.06
    %v657 = vmul.f32 %v633, 0.06
    %v658 = vmul.f32 %v634, 0.06
    %v659 = vmul.f32 %v635, 0.06
    %v660 = vmul.f32 %v636, 0.06
    %v661 = vmul.f32 %v637, 0.06
    %v662 = vmul.f32 %v638, 0.06
    %v663 = vmul.f32 %v639, 0.06
    %v664 = vmul.f32 %v640, 0.06
    %v665 = vmul.f32 %v641, 0.06
    %v666 = vmul.f32 %v642, 0.06
    %v667 = vmul.f32 %v643, 0.06
    %v668 = vmul.f32 %v644, 0.06
    %v669 = vmul.f32 %v645, 0.06
    %v670 = vmul.f32 %v646, 0.06
    %v671 = vmul.f32 %v647, 0.06
    %v672 = vmul.f32 %v648, 0.06
    %v673 = vmul.f32 %v649, 0.06
    %v674 = vsel %vm530, %v406, %v650
    %v675 = vsel %vm531, %v408, %v651
    %v676 = vsel %vm532, %v459, %v652
    %v677 = vsel %vm533, %v461, %v653
    %v678 = vsel %vm534, %v512, %v654
    %v679 = vsel %vm535, %v514, %v655
    %v680 = vsel %vm536, %v410, %v656
    %v681 = vsel %vm537, %v412, %v657
    %v682 = vsel %vm538, %v463, %v658
    %v683 = vsel %vm539, %v465, %v659
    %v684 = vsel %vm540, %v516, %v660
    %v685 = vsel %vm541, %v518, %v661
    %v686 = vsel %vm542, %v416, %v662
    %v687 = vsel %vm543, %v418, %v663
    %v688 = vsel %vm544, %v469, %v664
    %v689 = vsel %vm545, %v471, %v665
    %v690 = vsel %vm546, %v522, %v666
    %v691 = vsel %vm547, %v524, %v667
    %v692 = vsel %vm548, %v420, %v668
    %v693 = vsel %vm549, %v422, %v669
    %v694 = vsel %vm550, %v473, %v670
    %v695 = vsel %vm551, %v475, %v671
    %v696 = vsel %vm552, %v526, %v672
    %v697 = vsel %vm553, %v528, %v673
    %v698 = vpack.c.bf16 %v680, %v674
    %v699 = vpack.c.bf16 %v681, %v675
    %v700 = vpack.c.bf16 %v682, %v676
    %v701 = vpack.c.bf16 %v683, %v677
    %v702 = vpack.c.bf16 %v684, %v678
    %v703 = vpack.c.bf16 %v685, %v679
    %v704 = vpack.c.bf16 %v692, %v686
    %v705 = vpack.c.bf16 %v693, %v687
    %v706 = vpack.c.bf16 %v694, %v688
    %v707 = vpack.c.bf16 %v695, %v689
    %v708 = vpack.c.bf16 %v696, %v690
    %v709 = vpack.c.bf16 %v697, %v691
    %v710 = vld [vmem:[%s3] sm:$0xff]
    %v711 = vld [vmem:[%s3 + $0x8] sm:$0xff]
    %v712 = vld [vmem:[%s3 + $0x10] sm:$0xff]
    %v713 = vld [vmem:[%s3 + $0x18] sm:$0xff]
    %v714 = vld [vmem:[%s3 + $0x20] sm:$0xff]
    %v715 = vld [vmem:[%s3 + $0x28] sm:$0xff]
    %v716 = vld [vmem:[%s3 + $0x30] sm:$0xff]
    %v717 = vld [vmem:[%s3 + $0x38] sm:$0xff]
    %v718 = vld [vmem:[%s3 + $0x40] sm:$0xff]
    %v719 = vld [vmem:[%s3 + $0x48] sm:$0xff]
    %v720 = vld [vmem:[%s3 + $0x50] sm:$0xff]
    %v721 = vld [vmem:[%s3 + $0x58] sm:$0xff]
    %v722 = vld [vmem:[%s3 + $0x60] sm:$0xff]
    %v723 = vld [vmem:[%s3 + $0x68] sm:$0xff]
    %v724 = vld [vmem:[%s3 + $0x70] sm:$0xff]
    %v725 = vld [vmem:[%s3 + $0x78] sm:$0xff]
    %v726 = vld [vmem:[%s3 + $0x80] sm:$0xff]
    %v727 = vld [vmem:[%s3 + $0x88] sm:$0xff]
    %v728 = vld [vmem:[%s3 + $0x90] sm:$0xff]
    %v729 = vld [vmem:[%s3 + $0x98] sm:$0xff]
    %v730 = vld [vmem:[%s3 + $0xa0] sm:$0xff]
    %v731 = vld [vmem:[%s3 + $0xa8] sm:$0xff]
    %v732 = vld [vmem:[%s3 + $0xb0] sm:$0xff]
    %v733 = vld [vmem:[%s3 + $0xb8] sm:$0xff]
    %v734 = vld [vmem:[%s3 + $0xc0] sm:$0xff]
    %v735 = vld [vmem:[%s3 + $0xc8] sm:$0xff]
    %v736 = vld [vmem:[%s3 + $0xd0] sm:$0xff]
    %v737 = vld [vmem:[%s3 + $0xd8] sm:$0xff]
    %v738 = vld [vmem:[%s3 + $0xe0] sm:$0xff]
    %v739 = vld [vmem:[%s3 + $0xe8] sm:$0xff]
    %v740 = vld [vmem:[%s3 + $0xf0] sm:$0xff]
    %v741 = vld [vmem:[%s3 + $0xf8] sm:$0xff]
    %v742 = vld [vmem:[%s3 + $0x100] sm:$0xff]
    %v743 = vld [vmem:[%s3 + $0x108] sm:$0xff]
    %v744 = vld [vmem:[%s3 + $0x110] sm:$0xff]
    %v745 = vld [vmem:[%s3 + $0x118] sm:$0xff]
    %v746 = vld [vmem:[%s3 + $0x120] sm:$0xff]
    %v747 = vld [vmem:[%s3 + $0x128] sm:$0xff]
    %v748 = vld [vmem:[%s3 + $0x130] sm:$0xff]
    %v749 = vld [vmem:[%s3 + $0x138] sm:$0xff]
    %v750 = vld [vmem:[%s3 + $0x140] sm:$0xff]
    %v751 = vld [vmem:[%s3 + $0x148] sm:$0xff]
    %v752 = vld [vmem:[%s3 + $0x150] sm:$0xff]
    %v753 = vld [vmem:[%s3 + $0x158] sm:$0xff]
    %v754 = vld [vmem:[%s3 + $0x160] sm:$0xff]
    %v755 = vld [vmem:[%s3 + $0x168] sm:$0xff]
    %v756 = vld [vmem:[%s3 + $0x170] sm:$0xff]
    %v757 = vld [vmem:[%s3 + $0x178] sm:$0xff]
    %v758 = vld [vmem:[%s3 + $0x180] sm:$0xff]
    %v759 = vld [vmem:[%s3 + $0x188] sm:$0xff]
    %v760 = vld [vmem:[%s3 + $0x190] sm:$0xff]
    %v761 = vld [vmem:[%s3 + $0x198] sm:$0xff]
    %v762 = vld [vmem:[%s3 + $0x1a0] sm:$0xff]
    %v763 = vld [vmem:[%s3 + $0x1a8] sm:$0xff]
    %v764 = vld [vmem:[%s3 + $0x1b0] sm:$0xff]
    %v765 = vld [vmem:[%s3 + $0x1b8] sm:$0xff]
    %v766 = vld [vmem:[%s3 + $0x1c0] sm:$0xff]
    %v767 = vld [vmem:[%s3 + $0x1c8] sm:$0xff]
    %v768 = vld [vmem:[%s3 + $0x1d0] sm:$0xff]
    %v769 = vld [vmem:[%s3 + $0x1d8] sm:$0xff]
    %v770 = vld [vmem:[%s3 + $0x1e0] sm:$0xff]
    %v771 = vld [vmem:[%s3 + $0x1e8] sm:$0xff]
    %v772 = vld [vmem:[%s3 + $0x1f0] sm:$0xff]
    %v773 = vld [vmem:[%s3 + $0x1f8] sm:$0xff]
    %v774 = vld [vmem:[%s3 + $0x200] sm:$0xff]
    %v775 = vld [vmem:[%s3 + $0x208] sm:$0xff]
    %v776 = vld [vmem:[%s3 + $0x210] sm:$0xff]
    %v777 = vld [vmem:[%s3 + $0x218] sm:$0xff]
    %v778 = vld [vmem:[%s3 + $0x220] sm:$0xff]
    %v779 = vld [vmem:[%s3 + $0x228] sm:$0xff]
    %v780 = vld [vmem:[%s3 + $0x230] sm:$0xff]
    %v781 = vld [vmem:[%s3 + $0x238] sm:$0xff]
    %v782 = vld [vmem:[%s3 + $0x240] sm:$0xff]
    %v783 = vld [vmem:[%s3 + $0x248] sm:$0xff]
    %v784 = vld [vmem:[%s3 + $0x250] sm:$0xff]
    %v785 = vld [vmem:[%s3 + $0x258] sm:$0xff]
    %v786 = vld [vmem:[%s3 + $0x260] sm:$0xff]
    %v787 = vld [vmem:[%s3 + $0x268] sm:$0xff]
    %v788 = vld [vmem:[%s3 + $0x270] sm:$0xff]
    %v789 = vld [vmem:[%s3 + $0x278] sm:$0xff]
    %v790 = vld [vmem:[%s3 + $0x280] sm:$0xff]
    %v791 = vld [vmem:[%s3 + $0x288] sm:$0xff]
    %v792 = vld [vmem:[%s3 + $0x290] sm:$0xff]
    %v793 = vld [vmem:[%s3 + $0x298] sm:$0xff]
    %v794 = vld [vmem:[%s3 + $0x2a0] sm:$0xff]
    %v795 = vld [vmem:[%s3 + $0x2a8] sm:$0xff]
    %v796 = vld [vmem:[%s3 + $0x2b0] sm:$0xff]
    %v797 = vld [vmem:[%s3 + $0x2b8] sm:$0xff]
    %v798 = vld [vmem:[%s3 + $0x2c0] sm:$0xff]
    %v799 = vld [vmem:[%s3 + $0x2c8] sm:$0xff]
    %v800 = vld [vmem:[%s3 + $0x2d0] sm:$0xff]
    %v801 = vld [vmem:[%s3 + $0x2d8] sm:$0xff]
    %v802 = vld [vmem:[%s3 + $0x2e0] sm:$0xff]
    %v803 = vld [vmem:[%s3 + $0x2e8] sm:$0x77]
    %v898 = vunpack.c.l.b16 %v710
    %v899 = vunpack.c.h.b16 %v710
    %v900 = vunpack.c.l.b16 %v711
    %v901 = vunpack.c.h.b16 %v711
    %v902 = vunpack.c.l.b16 %v712
    %v903 = vunpack.c.h.b16 %v712
    %v904 = vunpack.c.l.b16 %v713
    %v905 = vunpack.c.h.b16 %v713
    %v906 = vunpack.c.l.b16 %v714
    %v907 = vunpack.c.h.b16 %v714
    %v908 = vunpack.c.l.b16 %v715
    %v909 = vunpack.c.h.b16 %v715
    %v910 = vunpack.c.l.b16 %v716
    %v911 = vunpack.c.h.b16 %v716
    %v912 = vunpack.c.l.b16 %v717
    %v913 = vunpack.c.h.b16 %v717
    %v914 = vunpack.c.l.b16 %v718
    %v915 = vunpack.c.h.b16 %v718
    %v916 = vunpack.c.l.b16 %v719
    %v917 = vunpack.c.h.b16 %v719
    %v918 = vunpack.c.l.b16 %v720
    %v919 = vunpack.c.h.b16 %v720
    %v920 = vunpack.c.l.b16 %v721
    %v921 = vunpack.c.h.b16 %v721
    %v922 = vunpack.c.l.b16 %v722
    %v923 = vunpack.c.h.b16 %v722
    %v924 = vunpack.c.l.b16 %v723
    %v925 = vunpack.c.h.b16 %v723
    %v926 = vunpack.c.l.b16 %v724
    %v927 = vunpack.c.h.b16 %v724
    %v928 = vunpack.c.l.b16 %v725
    %v929 = vunpack.c.h.b16 %v725
    %v930 = vunpack.c.l.b16 %v726
    %v931 = vunpack.c.h.b16 %v726
    %v932 = vunpack.c.l.b16 %v727
    %v933 = vunpack.c.h.b16 %v727
    %v934 = vunpack.c.l.b16 %v728
    %v935 = vunpack.c.h.b16 %v728
    %v936 = vunpack.c.l.b16 %v729
    %v937 = vunpack.c.h.b16 %v729
    %v938 = vunpack.c.l.b16 %v730
    %v939 = vunpack.c.h.b16 %v730
    %v940 = vunpack.c.l.b16 %v731
    %v941 = vunpack.c.h.b16 %v731
    %v942 = vunpack.c.l.b16 %v732
    %v943 = vunpack.c.h.b16 %v732
    %v944 = vunpack.c.l.b16 %v733
    %v945 = vunpack.c.h.b16 %v733
    %v946 = vunpack.c.l.b16 %v734
    %v947 = vunpack.c.h.b16 %v734
    %v948 = vunpack.c.l.b16 %v735
    %v949 = vunpack.c.h.b16 %v735
    %v950 = vunpack.c.l.b16 %v736
    %v951 = vunpack.c.h.b16 %v736
    %v952 = vunpack.c.l.b16 %v737
    %v953 = vunpack.c.h.b16 %v737
    %v954 = vunpack.c.l.b16 %v738
    %v955 = vunpack.c.h.b16 %v738
    %v956 = vunpack.c.l.b16 %v739
    %v957 = vunpack.c.h.b16 %v739
    %v958 = vunpack.c.l.b16 %v740
    %v959 = vunpack.c.h.b16 %v740
    %v960 = vunpack.c.l.b16 %v741
    %v961 = vunpack.c.h.b16 %v741
    %v962 = vunpack.c.l.b16 %v742
    %v963 = vunpack.c.h.b16 %v742
    %v964 = vunpack.c.l.b16 %v743
    %v965 = vunpack.c.h.b16 %v743
    %v966 = vunpack.c.l.b16 %v744
    %v967 = vunpack.c.h.b16 %v744
    %v968 = vunpack.c.l.b16 %v745
    %v969 = vunpack.c.h.b16 %v745
    %v970 = vunpack.c.l.b16 %v746
    %v971 = vunpack.c.h.b16 %v746
    %v972 = vunpack.c.l.b16 %v747
    %v973 = vunpack.c.h.b16 %v747
    %v974 = vunpack.c.l.b16 %v748
    %v975 = vunpack.c.h.b16 %v748
    %v976 = vunpack.c.l.b16 %v749
    %v977 = vunpack.c.h.b16 %v749
    %v978 = vunpack.c.l.b16 %v750
    %v979 = vunpack.c.h.b16 %v750
    %v980 = vunpack.c.l.b16 %v751
    %v981 = vunpack.c.h.b16 %v751
    %v982 = vunpack.c.l.b16 %v752
    %v983 = vunpack.c.h.b16 %v752
    %v984 = vunpack.c.l.b16 %v753
    %v985 = vunpack.c.h.b16 %v753
    %v986 = vunpack.c.l.b16 %v754
    %v987 = vunpack.c.h.b16 %v754
    %v988 = vunpack.c.l.b16 %v755
    %v989 = vunpack.c.h.b16 %v755
    %v990 = vunpack.c.l.b16 %v756
    %v991 = vunpack.c.h.b16 %v756
    %v992 = vunpack.c.l.b16 %v757
    %v993 = vunpack.c.h.b16 %v757
    %v994 = vunpack.c.l.b16 %v758
    %v995 = vunpack.c.h.b16 %v758
    %v996 = vunpack.c.l.b16 %v759
    %v997 = vunpack.c.h.b16 %v759
    %v998 = vunpack.c.l.b16 %v760
    %v999 = vunpack.c.h.b16 %v760
    %v1000 = vunpack.c.l.b16 %v761
    %v1001 = vunpack.c.h.b16 %v761
    %v1002 = vunpack.c.l.b16 %v762
    %v1003 = vunpack.c.h.b16 %v762
    %v1004 = vunpack.c.l.b16 %v763
    %v1005 = vunpack.c.h.b16 %v763
    %v1006 = vunpack.c.l.b16 %v764
    %v1007 = vunpack.c.h.b16 %v764
    %v1008 = vunpack.c.l.b16 %v765
    %v1009 = vunpack.c.h.b16 %v765
    %v1010 = vunpack.c.l.b16 %v766
    %v1011 = vunpack.c.h.b16 %v766
    %v1012 = vunpack.c.l.b16 %v767
    %v1013 = vunpack.c.h.b16 %v767
    %v1014 = vunpack.c.l.b16 %v768
    %v1015 = vunpack.c.h.b16 %v768
    %v1016 = vunpack.c.l.b16 %v769
    %v1017 = vunpack.c.h.b16 %v769
    %v1018 = vunpack.c.l.b16 %v770
    %v1019 = vunpack.c.h.b16 %v770
    %v1020 = vunpack.c.l.b16 %v771
    %v1021 = vunpack.c.h.b16 %v771
    %v1022 = vunpack.c.l.b16 %v772
    %v1023 = vunpack.c.h.b16 %v772
    %v1024 = vunpack.c.l.b16 %v773
    %v1025 = vunpack.c.h.b16 %v773
    %v1026 = vunpack.c.l.b16 %v774
    %v1027 = vunpack.c.h.b16 %v774
    %v1028 = vunpack.c.l.b16 %v775
    %v1029 = vunpack.c.h.b16 %v775
    %v1030 = vunpack.c.l.b16 %v776
    %v1031 = vunpack.c.h.b16 %v776
    %v1032 = vunpack.c.l.b16 %v777
    %v1033 = vunpack.c.h.b16 %v777
    %v1034 = vunpack.c.l.b16 %v778
    %v1035 = vunpack.c.h.b16 %v778
    %v1036 = vunpack.c.l.b16 %v779
    %v1037 = vunpack.c.h.b16 %v779
    %v1038 = vunpack.c.l.b16 %v780
    %v1039 = vunpack.c.h.b16 %v780
    %v1040 = vunpack.c.l.b16 %v781
    %v1041 = vunpack.c.h.b16 %v781
    %v1042 = vunpack.c.l.b16 %v782
    %v1043 = vunpack.c.h.b16 %v782
    %v1044 = vunpack.c.l.b16 %v783
    %v1045 = vunpack.c.h.b16 %v783
    %v1046 = vunpack.c.l.b16 %v784
    %v1047 = vunpack.c.h.b16 %v784
    %v1048 = vunpack.c.l.b16 %v785
    %v1049 = vunpack.c.h.b16 %v785
    %v1050 = vunpack.c.l.b16 %v786
    %v1051 = vunpack.c.h.b16 %v786
    %v1052 = vunpack.c.l.b16 %v787
    %v1053 = vunpack.c.h.b16 %v787
    %v1054 = vunpack.c.l.b16 %v788
    %v1055 = vunpack.c.h.b16 %v788
    %v1056 = vunpack.c.l.b16 %v789
    %v1057 = vunpack.c.h.b16 %v789
    %v1058 = vunpack.c.l.b16 %v790
    %v1059 = vunpack.c.h.b16 %v790
    %v1060 = vunpack.c.l.b16 %v791
    %v1061 = vunpack.c.h.b16 %v791
    %v1062 = vunpack.c.l.b16 %v792
    %v1063 = vunpack.c.h.b16 %v792
    %v1064 = vunpack.c.l.b16 %v793
    %v1065 = vunpack.c.h.b16 %v793
    %v1066 = vunpack.c.l.b16 %v794
    %v1067 = vunpack.c.h.b16 %v794
    %v1068 = vunpack.c.l.b16 %v795
    %v1069 = vunpack.c.h.b16 %v795
    %v1070 = vunpack.c.l.b16 %v796
    %v1071 = vunpack.c.h.b16 %v796
    %v1072 = vunpack.c.l.b16 %v797
    %v1073 = vunpack.c.h.b16 %v797
    %v1074 = vunpack.c.l.b16 %v798
    %v1075 = vunpack.c.h.b16 %v798
    %v1076 = vunpack.c.l.b16 %v799
    %v1077 = vunpack.c.h.b16 %v799
    %v1078 = vunpack.c.l.b16 %v800
    %v1079 = vunpack.c.h.b16 %v800
    %v1080 = vunpack.c.l.b16 %v801
    %v1081 = vunpack.c.h.b16 %v801
    %v1082 = vunpack.c.l.b16 %v802
    %v1083 = vunpack.c.h.b16 %v802
    %v1084 = vunpack.c.l.b16 %v803
    %v1085 = vunpack.c.h.b16 %v803
    %v1086 = vpack.c.b16 %v900, %v898
    %v1087 = vpack.c.b16 %v901, %v899
    %v1088 = vpack.c.b16 %v904, %v902
    %v1089 = vpack.c.b16 %v905, %v903
    %v1090 = vpack.c.b16 %v908, %v906
    %v1091 = vpack.c.b16 %v909, %v907
    %v1092 = vpack.c.b16 %v912, %v910
    %v1093 = vpack.c.b16 %v913, %v911
    %v1094 = vpack.c.b16 %v916, %v914
    %v1095 = vpack.c.b16 %v917, %v915
    %v1096 = vpack.c.b16 %v920, %v918
    %v1097 = vpack.c.b16 %v921, %v919
    %v1098 = vpack.c.b16 %v924, %v922
    %v1099 = vpack.c.b16 %v925, %v923
    %v1100 = vpack.c.b16 %v928, %v926
    %v1101 = vpack.c.b16 %v929, %v927
    %v1102 = vpack.c.b16 %v932, %v930
    %v1103 = vpack.c.b16 %v933, %v931
    %v1104 = vpack.c.b16 %v936, %v934
    %v1105 = vpack.c.b16 %v937, %v935
    %v1106 = vpack.c.b16 %v940, %v938
    %v1107 = vpack.c.b16 %v941, %v939
    %v1108 = vpack.c.b16 %v944, %v942
    %v1109 = vpack.c.b16 %v945, %v943
    %v1110 = vpack.c.b16 %v948, %v946
    %v1111 = vpack.c.b16 %v949, %v947
    %v1112 = vpack.c.b16 %v952, %v950
    %v1113 = vpack.c.b16 %v953, %v951
    %v1114 = vpack.c.b16 %v956, %v954
    %v1115 = vpack.c.b16 %v957, %v955
    %v1116 = vpack.c.b16 %v960, %v958
    %v1117 = vpack.c.b16 %v961, %v959
    %v1118 = vpack.c.b16 %v964, %v962
    %v1119 = vpack.c.b16 %v965, %v963
    %v1120 = vpack.c.b16 %v968, %v966
    %v1121 = vpack.c.b16 %v969, %v967
    %v1122 = vpack.c.b16 %v972, %v970
    %v1123 = vpack.c.b16 %v973, %v971
    %v1124 = vpack.c.b16 %v976, %v974
    %v1125 = vpack.c.b16 %v977, %v975
    %v1126 = vpack.c.b16 %v980, %v978
    %v1127 = vpack.c.b16 %v981, %v979
    %v1128 = vpack.c.b16 %v984, %v982
    %v1129 = vpack.c.b16 %v985, %v983
    %v1130 = vpack.c.b16 %v988, %v986
    %v1131 = vpack.c.b16 %v989, %v987
    %v1132 = vpack.c.b16 %v992, %v990
    %v1133 = vpack.c.b16 %v993, %v991
    %v1134 = vpack.c.b16 %v996, %v994
    %v1135 = vpack.c.b16 %v997, %v995
    %v1136 = vpack.c.b16 %v1000, %v998
    %v1137 = vpack.c.b16 %v1001, %v999
    %v1138 = vpack.c.b16 %v1004, %v1002
    %v1139 = vpack.c.b16 %v1005, %v1003
    %v1140 = vpack.c.b16 %v1008, %v1006
    %v1141 = vpack.c.b16 %v1009, %v1007
    %v1142 = vpack.c.b16 %v1012, %v1010
    %v1143 = vpack.c.b16 %v1013, %v1011
    %v1144 = vpack.c.b16 %v1016, %v1014
    %v1145 = vpack.c.b16 %v1017, %v1015
    %v1146 = vpack.c.b16 %v1020, %v1018
    %v1147 = vpack.c.b16 %v1021, %v1019
    %v1148 = vpack.c.b16 %v1024, %v1022
    %v1149 = vpack.c.b16 %v1025, %v1023
    %v1150 = vpack.c.b16 %v1028, %v1026
    %v1151 = vpack.c.b16 %v1029, %v1027
    %v1152 = vpack.c.b16 %v1032, %v1030
    %v1153 = vpack.c.b16 %v1033, %v1031
    %v1154 = vpack.c.b16 %v1036, %v1034
    %v1155 = vpack.c.b16 %v1037, %v1035
    %v1156 = vpack.c.b16 %v1040, %v1038
    %v1157 = vpack.c.b16 %v1041, %v1039
    %v1158 = vpack.c.b16 %v1044, %v1042
    %v1159 = vpack.c.b16 %v1045, %v1043
    %v1160 = vpack.c.b16 %v1048, %v1046
    %v1161 = vpack.c.b16 %v1049, %v1047
    %v1162 = vpack.c.b16 %v1052, %v1050
    %v1163 = vpack.c.b16 %v1053, %v1051
    %v1164 = vpack.c.b16 %v1056, %v1054
    %v1165 = vpack.c.b16 %v1057, %v1055
    %v1166 = vpack.c.b16 %v1060, %v1058
    %v1167 = vpack.c.b16 %v1061, %v1059
    %v1168 = vpack.c.b16 %v1064, %v1062
    %v1169 = vpack.c.b16 %v1065, %v1063
    %v1170 = vpack.c.b16 %v1068, %v1066
    %v1171 = vpack.c.b16 %v1069, %v1067
    %v1172 = vpack.c.b16 %v1072, %v1070
    %v1173 = vpack.c.b16 %v1073, %v1071
    %v1174 = vpack.c.b16 %v1076, %v1074
    %v1175 = vpack.c.b16 %v1077, %v1075
    %v1176 = vpack.c.b16 %v1080, %v1078
    %v1177 = vpack.c.b16 %v1081, %v1079
    %v1178 = vpack.c.b16 %v1084, %v1082
    %v1179 = vpack.c.b16 %v1085, %v1083
    %v1273 = vsel %vm85, %v703, 0
    %v1276 = vsel %vm85, %v709, 0
    %vm1278 = vcmask 1046528
    %v1280 = vsel %vm1278, %v1178, 0
    %v1283 = vsel %vm1278, %v1179, 0
    %1285 = vmatprep.subr.bf16.mxu0 %v1087
    %1286 = vmatpush1.bf16.msra.mxu0 %v1086
    %1287 = vmatprep.subr.bf16.mxu0 %v1089
    %1288 = vmatpush1.bf16.msra.mxu0 %v1088
    %1289 = vmatprep.subr.bf16.mxu0 %v1091
    %1290 = vmatpush1.bf16.msra.mxu0 %v1090
    %1291 = vmatprep.subr.bf16.mxu0 %v1093
    %1292 = vmatpush1.bf16.msra.mxu0 %v1092
    %1293 = vmatprep.subr.bf16.mxu0 %v1095
    %1294 = vmatpush1.bf16.msra.mxu0 %v1094
    %1295 = vmatprep.subr.bf16.mxu0 %v1097
    %1296 = vmatpush1.bf16.msra.mxu0 %v1096
    %1297 = vmatprep.subr.bf16.mxu0 %v1099
    %1298 = vmatpush1.bf16.msra.mxu0 %v1098
    %1299 = vmatprep.subr.bf16.mxu0 %v1101
    %1300 = vmatpush1.bf16.msra.mxu0 %v1100
    %1301 = vmatprep.subr.bf16.mxu0 %v1103
    %1302 = vmatpush1.bf16.msra.mxu0 %v1102
    %1303 = vmatprep.subr.bf16.mxu0 %v1105
    %1304 = vmatpush1.bf16.msra.mxu0 %v1104
    %1305 = vmatprep.subr.bf16.mxu0 %v1107
    %1306 = vmatpush1.bf16.msra.mxu0 %v1106
    %1307 = vmatprep.subr.bf16.mxu0 %v1109
    %1308 = vmatpush1.bf16.msra.mxu0 %v1108
    %1309 = vmatprep.subr.bf16.mxu0 %v1111
    %1310 = vmatpush1.bf16.msra.mxu0 %v1110
    %1311 = vmatprep.subr.bf16.mxu0 %v1113
    %1312 = vmatpush1.bf16.msra.mxu0 %v1112
    %1313 = vmatprep.subr.bf16.mxu0 %v1115
    %1314 = vmatpush1.bf16.msra.mxu0 %v1114
    %1315 = vmatprep.subr.bf16.mxu0 %v1117
    %1316 = vmatpush1.bf16.msra.mxu0 %v1116
    %1317 = vmatprep.mubr.bf16.mxu0 %v699
    %1318 = vmatmul.mubr.bf16.gmra.mrb[0].mxu0 %v698
    %v1319 = vpop.f32.mrb[0].mxu0
    %v1320 = vadd.f32 0.0, %v1319
    %v1321 = vpop.f32.mrb[0].mxu0
    %v1322 = vadd.f32 0.0, %v1321
    %v1323 = vpop.f32.mrb[0].mxu0
    %v1324 = vadd.f32 0.0, %v1323
    %v1325 = vpop.f32.mrb[0].mxu0
    %v1326 = vadd.f32 0.0, %v1325
    %1327 = vmatprep.mubr.bf16.mxu0 %v705
    %1328 = vmatmul.mubr.bf16.gmra.mrb[0].mxu0 %v704
    %v1329 = vpop.f32.mrb[0].mxu0
    %v1330 = vadd.f32 0.0, %v1329
    %v1331 = vpop.f32.mrb[0].mxu0
    %v1332 = vadd.f32 0.0, %v1331
    %v1333 = vpop.f32.mrb[0].mxu0
    %v1334 = vadd.f32 0.0, %v1333
    %v1335 = vpop.f32.mrb[0].mxu0
    %v1336 = vadd.f32 0.0, %v1335
    %1337 = vdwg.mxu0
    %1338 = vmatprep.subr.bf16.mxu0 %v1119
    %1339 = vmatpush1.bf16.msra.mxu0 %v1118
    %1340 = vmatprep.subr.bf16.mxu0 %v1121
    %1341 = vmatpush1.bf16.msra.mxu0 %v1120
    %1342 = vmatprep.subr.bf16.mxu0 %v1123
    %1343 = vmatpush1.bf16.msra.mxu0 %v1122
    %1344 = vmatprep.subr.bf16.mxu0 %v1125
    %1345 = vmatpush1.bf16.msra.mxu0 %v1124
    %1346 = vmatprep.subr.bf16.mxu0 %v1127
    %1347 = vmatpush1.bf16.msra.mxu0 %v1126
    %1348 = vmatprep.subr.bf16.mxu0 %v1129
    %1349 = vmatpush1.bf16.msra.mxu0 %v1128
    %1350 = vmatprep.subr.bf16.mxu0 %v1131
    %1351 = vmatpush1.bf16.msra.mxu0 %v1130
    %1352 = vmatprep.subr.bf16.mxu0 %v1133
    %1353 = vmatpush1.bf16.msra.mxu0 %v1132
    %1354 = vmatprep.subr.bf16.mxu0 %v1135
    %1355 = vmatpush1.bf16.msra.mxu0 %v1134
    %1356 = vmatprep.subr.bf16.mxu0 %v1137
    %1357 = vmatpush1.bf16.msra.mxu0 %v1136
    %1358 = vmatprep.subr.bf16.mxu0 %v1139
    %1359 = vmatpush1.bf16.msra.mxu0 %v1138
    %1360 = vmatprep.subr.bf16.mxu0 %v1141
    %1361 = vmatpush1.bf16.msra.mxu0 %v1140
    %1362 = vmatprep.subr.bf16.mxu0 %v1143
    %1363 = vmatpush1.bf16.msra.mxu0 %v1142
    %1364 = vmatprep.subr.bf16.mxu0 %v1145
    %1365 = vmatpush1.bf16.msra.mxu0 %v1144
    %1366 = vmatprep.subr.bf16.mxu0 %v1147
    %1367 = vmatpush1.bf16.msra.mxu0 %v1146
    %1368 = vmatprep.subr.bf16.mxu0 %v1149
    %1369 = vmatpush1.bf16.msra.mxu0 %v1148
    %1370 = vmatprep.mubr.bf16.mxu0 %v701
    %1371 = vmatmul.mubr.bf16.gmra.mrb[0].mxu0 %v700
    %v1372 = vpop.f32.mrb[0].mxu0
    %v1373 = vadd.f32 %v1320, %v1372
    %v1374 = vpop.f32.mrb[0].mxu0
    %v1375 = vadd.f32 %v1322, %v1374
    %v1376 = vpop.f32.mrb[0].mxu0
    %v1377 = vadd.f32 %v1324, %v1376
    %v1378 = vpop.f32.mrb[0].mxu0
    %v1379 = vadd.f32 %v1326, %v1378
    %1380 = vmatprep.mubr.bf16.mxu0 %v707
    %1381 = vmatmul.mubr.bf16.gmra.mrb[0].mxu0 %v706
    %v1382 = vpop.f32.mrb[0].mxu0
    %v1383 = vadd.f32 %v1330, %v1382
    %v1384 = vpop.f32.mrb[0].mxu0
    %v1385 = vadd.f32 %v1332, %v1384
    %v1386 = vpop.f32.mrb[0].mxu0
    %v1387 = vadd.f32 %v1334, %v1386
    %v1388 = vpop.f32.mrb[0].mxu0
    %v1389 = vadd.f32 %v1336, %v1388
    %1390 = vdwg.mxu0
    %1391 = vmatprep.subr.bf16.mxu0 %v1151
    %1392 = vmatpush1.bf16.msra.mxu0 %v1150
    %1393 = vmatprep.subr.bf16.mxu0 %v1153
    %1394 = vmatpush1.bf16.msra.mxu0 %v1152
    %1395 = vmatprep.subr.bf16.mxu0 %v1155
    %1396 = vmatpush1.bf16.msra.mxu0 %v1154
    %1397 = vmatprep.subr.bf16.mxu0 %v1157
    %1398 = vmatpush1.bf16.msra.mxu0 %v1156
    %1399 = vmatprep.subr.bf16.mxu0 %v1159
    %1400 = vmatpush1.bf16.msra.mxu0 %v1158
    %1401 = vmatprep.subr.bf16.mxu0 %v1161
    %1402 = vmatpush1.bf16.msra.mxu0 %v1160
    %1403 = vmatprep.subr.bf16.mxu0 %v1163
    %1404 = vmatpush1.bf16.msra.mxu0 %v1162
    %1405 = vmatprep.subr.bf16.mxu0 %v1165
    %1406 = vmatpush1.bf16.msra.mxu0 %v1164
    %1407 = vmatprep.subr.bf16.mxu0 %v1167
    %1408 = vmatpush1.bf16.msra.mxu0 %v1166
    %1409 = vmatprep.subr.bf16.mxu0 %v1169
    %1410 = vmatpush1.bf16.msra.mxu0 %v1168
    %1411 = vmatprep.subr.bf16.mxu0 %v1171
    %1412 = vmatpush1.bf16.msra.mxu0 %v1170
    %1413 = vmatprep.subr.bf16.mxu0 %v1173
    %1414 = vmatpush1.bf16.msra.mxu0 %v1172
    %1415 = vmatprep.subr.bf16.mxu0 %v1175
    %1416 = vmatpush1.bf16.msra.mxu0 %v1174
    %1417 = vmatprep.subr.bf16.mxu0 %v1177
    %1418 = vmatpush1.bf16.msra.mxu0 %v1176
    %1419 = vmatprep.subr.bf16.mxu0 %v1283
    %1420 = vmatpush1.bf16.msra.mxu0 %v1280
    %1421 = vmatprep.subr.bf16.mxu0 0
    %1422 = vmatpush1.bf16.msra.mxu0 0
    %1423 = vmatprep.mubr.bf16.mxu0 %v1273
    %1424 = vmatmul.mubr.bf16.gmra.mrb[0].mxu0 %v702
    %v1425 = vpop.f32.mrb[0].mxu0
    %v1426 = vadd.f32 %v1373, %v1425
    %v1427 = vpop.f32.mrb[0].mxu0
    %v1428 = vadd.f32 %v1375, %v1427
    %v1429 = vpop.f32.mrb[0].mxu0
    %v1430 = vadd.f32 %v1377, %v1429
    %v1431 = vpop.f32.mrb[0].mxu0
    %v1432 = vadd.f32 %v1379, %v1431
    %1433 = vmatprep.mubr.bf16.mxu0 %v1276
    %1434 = vmatmul.mubr.bf16.gmra.mrb[0].mxu0 %v708
    %v1435 = vpop.f32.mrb[0].mxu0
    %v1436 = vadd.f32 %v1383, %v1435
    %v1437 = vpop.f32.mrb[0].mxu0
    %v1438 = vadd.f32 %v1385, %v1437
    %v1439 = vpop.f32.mrb[0].mxu0
    %v1440 = vadd.f32 %v1387, %v1439
    %v1441 = vpop.f32.mrb[0].mxu0
    %v1442 = vadd.f32 %v1389, %v1441
    %1443 = vdwg.mxu0
    %v1444 = vpack.c.bf16 %v1430, %v1426
    %v1445 = vpack.c.bf16 %v1432, %v1428
    %v1446 = vpack.c.bf16 %v1440, %v1436
    %v1447 = vpack.c.bf16 %v1442, %v1438
    %1448 = vst [vmem:[#allocation3] sm:$0xff] %v1444
    %vm1449 = vcmask 482304
    %1450 = vst.msk [vmem:[#allocation3 + $0x8] sm:$0xff] %vm1449, %v1445
    %1451 = vst [vmem:[#allocation3 + $0x10] sm:$0xff] %v1446
    %1452 = vst.msk [vmem:[#allocation3 + $0x18] sm:$0xff] %vm1449, %v1447
    %1457 = vrot.lane.b32.xlu0 %v1444, 127
    %v1458 = vpop.permute.xlu0 %1457
    %1459 = vrot.lane.b32.xlu0 %v1445, 127
    %v1460 = vpop.permute.xlu0 %1459
    %1461 = vrot.lane.b32.xlu0 %v1446, 127
    %v1462 = vpop.permute.xlu0 %1461
    %1463 = vrot.lane.b32.xlu0 %v1447, 127
    %v1464 = vpop.permute.xlu0 %1463
    %vm1465 = vcmask 1039360
    %v1466 = vsel %vm1465, %v1458, %v1460
    %v1467 = vsel %vm1465, %v1462, %v1464
    %1472 = vst [vmem:[#allocation3 + $0x20] sm:$0xff] %v1466
    %1473 = vst.msk [vmem:[#allocation3 + $0x28] sm:$0xff] %vm1449, %v1460
    %1474 = vst [vmem:[#allocation3 + $0x30] sm:$0xff] %v1467
    %1475 = vst.msk [vmem:[#allocation3 + $0x38] sm:$0xff] %vm1449, %v1464
    %1476 = vrot.lane.b32.xlu0 %v1444, 126
    %v1477 = vpop.permute.xlu0 %1476
    %1478 = vrot.lane.b32.xlu0 %v1445, 126
    %v1479 = vpop.permute.xlu0 %1478
    %1480 = vrot.lane.b32.xlu0 %v1446, 126
    %v1481 = vpop.permute.xlu0 %1480
    %1482 = vrot.lane.b32.xlu0 %v1447, 126
    %v1483 = vpop.permute.xlu0 %1482
    %vm1484 = vcmask 1031168
    %v1485 = vsel %vm1484, %v1477, %v1479
    %v1486 = vsel %vm1484, %v1481, %v1483
    %1491 = vst [vmem:[#allocation3 + $0x40] sm:$0xff] %v1485
    %1492 = vst.msk [vmem:[#allocation3 + $0x48] sm:$0xff] %vm1449, %v1479
    %1493 = vst [vmem:[#allocation3 + $0x50] sm:$0xff] %v1486
    %1494 = vst.msk [vmem:[#allocation3 + $0x58] sm:$0xff] %vm1449, %v1483
    %1495 = vrot.lane.b32.xlu0 %v1444, 125
    %v1496 = vpop.permute.xlu0 %1495
    %1497 = vrot.lane.b32.xlu0 %v1445, 125
    %v1498 = vpop.permute.xlu0 %1497
    %1499 = vrot.lane.b32.xlu0 %v1446, 125
    %v1500 = vpop.permute.xlu0 %1499
    %1501 = vrot.lane.b32.xlu0 %v1447, 125
    %v1502 = vpop.permute.xlu0 %1501
    %vm1503 = vcmask 1022976
    %v1504 = vsel %vm1503, %v1496, %v1498
    %v1505 = vsel %vm1503, %v1500, %v1502
    %1510 = vst [vmem:[#allocation3 + $0x60] sm:$0xff] %v1504
    %1511 = vst.msk [vmem:[#allocation3 + $0x68] sm:$0xff] %vm1449, %v1498
    %1512 = vst [vmem:[#allocation3 + $0x70] sm:$0xff] %v1505
    %1513 = vst.msk [vmem:[#allocation3 + $0x78] sm:$0xff] %vm1449, %v1502
    %1514 = vrot.lane.b32.xlu0 %v1444, 124
    %v1515 = vpop.permute.xlu0 %1514
    %1516 = vrot.lane.b32.xlu0 %v1445, 124
    %v1517 = vpop.permute.xlu0 %1516
    %1518 = vrot.lane.b32.xlu0 %v1446, 124
    %v1519 = vpop.permute.xlu0 %1518
    %1520 = vrot.lane.b32.xlu0 %v1447, 124
    %v1521 = vpop.permute.xlu0 %1520
    %vm1522 = vcmask 1014784
    %v1523 = vsel %vm1522, %v1515, %v1517
    %v1524 = vsel %vm1522, %v1519, %v1521
    %1529 = vst [vmem:[#allocation3 + $0x80] sm:$0xff] %v1523
    %1530 = vst.msk [vmem:[#allocation3 + $0x88] sm:$0xff] %vm1449, %v1517
    %1531 = vst [vmem:[#allocation3 + $0x90] sm:$0xff] %v1524
    %1532 = vst.msk [vmem:[#allocation3 + $0x98] sm:$0xff] %vm1449, %v1521
    %1533 = vrot.lane.b32.xlu0 %v1444, 123
    %v1534 = vpop.permute.xlu0 %1533
    %1535 = vrot.lane.b32.xlu0 %v1445, 123
    %v1536 = vpop.permute.xlu0 %1535
    %1537 = vrot.lane.b32.xlu0 %v1446, 123
    %v1538 = vpop.permute.xlu0 %1537
    %1539 = vrot.lane.b32.xlu0 %v1447, 123
    %v1540 = vpop.permute.xlu0 %1539
    %vm1541 = vcmask 1006592
    %v1542 = vsel %vm1541, %v1534, %v1536
    %v1543 = vsel %vm1541, %v1538, %v1540
    %1548 = vst [vmem:[#allocation3 + $0xa0] sm:$0xff] %v1542
    %1549 = vst.msk [vmem:[#allocation3 + $0xa8] sm:$0xff] %vm1449, %v1536
    %1550 = vst [vmem:[#allocation3 + $0xb0] sm:$0xff] %v1543
    %1551 = vst.msk [vmem:[#allocation3 + $0xb8] sm:$0xff] %vm1449, %v1540
    %1552 = vrot.lane.b32.xlu0 %v1444, 122
    %v1553 = vpop.permute.xlu0 %1552
    %1554 = vrot.lane.b32.xlu0 %v1445, 122
    %v1555 = vpop.permute.xlu0 %1554
    %1556 = vrot.lane.b32.xlu0 %v1446, 122
    %v1557 = vpop.permute.xlu0 %1556
    %1558 = vrot.lane.b32.xlu0 %v1447, 122
    %v1559 = vpop.permute.xlu0 %1558
    %vm1560 = vcmask 998400
    %v1561 = vsel %vm1560, %v1553, %v1555
    %v1562 = vsel %vm1560, %v1557, %v1559
    %1567 = vst [vmem:[#allocation3 + $0xc0] sm:$0xff] %v1561
    %1568 = vst.msk [vmem:[#allocation3 + $0xc8] sm:$0xff] %vm1449, %v1555
    %1569 = vst [vmem:[#allocation3 + $0xd0] sm:$0xff] %v1562
    %1570 = vst.msk [vmem:[#allocation3 + $0xd8] sm:$0xff] %vm1449, %v1559
    %1571 = vrot.lane.b32.xlu0 %v1444, 121
    %v1572 = vpop.permute.xlu0 %1571
    %1573 = vrot.lane.b32.xlu0 %v1445, 121
    %v1574 = vpop.permute.xlu0 %1573
    %1575 = vrot.lane.b32.xlu0 %v1446, 121
    %v1576 = vpop.permute.xlu0 %1575
    %1577 = vrot.lane.b32.xlu0 %v1447, 121
    %v1578 = vpop.permute.xlu0 %1577
    %vm1579 = vcmask 990208
    %v1580 = vsel %vm1579, %v1572, %v1574
    %v1581 = vsel %vm1579, %v1576, %v1578
    %1586 = vst [vmem:[#allocation3 + $0xe0] sm:$0xff] %v1580
    %1587 = vst.msk [vmem:[#allocation3 + $0xe8] sm:$0xff] %vm1449, %v1574
    %1588 = vst [vmem:[#allocation3 + $0xf0] sm:$0xff] %v1581
    %1589 = vst.msk [vmem:[#allocation3 + $0xf8] sm:$0xff] %vm1449, %v1578
    %1590 = vrot.lane.b32.xlu0 %v1444, 120
    %v1591 = vpop.permute.xlu0 %1590
    %1592 = vrot.lane.b32.xlu0 %v1445, 120
    %v1593 = vpop.permute.xlu0 %1592
    %1594 = vrot.lane.b32.xlu0 %v1446, 120
    %v1595 = vpop.permute.xlu0 %1594
    %1596 = vrot.lane.b32.xlu0 %v1447, 120
    %v1597 = vpop.permute.xlu0 %1596
    %v1598 = vsel %vm99, %v1591, %v1593
    %v1599 = vsel %vm99, %v1595, %v1597
    %1604 = vst [vmem:[#allocation3 + $0x100] sm:$0xff] %v1598
    %1605 = vst.msk [vmem:[#allocation3 + $0x108] sm:$0xff] %vm1449, %v1593
    %1606 = vst [vmem:[#allocation3 + $0x110] sm:$0xff] %v1599
    %1607 = vst.msk [vmem:[#allocation3 + $0x118] sm:$0xff] %vm1449, %v1597
    %1608 = vrot.lane.b32.xlu0 %v1444, 119
    %v1609 = vpop.permute.xlu0 %1608
    %1610 = vrot.lane.b32.xlu0 %v1445, 119
    %v1611 = vpop.permute.xlu0 %1610
    %1612 = vrot.lane.b32.xlu0 %v1446, 119
    %v1613 = vpop.permute.xlu0 %1612
    %1614 = vrot.lane.b32.xlu0 %v1447, 119
    %v1615 = vpop.permute.xlu0 %1614
    %vm1616 = vcmask 973824
    %v1617 = vsel %vm1616, %v1609, %v1611
    %v1618 = vsel %vm1616, %v1613, %v1615
    %1623 = vst [vmem:[#allocation3 + $0x120] sm:$0xff] %v1617
    %1624 = vst.msk [vmem:[#allocation3 + $0x128] sm:$0xff] %vm1449, %v1611
    %1625 = vst [vmem:[#allocation3 + $0x130] sm:$0xff] %v1618
    %1626 = vst.msk [vmem:[#allocation3 + $0x138] sm:$0xff] %vm1449, %v1615
    %1627 = vrot.lane.b32.xlu0 %v1444, 118
    %v1628 = vpop.permute.xlu0 %1627
    %1629 = vrot.lane.b32.xlu0 %v1445, 118
    %v1630 = vpop.permute.xlu0 %1629
    %1631 = vrot.lane.b32.xlu0 %v1446, 118
    %v1632 = vpop.permute.xlu0 %1631
    %1633 = vrot.lane.b32.xlu0 %v1447, 118
    %v1634 = vpop.permute.xlu0 %1633
    %vm1635 = vcmask 965632
    %v1636 = vsel %vm1635, %v1628, %v1630
    %v1637 = vsel %vm1635, %v1632, %v1634
    %1642 = vst [vmem:[#allocation3 + $0x140] sm:$0xff] %v1636
    %1643 = vst.msk [vmem:[#allocation3 + $0x148] sm:$0xff] %vm1449, %v1630
    %1644 = vst [vmem:[#allocation3 + $0x150] sm:$0xff] %v1637
    %1645 = vst.msk [vmem:[#allocation3 + $0x158] sm:$0xff] %vm1449, %v1634
    %1646 = vrot.lane.b32.xlu0 %v1444, 117
    %v1647 = vpop.permute.xlu0 %1646
    %1648 = vrot.lane.b32.xlu0 %v1445, 117
    %v1649 = vpop.permute.xlu0 %1648
    %1650 = vrot.lane.b32.xlu0 %v1446, 117
    %v1651 = vpop.permute.xlu0 %1650
    %1652 = vrot.lane.b32.xlu0 %v1447, 117
    %v1653 = vpop.permute.xlu0 %1652
    %vm1654 = vcmask 957440
    %v1655 = vsel %vm1654, %v1647, %v1649
    %v1656 = vsel %vm1654, %v1651, %v1653
    %1661 = vst [vmem:[#allocation3 + $0x160] sm:$0xff] %v1655
    %1662 = vst.msk [vmem:[#allocation3 + $0x168] sm:$0xff] %vm1449, %v1649
    %1663 = vst [vmem:[#allocation3 + $0x170] sm:$0xff] %v1656
    %1664 = vst.msk [vmem:[#allocation3 + $0x178] sm:$0xff] %vm1449, %v1653
    %1665 = vrot.lane.b32.xlu0 %v1444, 116
    %v1666 = vpop.permute.xlu0 %1665
    %1667 = vrot.lane.b32.xlu0 %v1445, 116
    %v1668 = vpop.permute.xlu0 %1667
    %1669 = vrot.lane.b32.xlu0 %v1446, 116
    %v1670 = vpop.permute.xlu0 %1669
    %1671 = vrot.lane.b32.xlu0 %v1447, 116
    %v1672 = vpop.permute.xlu0 %1671
    %vm1673 = vcmask 949248
    %v1674 = vsel %vm1673, %v1666, %v1668
    %v1675 = vsel %vm1673, %v1670, %v1672
    %1680 = vst [vmem:[#allocation3 + $0x180] sm:$0xff] %v1674
    %1681 = vst.msk [vmem:[#allocation3 + $0x188] sm:$0xff] %vm1449, %v1668
    %1682 = vst [vmem:[#allocation3 + $0x190] sm:$0xff] %v1675
    %1683 = vst.msk [vmem:[#allocation3 + $0x198] sm:$0xff] %vm1449, %v1672
    %1684 = vrot.lane.b32.xlu0 %v1444, 115
    %v1685 = vpop.permute.xlu0 %1684
    %1686 = vrot.lane.b32.xlu0 %v1445, 115
    %v1687 = vpop.permute.xlu0 %1686
    %1688 = vrot.lane.b32.xlu0 %v1446, 115
    %v1689 = vpop.permute.xlu0 %1688
    %1690 = vrot.lane.b32.xlu0 %v1447, 115
    %v1691 = vpop.permute.xlu0 %1690
    %vm1692 = vcmask 941056
    %v1693 = vsel %vm1692, %v1685, %v1687
    %v1694 = vsel %vm1692, %v1689, %v1691
    %1699 = vst [vmem:[#allocation3 + $0x1a0] sm:$0xff] %v1693
    %1700 = vst.msk [vmem:[#allocation3 + $0x1a8] sm:$0xff] %vm1449, %v1687
    %1701 = vst [vmem:[#allocation3 + $0x1b0] sm:$0xff] %v1694
    %1702 = vst.msk [vmem:[#allocation3 + $0x1b8] sm:$0xff] %vm1449, %v1691
    %1703 = vrot.lane.b32.xlu0 %v1444, 114
    %v1704 = vpop.permute.xlu0 %1703
    %1705 = vrot.lane.b32.xlu0 %v1445, 114
    %v1706 = vpop.permute.xlu0 %1705
    %1707 = vrot.lane.b32.xlu0 %v1446, 114
    %v1708 = vpop.permute.xlu0 %1707
    %1709 = vrot.lane.b32.xlu0 %v1447, 114
    %v1710 = vpop.permute.xlu0 %1709
    %vm1711 = vcmask 932864
    %v1712 = vsel %vm1711, %v1704, %v1706
    %v1713 = vsel %vm1711, %v1708, %v1710
    %1718 = vst [vmem:[#allocation3 + $0x1c0] sm:$0xff] %v1712
    %1719 = vst.msk [vmem:[#allocation3 + $0x1c8] sm:$0xff] %vm1449, %v1706
    %1720 = vst [vmem:[#allocation3 + $0x1d0] sm:$0xff] %v1713
    %1721 = vst.msk [vmem:[#allocation3 + $0x1d8] sm:$0xff] %vm1449, %v1710
    %v1722 = vld [vmem:[%s4] sm:$0xff]
    %v1723 = vld [vmem:[%s4 + $0x8] sm:$0xff]
    %v1724 = vld [vmem:[%s4 + $0x10] sm:$0xff]
    %v1725 = vld [vmem:[%s4 + $0x18] sm:$0xff]
    %v1726 = vld [vmem:[%s4 + $0x20] sm:$0xff]
    %v1727 = vld [vmem:[%s4 + $0x28] sm:$0xff]
    %v1728 = vld [vmem:[%s4 + $0x30] sm:$0xff]
    %v1729 = vld [vmem:[%s4 + $0x38] sm:$0xff]
    %v1730 = vld [vmem:[#allocation3] sm:$0xff]
    %v1731 = vld [vmem:[#allocation3 + $0x8] sm:$0xff]
    %v1732 = vld [vmem:[#allocation3 + $0x10] sm:$0xff]
    %v1733 = vld [vmem:[#allocation3 + $0x18] sm:$0xff]
    %v1734 = vld [vmem:[#allocation3 + $0x20] sm:$0xff]
    %v1735 = vld [vmem:[#allocation3 + $0x28] sm:$0xff]
    %v1736 = vld [vmem:[#allocation3 + $0x30] sm:$0xff]
    %v1737 = vld [vmem:[#allocation3 + $0x38] sm:$0xff]
    %v1738 = vld [vmem:[#allocation3 + $0x40] sm:$0xff]
    %v1739 = vld [vmem:[#allocation3 + $0x48] sm:$0xff]
    %v1740 = vld [vmem:[#allocation3 + $0x50] sm:$0xff]
    %v1741 = vld [vmem:[#allocation3 + $0x58] sm:$0xff]
    %v1742 = vld [vmem:[#allocation3 + $0x60] sm:$0xff]
    %v1743 = vld [vmem:[#allocation3 + $0x68] sm:$0xff]
    %v1744 = vld [vmem:[#allocation3 + $0x70] sm:$0xff]
    %v1745 = vld [vmem:[#allocation3 + $0x78] sm:$0xff]
    %v1746 = vld [vmem:[#allocation3 + $0x80] sm:$0xff]
    %v1747 = vld [vmem:[#allocation3 + $0x88] sm:$0xff]
    %v1748 = vld [vmem:[#allocation3 + $0x90] sm:$0xff]
    %v1749 = vld [vmem:[#allocation3 + $0x98] sm:$0xff]
    %v1750 = vld [vmem:[#allocation3 + $0xa0] sm:$0xff]
    %v1751 = vld [vmem:[#allocation3 + $0xa8] sm:$0xff]
    %v1752 = vld [vmem:[#allocation3 + $0xb0] sm:$0xff]
    %v1753 = vld [vmem:[#allocation3 + $0xb8] sm:$0xff]
    %v1754 = vld [vmem:[#allocation3 + $0xc0] sm:$0xff]
    %v1755 = vld [vmem:[#allocation3 + $0xc8] sm:$0xff]
    %v1756 = vld [vmem:[#allocation3 + $0xd0] sm:$0xff]
    %v1757 = vld [vmem:[#allocation3 + $0xd8] sm:$0xff]
    %v1758 = vld [vmem:[#allocation3 + $0xe0] sm:$0xff]
    %v1759 = vld [vmem:[#allocation3 + $0xe8] sm:$0xff]
    %v1760 = vld [vmem:[#allocation3 + $0xf0] sm:$0xff]
    %v1761 = vld [vmem:[#allocation3 + $0xf8] sm:$0xff]
    %v1762 = vld [vmem:[#allocation3 + $0x100] sm:$0xff]
    %v1763 = vld [vmem:[#allocation3 + $0x108] sm:$0xff]
    %v1764 = vld [vmem:[#allocation3 + $0x110] sm:$0xff]
    %v1765 = vld [vmem:[#allocation3 + $0x118] sm:$0xff]
    %v1766 = vld [vmem:[#allocation3 + $0x120] sm:$0xff]
    %v1767 = vld [vmem:[#allocation3 + $0x128] sm:$0xff]
    %v1768 = vld [vmem:[#allocation3 + $0x130] sm:$0xff]
    %v1769 = vld [vmem:[#allocation3 + $0x138] sm:$0xff]
    %v1770 = vld [vmem:[#allocation3 + $0x140] sm:$0xff]
    %v1771 = vld [vmem:[#allocation3 + $0x148] sm:$0xff]
    %v1772 = vld [vmem:[#allocation3 + $0x150] sm:$0xff]
    %v1773 = vld [vmem:[#allocation3 + $0x158] sm:$0xff]
    %v1774 = vld [vmem:[#allocation3 + $0x160] sm:$0xff]
    %v1775 = vld [vmem:[#allocation3 + $0x168] sm:$0xff]
    %v1776 = vld [vmem:[#allocation3 + $0x170] sm:$0xff]
    %v1777 = vld [vmem:[#allocation3 + $0x178] sm:$0xff]
    %v1778 = vld [vmem:[#allocation3 + $0x180] sm:$0xff]
    %v1779 = vld [vmem:[#allocation3 + $0x188] sm:$0xff]
    %v1780 = vld [vmem:[#allocation3 + $0x190] sm:$0xff]
    %v1781 = vld [vmem:[#allocation3 + $0x198] sm:$0xff]
    %v1782 = vld [vmem:[#allocation3 + $0x1a0] sm:$0xff]
    %v1783 = vld [vmem:[#allocation3 + $0x1a8] sm:$0xff]
    %v1784 = vld [vmem:[#allocation3 + $0x1b0] sm:$0xff]
    %v1785 = vld [vmem:[#allocation3 + $0x1b8] sm:$0xff]
    %v1786 = vld [vmem:[#allocation3 + $0x1c0] sm:$0xff]
    %v1787 = vld [vmem:[#allocation3 + $0x1c8] sm:$0xff]
    %v1788 = vld [vmem:[#allocation3 + $0x1d0] sm:$0xff]
    %v1789 = vld [vmem:[#allocation3 + $0x1d8] sm:$0xff]
    %v1790 = vld [vmem:[%s5] sm:$0xff]
    %v1791 = vld [vmem:[%s5 + $0x8] sm:$0xff]
    %v1792 = vld [vmem:[%s5 + $0x10] sm:$0xff]
    %v1793 = vld [vmem:[%s5 + $0x18] sm:$0xff]
    %1795 = vset.pattern.permute.xlu0 0
    %1796 = vperm.xlu0 %1795, %v1790
    %v1797 = vpop.permute.xlu0 %1796
    %1800 = vset.pattern.permute.xlu0 0
    %1801 = vperm.xlu0 %1800, %v1791
    %v1802 = vpop.permute.xlu0 %1801
    %1805 = vset.pattern.permute.xlu0 0
    %1806 = vperm.xlu0 %1805, %v1792
    %v1807 = vpop.permute.xlu0 %1806
    %1810 = vset.pattern.permute.xlu0 0
    %1811 = vperm.xlu0 %1810, %v1793
    %v1812 = vpop.permute.xlu0 %1811
    %v1822 = vunpack.c.l.b16 %v1722
    %v1823 = vunpack.c.h.b16 %v1722
    %v1824 = vunpack.c.l.b16 %v1723
    %v1825 = vunpack.c.h.b16 %v1723
    %v1826 = vunpack.c.l.b16 %v1724
    %v1827 = vunpack.c.h.b16 %v1724
    %v1828 = vunpack.c.l.b16 %v1725
    %v1829 = vunpack.c.h.b16 %v1725
    %v1830 = vunpack.c.l.b16 %v1726
    %v1831 = vunpack.c.h.b16 %v1726
    %v1832 = vunpack.c.l.b16 %v1727
    %v1833 = vunpack.c.h.b16 %v1727
    %v1834 = vunpack.c.l.b16 %v1728
    %v1835 = vunpack.c.h.b16 %v1728
    %v1836 = vunpack.c.l.b16 %v1729
    %v1837 = vunpack.c.h.b16 %v1729
    %v1838 = vpack.c.b16 %v1826, %v1822
    %v1839 = vpack.c.b16 %v1827, %v1823
    %v1840 = vpack.c.b16 %v1828, %v1824
    %v1841 = vpack.c.b16 %v1829, %v1825
    %v1842 = vpack.c.b16 %v1834, %v1830
    %v1843 = vpack.c.b16 %v1835, %v1831
    %v1844 = vpack.c.b16 %v1836, %v1832
    %v1845 = vpack.c.b16 %v1837, %v1833
    %vm1852 = vcmask 785408
    %v1854 = vsel %vm1852, %v1841, 0
    %v1857 = vsel %vm1852, %v1845, 0
    %1859 = vmatprep.subr.bf16.mxu0 %v1731
    %1860 = vmatpush1.bf16.msra.mxu0 %v1730
    %1861 = vmatprep.subr.bf16.mxu0 %v1733
    %1862 = vmatpush1.bf16.msra.mxu0 %v1732
    %1863 = vmatprep.subr.bf16.mxu0 %v1735
    %1864 = vmatpush1.bf16.msra.mxu0 %v1734
    %1865 = vmatprep.subr.bf16.mxu0 %v1737
    %1866 = vmatpush1.bf16.msra.mxu0 %v1736
    %1867 = vmatprep.subr.bf16.mxu0 %v1739
    %1868 = vmatpush1.bf16.msra.mxu0 %v1738
    %1869 = vmatprep.subr.bf16.mxu0 %v1741
    %1870 = vmatpush1.bf16.msra.mxu0 %v1740
    %1871 = vmatprep.subr.bf16.mxu0 %v1743
    %1872 = vmatpush1.bf16.msra.mxu0 %v1742
    %1873 = vmatprep.subr.bf16.mxu0 %v1745
    %1874 = vmatpush1.bf16.msra.mxu0 %v1744
    %1875 = vmatprep.subr.bf16.mxu0 %v1747
    %1876 = vmatpush1.bf16.msra.mxu0 %v1746
    %1877 = vmatprep.subr.bf16.mxu0 %v1749
    %1878 = vmatpush1.bf16.msra.mxu0 %v1748
    %1879 = vmatprep.subr.bf16.mxu0 %v1751
    %1880 = vmatpush1.bf16.msra.mxu0 %v1750
    %1881 = vmatprep.subr.bf16.mxu0 %v1753
    %1882 = vmatpush1.bf16.msra.mxu0 %v1752
    %1883 = vmatprep.subr.bf16.mxu0 %v1755
    %1884 = vmatpush1.bf16.msra.mxu0 %v1754
    %1885 = vmatprep.subr.bf16.mxu0 %v1757
    %1886 = vmatpush1.bf16.msra.mxu0 %v1756
    %1887 = vmatprep.subr.bf16.mxu0 %v1759
    %1888 = vmatpush1.bf16.msra.mxu0 %v1758
    %1889 = vmatprep.subr.bf16.mxu0 %v1761
    %1890 = vmatpush1.bf16.msra.mxu0 %v1760
    %1891 = vmatprep.mubr.bf16.mxu0 %v1839
    %1892 = vmatmul.mubr.bf16.gmra.mrb[0].mxu0 %v1838
    %v1893 = vpop.f32.mrb[0].mxu0
    %v1894 = vadd.f32 %v1797, %v1893
    %v1895 = vpop.f32.mrb[0].mxu0
    %v1896 = vadd.f32 %v1797, %v1895
    %v1897 = vpop.f32.mrb[0].mxu0
    %v1898 = vadd.f32 %v1802, %v1897
    %v1899 = vpop.f32.mrb[0].mxu0
    %v1900 = vadd.f32 %v1802, %v1899
    %1901 = vmatprep.mubr.bf16.mxu0 %v1843
    %1902 = vmatmul.mubr.bf16.gmra.mrb[0].mxu0 %v1842
    %v1903 = vpop.f32.mrb[0].mxu0
    %v1904 = vadd.f32 %v1807, %v1903
    %v1905 = vpop.f32.mrb[0].mxu0
    %v1906 = vadd.f32 %v1807, %v1905
    %v1907 = vpop.f32.mrb[0].mxu0
    %v1908 = vadd.f32 %v1812, %v1907
    %v1909 = vpop.f32.mrb[0].mxu0
    %v1910 = vadd.f32 %v1812, %v1909
    %1911 = vdwg.mxu0
    %1912 = vmatprep.subr.bf16.mxu0 %v1763
    %1913 = vmatpush1.bf16.msra.mxu0 %v1762
    %1914 = vmatprep.subr.bf16.mxu0 %v1765
    %1915 = vmatpush1.bf16.msra.mxu0 %v1764
    %1916 = vmatprep.subr.bf16.mxu0 %v1767
    %1917 = vmatpush1.bf16.msra.mxu0 %v1766
    %1918 = vmatprep.subr.bf16.mxu0 %v1769
    %1919 = vmatpush1.bf16.msra.mxu0 %v1768
    %1920 = vmatprep.subr.bf16.mxu0 %v1771
    %1921 = vmatpush1.bf16.msra.mxu0 %v1770
    %1922 = vmatprep.subr.bf16.mxu0 %v1773
    %1923 = vmatpush1.bf16.msra.mxu0 %v1772
    %1924 = vmatprep.subr.bf16.mxu0 %v1775
    %1925 = vmatpush1.bf16.msra.mxu0 %v1774
    %1926 = vmatprep.subr.bf16.mxu0 %v1777
    %1927 = vmatpush1.bf16.msra.mxu0 %v1776
    %1928 = vmatprep.subr.bf16.mxu0 %v1779
    %1929 = vmatpush1.bf16.msra.mxu0 %v1778
    %1930 = vmatprep.subr.bf16.mxu0 %v1781
    %1931 = vmatpush1.bf16.msra.mxu0 %v1780
    %1932 = vmatprep.subr.bf16.mxu0 %v1783
    %1933 = vmatpush1.bf16.msra.mxu0 %v1782
    %1934 = vmatprep.subr.bf16.mxu0 %v1785
    %1935 = vmatpush1.bf16.msra.mxu0 %v1784
    %1936 = vmatprep.subr.bf16.mxu0 %v1787
    %1937 = vmatpush1.bf16.msra.mxu0 %v1786
    %1938 = vmatprep.subr.bf16.mxu0 %v1789
    %1939 = vmatpush1.bf16.msra.mxu0 %v1788
    %1940 = vmatprep.subr.bf16.mxu0 0
    %1941 = vmatpush1.bf16.msra.mxu0 0
    %1942 = vmatprep.subr.bf16.mxu0 0
    %1943 = vmatpush1.bf16.msra.mxu0 0
    %1944 = vmatprep.mubr.bf16.mxu0 %v1854
    %1945 = vmatmul.mubr.bf16.gmra.mrb[0].mxu0 %v1840
    %v1946 = vpop.f32.mrb[0].mxu0
    %v1947 = vadd.f32 %v1894, %v1946
    %v1948 = vpop.f32.mrb[0].mxu0
    %v1949 = vadd.f32 %v1896, %v1948
    %v1950 = vpop.f32.mrb[0].mxu0
    %v1951 = vadd.f32 %v1898, %v1950
    %v1952 = vpop.f32.mrb[0].mxu0
    %v1953 = vadd.f32 %v1900, %v1952
    %1954 = vmatprep.mubr.bf16.mxu0 %v1857
    %1955 = vmatmul.mubr.bf16.gmra.mrb[0].mxu0 %v1844
    %v1956 = vpop.f32.mrb[0].mxu0
    %v1957 = vadd.f32 %v1904, %v1956
    %v1958 = vpop.f32.mrb[0].mxu0
    %v1959 = vadd.f32 %v1906, %v1958
    %v1960 = vpop.f32.mrb[0].mxu0
    %v1961 = vadd.f32 %v1908, %v1960
    %v1962 = vpop.f32.mrb[0].mxu0
    %v1963 = vadd.f32 %v1910, %v1962
    %1964 = vdwg.mxu0
    %vm1965 = vcmp.gt.f32.partialorder %v1947, 0.0
    %vm1966 = vcmp.gt.f32.partialorder %v1949, 0.0
    %vm1967 = vcmp.gt.f32.partialorder %v1951, 0.0
    %vm1968 = vcmp.gt.f32.partialorder %v1953, 0.0
    %vm1969 = vcmp.gt.f32.partialorder %v1957, 0.0
    %vm1970 = vcmp.gt.f32.partialorder %v1959, 0.0
    %vm1971 = vcmp.gt.f32.partialorder %v1961, 0.0
    %vm1972 = vcmp.gt.f32.partialorder %v1963, 0.0
    %v1973 = vmin.f32 %v1947, 0.0
    %v1974 = vmin.f32 %v1949, 0.0
    %v1975 = vmin.f32 %v1951, 0.0
    %v1976 = vmin.f32 %v1953, 0.0
    %v1977 = vmin.f32 %v1957, 0.0
    %v1978 = vmin.f32 %v1959, 0.0
    %v1979 = vmin.f32 %v1961, 0.0
    %v1980 = vmin.f32 %v1963, 0.0
    %v1981 = vmul.f32 %v1973, 1.442695
    %v1982 = vpow.pop %v1981
    %v1983 = vmul.f32 %v1974, 1.442695
    %v1984 = vpow.pop %v1983
    %v1985 = vmul.f32 %v1975, 1.442695
    %v1986 = vpow.pop %v1985
    %v1987 = vmul.f32 %v1976, 1.442695
    %v1988 = vpow.pop %v1987
    %v1989 = vmul.f32 %v1977, 1.442695
    %v1990 = vpow.pop %v1989
    %v1991 = vmul.f32 %v1978, 1.442695
    %v1992 = vpow.pop %v1991
    %v1993 = vmul.f32 %v1979, 1.442695
    %v1994 = vpow.pop %v1993
    %v1995 = vmul.f32 %v1980, 1.442695
    %v1996 = vpow.pop %v1995
    %v1997 = vsub.f32 %v1982, 1.0
    %v1998 = vsub.f32 %v1984, 1.0
    %v1999 = vsub.f32 %v1986, 1.0
    %v2000 = vsub.f32 %v1988, 1.0
    %v2001 = vsub.f32 %v1990, 1.0
    %v2002 = vsub.f32 %v1992, 1.0
    %v2003 = vsub.f32 %v1994, 1.0
    %v2004 = vsub.f32 %v1996, 1.0
    %v2005 = vmul.f32 %v1997, 0.06
    %v2006 = vmul.f32 %v1998, 0.06
    %v2007 = vmul.f32 %v1999, 0.06
    %v2008 = vmul.f32 %v2000, 0.06
    %v2009 = vmul.f32 %v2001, 0.06
    %v2010 = vmul.f32 %v2002, 0.06
    %v2011 = vmul.f32 %v2003, 0.06
    %v2012 = vmul.f32 %v2004, 0.06
    %v2013 = vsel %vm1965, %v1947, %v2005
    %v2014 = vsel %vm1966, %v1949, %v2006
    %v2015 = vsel %vm1967, %v1951, %v2007
    %v2016 = vsel %vm1968, %v1953, %v2008
    %v2017 = vsel %vm1969, %v1957, %v2009
    %v2018 = vsel %vm1970, %v1959, %v2010
    %v2019 = vsel %vm1971, %v1961, %v2011
    %v2020 = vsel %vm1972, %v1963, %v2012
    %v2021 = vpack.c.bf16 %v2015, %v2013
    %v2022 = vpack.c.bf16 %v2016, %v2014
    %v2023 = vpack.c.bf16 %v2019, %v2017
    %v2024 = vpack.c.bf16 %v2020, %v2018
    %v2025 = vld [vmem:[%s6] sm:$0xf]
    %v2026 = vld [vmem:[%s6 + $0x4] sm:$0xf]
    %v2027 = vld [vmem:[%s6 + $0x8] sm:$0xf]
    %v2028 = vld [vmem:[%s6 + $0xc] sm:$0xf]
    %v2029 = vld [vmem:[%s6 + $0x10] sm:$0xf]
    %v2030 = vld [vmem:[%s6 + $0x14] sm:$0xf]
    %v2031 = vld [vmem:[%s6 + $0x18] sm:$0xf]
    %v2032 = vld [vmem:[%s6 + $0x1c] sm:$0xf]
    %v2033 = vld [vmem:[%s6 + $0x20] sm:$0xf]
    %v2034 = vld [vmem:[%s6 + $0x24] sm:$0xf]
    %v2035 = vld [vmem:[%s6 + $0x28] sm:$0xf]
    %v2036 = vld [vmem:[%s6 + $0x2c] sm:$0xf]
    %v2037 = vld [vmem:[%s6 + $0x30] sm:$0xf]
    %v2038 = vld [vmem:[%s6 + $0x34] sm:$0xf]
    %v2039 = vld [vmem:[%s6 + $0x38] sm:$0xf]
    %v2040 = vld [vmem:[%s6 + $0x3c] sm:$0xf]
    %v2041 = vld [vmem:[%s6 + $0x40] sm:$0xf]
    %v2042 = vld [vmem:[%s6 + $0x44] sm:$0xf]
    %v2043 = vld [vmem:[%s6 + $0x48] sm:$0xf]
    %v2044 = vld [vmem:[%s6 + $0x4c] sm:$0xf]
    %v2045 = vld [vmem:[%s6 + $0x50] sm:$0xf]
    %v2046 = vld [vmem:[%s6 + $0x54] sm:$0xf]
    %v2047 = vld [vmem:[%s6 + $0x58] sm:$0xf]
    %v2048 = vld [vmem:[%s6 + $0x5c] sm:$0x3]
    %v2073 = vunpack.c.l.b16 %v2025
    %v2074 = vunpack.c.l.b16 %v2026
    %v2075 = vunpack.c.l.b16 %v2027
    %v2076 = vunpack.c.l.b16 %v2028
    %v2077 = vunpack.c.l.b16 %v2029
    %v2078 = vunpack.c.l.b16 %v2030
    %v2079 = vunpack.c.l.b16 %v2031
    %v2080 = vunpack.c.l.b16 %v2032
    %v2081 = vunpack.c.l.b16 %v2033
    %v2082 = vunpack.c.l.b16 %v2034
    %v2083 = vunpack.c.l.b16 %v2035
    %v2084 = vunpack.c.l.b16 %v2036
    %v2085 = vunpack.c.l.b16 %v2037
    %v2086 = vunpack.c.l.b16 %v2038
    %v2087 = vunpack.c.l.b16 %v2039
    %v2088 = vunpack.c.l.b16 %v2040
    %v2089 = vunpack.c.l.b16 %v2041
    %v2090 = vunpack.c.l.b16 %v2042
    %v2091 = vunpack.c.l.b16 %v2043
    %v2092 = vunpack.c.l.b16 %v2044
    %v2093 = vunpack.c.l.b16 %v2045
    %v2094 = vunpack.c.l.b16 %v2046
    %v2095 = vunpack.c.l.b16 %v2047
    %v2096 = vunpack.c.l.b16 %v2048
    %v2097 = vpack.c.b16 %v2074, %v2073
    %v2098 = vpack.c.b16 %v2076, %v2075
    %v2099 = vpack.c.b16 %v2078, %v2077
    %v2100 = vpack.c.b16 %v2080, %v2079
    %v2101 = vpack.c.b16 %v2082, %v2081
    %v2102 = vpack.c.b16 %v2084, %v2083
    %v2103 = vpack.c.b16 %v2086, %v2085
    %v2104 = vpack.c.b16 %v2088, %v2087
    %v2105 = vpack.c.b16 %v2090, %v2089
    %v2106 = vpack.c.b16 %v2092, %v2091
    %v2107 = vpack.c.b16 %v2094, %v2093
    %v2108 = vpack.c.b16 %v2096, %v2095
    %v2121 = vsel %vm1449, %v2022, 0
    %v2124 = vsel %vm1449, %v2024, 0
    %vm2126 = vcmask 1044480
    %vm2127 = vcmask 1045504
    %v2128 = vsel %vm2126, 4294967295, 65535
    %v2129 = vsel %vm2127, %v2128, 0
    %v2131 = vand.u32 %v2108, %v2129
    %2133 = vmatprep.subr.bf16.mxu0 0
    %2134 = vmatpush1.bf16.msra.mxu0 %v2097
    %2135 = vmatprep.subr.bf16.mxu0 0
    %2136 = vmatpush1.bf16.msra.mxu0 %v2098
    %2137 = vmatprep.subr.bf16.mxu0 0
    %2138 = vmatpush1.bf16.msra.mxu0 %v2099
    %2139 = vmatprep.subr.bf16.mxu0 0
    %2140 = vmatpush1.bf16.msra.mxu0 %v2100
    %2141 = vmatprep.subr.bf16.mxu0 0
    %2142 = vmatpush1.bf16.msra.mxu0 %v2101
    %2143 = vmatprep.subr.bf16.mxu0 0
    %2144 = vmatpush1.bf16.msra.mxu0 %v2102
    %2145 = vmatprep.subr.bf16.mxu0 0
    %2146 = vmatpush1.bf16.msra.mxu0 %v2103
    %2147 = vmatprep.subr.bf16.mxu0 0
    %2148 = vmatpush1.bf16.msra.mxu0 %v2104
    %2149 = vmatprep.subr.bf16.mxu0 0
    %2150 = vmatpush1.bf16.msra.mxu0 %v2105
    %2151 = vmatprep.subr.bf16.mxu0 0
    %2152 = vmatpush1.bf16.msra.mxu0 %v2106
    %2153 = vmatprep.subr.bf16.mxu0 0
    %2154 = vmatpush1.bf16.msra.mxu0 %v2107
    %2155 = vmatprep.subr.bf16.mxu0 0
    %2156 = vmatpush1.bf16.msra.mxu0 %v2131
    %2157 = vmatprep.subr.bf16.mxu0 0
    %2158 = vmatpush1.bf16.msra.mxu0 0
    %2159 = vmatprep.subr.bf16.mxu0 0
    %2160 = vmatpush1.bf16.msra.mxu0 0
    %2161 = vmatprep.subr.bf16.mxu0 0
    %2162 = vmatpush1.bf16.msra.mxu0 0
    %2163 = vmatprep.subr.bf16.mxu0 0
    %2164 = vmatpush1.bf16.msra.mxu0 0
    %2165 = vmatprep.mubr.bf16.mxu0 %v2121
    %2166 = vmatmul.mubr.bf16.gmra.mrb[0].mxu0 %v2021
    %v2167 = vpop.f32.mrb[0].mxu0
    %v2168 = vadd.f32 0.0, %v2167
    %v2169 = vpop.f32.mrb[0].mxu0
    %v2170 = vpop.f32.mrb[0].mxu0
    %v2171 = vadd.f32 0.0, %v2170
    %v2172 = vpop.f32.mrb[0].mxu0
    %2173 = vmatprep.mubr.bf16.mxu0 %v2124
    %2174 = vmatmul.mubr.bf16.gmra.mrb[0].mxu0 %v2023
    %v2175 = vpop.f32.mrb[0].mxu0
    %v2176 = vadd.f32 0.0, %v2175
    %v2177 = vpop.f32.mrb[0].mxu0
    %v2178 = vpop.f32.mrb[0].mxu0
    %v2179 = vadd.f32 0.0, %v2178
    %v2180 = vpop.f32.mrb[0].mxu0
    %2181 = vdwg.mxu0
    %s2182 = smul.u32 %s34, 32
    %s2183 = scalar_lea.vmem [#allocation4], %s2182
    %vm2184 = vcmask 187392
    %2185 = vst.msk [vmem:[%s2183] sm:$0xff] %vm2184, %v2168
    %2186 = vst.msk [vmem:[%s2183 + $0x8] sm:$0xff] %vm2184, %v2171
    %2187 = vst.msk [vmem:[%s2183 + $0x10] sm:$0xff] %vm2184, %v2176
    %2188 = vst.msk [vmem:[%s2183 + $0x18] sm:$0xff] %vm2184, %v2179
  $region42: #{tpu_custom_call.1} parent=0 // loop_footer
    %s38 = sadd.s32 1, %s34
  $region43: #{tpu_custom_call.1} parent=0 // loop_footer_branch
    %33 = sbr.rel target = $region39
  $region44: #{tpu_custom_call.1} parent=0 // loop_exit
    _
  %v2189 = vld [vmem:[#allocation4] sm:$0xff]
  %v2190 = vld [vmem:[#allocation4 + $0x8] sm:$0xff]
  %v2191 = vld [vmem:[#allocation4 + $0x10] sm:$0xff]
  %v2192 = vld [vmem:[#allocation4 + $0x18] sm:$0xff]
  %v2193 = vld [vmem:[#allocation4 + $0x20] sm:$0xff]
  %v2194 = vld [vmem:[#allocation4 + $0x28] sm:$0xff]
  %v2195 = vld [vmem:[#allocation4 + $0x30] sm:$0xff]
  %v2196 = vld [vmem:[#allocation4 + $0x38] sm:$0xff]
  %v2197 = vld [vmem:[#allocation4 + $0x40] sm:$0xff]
  %v2198 = vld [vmem:[#allocation4 + $0x48] sm:$0xff]
  %v2199 = vld [vmem:[#allocation4 + $0x50] sm:$0xff]
  %v2200 = vld [vmem:[#allocation4 + $0x58] sm:$0xff]
  %v2201 = vld [vmem:[#allocation4 + $0x60] sm:$0xff]
  %v2202 = vld [vmem:[#allocation4 + $0x68] sm:$0xff]
  %v2203 = vld [vmem:[#allocation4 + $0x70] sm:$0xff]
  %v2204 = vld [vmem:[#allocation4 + $0x78] sm:$0xff]
  %v2205 = vld [vmem:[#allocation4 + $0x80] sm:$0xff]
  %v2206 = vld [vmem:[#allocation4 + $0x88] sm:$0xff]
  %v2207 = vld [vmem:[#allocation4 + $0x90] sm:$0xff]
  %v2208 = vld [vmem:[#allocation4 + $0x98] sm:$0xff]
  %v2209 = vld [vmem:[#allocation4 + $0xa0] sm:$0xff]
  %v2210 = vld [vmem:[#allocation4 + $0xa8] sm:$0xff]
  %v2211 = vld [vmem:[#allocation4 + $0xb0] sm:$0xff]
  %v2212 = vld [vmem:[#allocation4 + $0xb8] sm:$0xff]
  %v2213 = vld [vmem:[#allocation4 + $0xc0] sm:$0xff]
  %v2214 = vld [vmem:[#allocation4 + $0xc8] sm:$0xff]
  %v2215 = vld [vmem:[#allocation4 + $0xd0] sm:$0xff]
  %v2216 = vld [vmem:[#allocation4 + $0xd8] sm:$0xff]
  %v2217 = vld [vmem:[#allocation4 + $0xe0] sm:$0xff]
  %v2218 = vld [vmem:[#allocation4 + $0xe8] sm:$0xff]
  %v2219 = vld [vmem:[#allocation4 + $0xf0] sm:$0xff]
  %v2220 = vld [vmem:[#allocation4 + $0xf8] sm:$0xff]
  %v2221 = vld [vmem:[%s7] sm:$0xff]
  %v2222 = vld [vmem:[%s7 + $0x8] sm:$0xff]
  %v2223 = vld [vmem:[%s7 + $0x10] sm:$0xff]
  %v2224 = vld [vmem:[%s7 + $0x18] sm:$0xff]
  %v2225 = vmul.f32 %v2189, %v2221
  %v2226 = vmul.f32 %v2190, %v2222
  %v2227 = vmul.f32 %v2191, %v2223
  %v2228 = vmul.f32 %v2192, %v2224
  %v2229 = vmul.f32 %v2193, %v2221
  %v2230 = vmul.f32 %v2194, %v2222
  %v2231 = vmul.f32 %v2195, %v2223
  %v2232 = vmul.f32 %v2196, %v2224
  %v2233 = vmul.f32 %v2197, %v2221
  %v2234 = vmul.f32 %v2198, %v2222
  %v2235 = vmul.f32 %v2199, %v2223
  %v2236 = vmul.f32 %v2200, %v2224
  %v2237 = vmul.f32 %v2201, %v2221
  %v2238 = vmul.f32 %v2202, %v2222
  %v2239 = vmul.f32 %v2203, %v2223
  %v2240 = vmul.f32 %v2204, %v2224
  %v2241 = vmul.f32 %v2205, %v2221
  %v2242 = vmul.f32 %v2206, %v2222
  %v2243 = vmul.f32 %v2207, %v2223
  %v2244 = vmul.f32 %v2208, %v2224
  %v2245 = vmul.f32 %v2209, %v2221
  %v2246 = vmul.f32 %v2210, %v2222
  %v2247 = vmul.f32 %v2211, %v2223
  %v2248 = vmul.f32 %v2212, %v2224
  %v2249 = vmul.f32 %v2213, %v2221
  %v2250 = vmul.f32 %v2214, %v2222
  %v2251 = vmul.f32 %v2215, %v2223
  %v2252 = vmul.f32 %v2216, %v2224
  %v2253 = vmul.f32 %v2217, %v2221
  %v2254 = vmul.f32 %v2218, %v2222
  %v2255 = vmul.f32 %v2219, %v2223
  %v2256 = vmul.f32 %v2220, %v2224
  %vm2257 = vcmask 187392
  %v2258 = vsel %vm2257, %v2225, 0.0
  %2259 = vadd.xlane.f32.xlu0 %v2258
  %v2260 = vpop.xlane.xlu0 %2259
  %v2261 = vsel %vm2257, %v2226, 0.0
  %2262 = vadd.xlane.f32.xlu0 %v2261
  %v2263 = vpop.xlane.xlu0 %2262
  %v2264 = vsel %vm2257, %v2227, 0.0
  %2265 = vadd.xlane.f32.xlu0 %v2264
  %v2266 = vpop.xlane.xlu0 %2265
  %v2267 = vsel %vm2257, %v2228, 0.0
  %2268 = vadd.xlane.f32.xlu0 %v2267
  %v2269 = vpop.xlane.xlu0 %2268
  %v2270 = vsel %vm2257, %v2229, 0.0
  %2271 = vadd.xlane.f32.xlu0 %v2270
  %v2272 = vpop.xlane.xlu0 %2271
  %v2273 = vsel %vm2257, %v2230, 0.0
  %2274 = vadd.xlane.f32.xlu0 %v2273
  %v2275 = vpop.xlane.xlu0 %2274
  %v2276 = vsel %vm2257, %v2231, 0.0
  %2277 = vadd.xlane.f32.xlu0 %v2276
  %v2278 = vpop.xlane.xlu0 %2277
  %v2279 = vsel %vm2257, %v2232, 0.0
  %2280 = vadd.xlane.f32.xlu0 %v2279
  %v2281 = vpop.xlane.xlu0 %2280
  %v2282 = vsel %vm2257, %v2233, 0.0
  %2283 = vadd.xlane.f32.xlu0 %v2282
  %v2284 = vpop.xlane.xlu0 %2283
  %v2285 = vsel %vm2257, %v2234, 0.0
  %2286 = vadd.xlane.f32.xlu0 %v2285
  %v2287 = vpop.xlane.xlu0 %2286
  %v2288 = vsel %vm2257, %v2235, 0.0
  %2289 = vadd.xlane.f32.xlu0 %v2288
  %v2290 = vpop.xlane.xlu0 %2289
  %v2291 = vsel %vm2257, %v2236, 0.0
  %2292 = vadd.xlane.f32.xlu0 %v2291
  %v2293 = vpop.xlane.xlu0 %2292
  %v2294 = vsel %vm2257, %v2237, 0.0
  %2295 = vadd.xlane.f32.xlu0 %v2294
  %v2296 = vpop.xlane.xlu0 %2295
  %v2297 = vsel %vm2257, %v2238, 0.0
  %2298 = vadd.xlane.f32.xlu0 %v2297
  %v2299 = vpop.xlane.xlu0 %2298
  %v2300 = vsel %vm2257, %v2239, 0.0
  %2301 = vadd.xlane.f32.xlu0 %v2300
  %v2302 = vpop.xlane.xlu0 %2301
  %v2303 = vsel %vm2257, %v2240, 0.0
  %2304 = vadd.xlane.f32.xlu0 %v2303
  %v2305 = vpop.xlane.xlu0 %2304
  %v2306 = vsel %vm2257, %v2241, 0.0
  %2307 = vadd.xlane.f32.xlu0 %v2306
  %v2308 = vpop.xlane.xlu0 %2307
  %v2309 = vsel %vm2257, %v2242, 0.0
  %2310 = vadd.xlane.f32.xlu0 %v2309
  %v2311 = vpop.xlane.xlu0 %2310
  %v2312 = vsel %vm2257, %v2243, 0.0
  %2313 = vadd.xlane.f32.xlu0 %v2312
  %v2314 = vpop.xlane.xlu0 %2313
  %v2315 = vsel %vm2257, %v2244, 0.0
  %2316 = vadd.xlane.f32.xlu0 %v2315
  %v2317 = vpop.xlane.xlu0 %2316
  %v2318 = vsel %vm2257, %v2245, 0.0
  %2319 = vadd.xlane.f32.xlu0 %v2318
  %v2320 = vpop.xlane.xlu0 %2319
  %v2321 = vsel %vm2257, %v2246, 0.0
  %2322 = vadd.xlane.f32.xlu0 %v2321
  %v2323 = vpop.xlane.xlu0 %2322
  %v2324 = vsel %vm2257, %v2247, 0.0
  %2325 = vadd.xlane.f32.xlu0 %v2324
  %v2326 = vpop.xlane.xlu0 %2325
  %v2327 = vsel %vm2257, %v2248, 0.0
  %2328 = vadd.xlane.f32.xlu0 %v2327
  %v2329 = vpop.xlane.xlu0 %2328
  %v2330 = vsel %vm2257, %v2249, 0.0
  %2331 = vadd.xlane.f32.xlu0 %v2330
  %v2332 = vpop.xlane.xlu0 %2331
  %v2333 = vsel %vm2257, %v2250, 0.0
  %2334 = vadd.xlane.f32.xlu0 %v2333
  %v2335 = vpop.xlane.xlu0 %2334
  %v2336 = vsel %vm2257, %v2251, 0.0
  %2337 = vadd.xlane.f32.xlu0 %v2336
  %v2338 = vpop.xlane.xlu0 %2337
  %v2339 = vsel %vm2257, %v2252, 0.0
  %2340 = vadd.xlane.f32.xlu0 %v2339
  %v2341 = vpop.xlane.xlu0 %2340
  %v2342 = vsel %vm2257, %v2253, 0.0
  %2343 = vadd.xlane.f32.xlu0 %v2342
  %v2344 = vpop.xlane.xlu0 %2343
  %v2345 = vsel %vm2257, %v2254, 0.0
  %2346 = vadd.xlane.f32.xlu0 %v2345
  %v2347 = vpop.xlane.xlu0 %2346
  %v2348 = vsel %vm2257, %v2255, 0.0
  %2349 = vadd.xlane.f32.xlu0 %v2348
  %v2350 = vpop.xlane.xlu0 %2349
  %v2351 = vsel %vm2257, %v2256, 0.0
  %2352 = vadd.xlane.f32.xlu0 %v2351
  %v2353 = vpop.xlane.xlu0 %2352
  %v2386 = vlaneseq
  %v2387 = vand.u32 %v2386, 127
  %v2388 = vlaneseq
  %v2389 = vshrl.u32 %v2388, 7
  %v2390 = vsub.s32 %v2387, %v2389
  %v2391 = vrot.slane %v2260, %v2390
  %v2392 = vadd.s32 %v2387, 4294967288
  %v2393 = vlaneseq
  %v2394 = vshrl.u32 %v2393, 7
  %v2395 = vsub.s32 %v2392, %v2394
  %v2396 = vrot.slane %v2263, %v2395
  %vm2397 = vcmask 130112
  %v2398 = vsel %vm2397, %v2396, %v2391
  %v2399 = vadd.s32 %v2387, 4294967280
  %v2400 = vlaneseq
  %v2401 = vshrl.u32 %v2400, 7
  %v2402 = vsub.s32 %v2399, %v2401
  %v2403 = vrot.slane %v2266, %v2402
  %vm2404 = vcmask 195712
  %v2405 = vsel %vm2404, %v2403, %v2398
  %v2406 = vadd.s32 %v2387, 4294967272
  %v2407 = vlaneseq
  %v2408 = vshrl.u32 %v2407, 7
  %v2409 = vsub.s32 %v2406, %v2408
  %v2410 = vrot.slane %v2269, %v2409
  %vm2411 = vcmask 261312
  %v2412 = vsel %vm2411, %v2410, %v2405
  %v2413 = vlaneseq
  %v2414 = vshrl.u32 %v2413, 7
  %v2415 = vsub.s32 %v2387, %v2414
  %v2416 = vrot.slane %v2272, %v2415
  %v2417 = vlaneseq
  %v2418 = vshrl.u32 %v2417, 7
  %v2419 = vsub.s32 %v2392, %v2418
  %v2420 = vrot.slane %v2275, %v2419
  %v2421 = vsel %vm2397, %v2420, %v2416
  %v2422 = vlaneseq
  %v2423 = vshrl.u32 %v2422, 7
  %v2424 = vsub.s32 %v2399, %v2423
  %v2425 = vrot.slane %v2278, %v2424
  %v2426 = vsel %vm2404, %v2425, %v2421
  %v2427 = vlaneseq
  %v2428 = vshrl.u32 %v2427, 7
  %v2429 = vsub.s32 %v2406, %v2428
  %v2430 = vrot.slane %v2281, %v2429
  %v2431 = vsel %vm2411, %v2430, %v2426
  %v2432 = vlaneseq
  %v2433 = vshrl.u32 %v2432, 7
  %v2434 = vsub.s32 %v2387, %v2433
  %v2435 = vrot.slane %v2284, %v2434
  %v2436 = vlaneseq
  %v2437 = vshrl.u32 %v2436, 7
  %v2438 = vsub.s32 %v2392, %v2437
  %v2439 = vrot.slane %v2287, %v2438
  %v2440 = vsel %vm2397, %v2439, %v2435
  %v2441 = vlaneseq
  %v2442 = vshrl.u32 %v2441, 7
  %v2443 = vsub.s32 %v2399, %v2442
  %v2444 = vrot.slane %v2290, %v2443
  %v2445 = vsel %vm2404, %v2444, %v2440
  %v2446 = vlaneseq
  %v2447 = vshrl.u32 %v2446, 7
  %v2448 = vsub.s32 %v2406, %v2447
  %v2449 = vrot.slane %v2293, %v2448
  %v2450 = vsel %vm2411, %v2449, %v2445
  %v2451 = vlaneseq
  %v2452 = vshrl.u32 %v2451, 7
  %v2453 = vsub.s32 %v2387, %v2452
  %v2454 = vrot.slane %v2296, %v2453
  %v2455 = vlaneseq
  %v2456 = vshrl.u32 %v2455, 7
  %v2457 = vsub.s32 %v2392, %v2456
  %v2458 = vrot.slane %v2299, %v2457
  %v2459 = vsel %vm2397, %v2458, %v2454
  %v2460 = vlaneseq
  %v2461 = vshrl.u32 %v2460, 7
  %v2462 = vsub.s32 %v2399, %v2461
  %v2463 = vrot.slane %v2302, %v2462
  %v2464 = vsel %vm2404, %v2463, %v2459
  %v2465 = vlaneseq
  %v2466 = vshrl.u32 %v2465, 7
  %v2467 = vsub.s32 %v2406, %v2466
  %v2468 = vrot.slane %v2305, %v2467
  %v2469 = vsel %vm2411, %v2468, %v2464
  %v2470 = vlaneseq
  %v2471 = vshrl.u32 %v2470, 7
  %v2472 = vsub.s32 %v2387, %v2471
  %v2473 = vrot.slane %v2308, %v2472
  %v2474 = vlaneseq
  %v2475 = vshrl.u32 %v2474, 7
  %v2476 = vsub.s32 %v2392, %v2475
  %v2477 = vrot.slane %v2311, %v2476
  %v2478 = vsel %vm2397, %v2477, %v2473
  %v2479 = vlaneseq
  %v2480 = vshrl.u32 %v2479, 7
  %v2481 = vsub.s32 %v2399, %v2480
  %v2482 = vrot.slane %v2314, %v2481
  %v2483 = vsel %vm2404, %v2482, %v2478
  %v2484 = vlaneseq
  %v2485 = vshrl.u32 %v2484, 7
  %v2486 = vsub.s32 %v2406, %v2485
  %v2487 = vrot.slane %v2317, %v2486
  %v2488 = vsel %vm2411, %v2487, %v2483
  %v2489 = vlaneseq
  %v2490 = vshrl.u32 %v2489, 7
  %v2491 = vsub.s32 %v2387, %v2490
  %v2492 = vrot.slane %v2320, %v2491
  %v2493 = vlaneseq
  %v2494 = vshrl.u32 %v2493, 7
  %v2495 = vsub.s32 %v2392, %v2494
  %v2496 = vrot.slane %v2323, %v2495
  %v2497 = vsel %vm2397, %v2496, %v2492
  %v2498 = vlaneseq
  %v2499 = vshrl.u32 %v2498, 7
  %v2500 = vsub.s32 %v2399, %v2499
  %v2501 = vrot.slane %v2326, %v2500
  %v2502 = vsel %vm2404, %v2501, %v2497
  %v2503 = vlaneseq
  %v2504 = vshrl.u32 %v2503, 7
  %v2505 = vsub.s32 %v2406, %v2504
  %v2506 = vrot.slane %v2329, %v2505
  %v2507 = vsel %vm2411, %v2506, %v2502
  %v2508 = vlaneseq
  %v2509 = vshrl.u32 %v2508, 7
  %v2510 = vsub.s32 %v2387, %v2509
  %v2511 = vrot.slane %v2332, %v2510
  %v2512 = vlaneseq
  %v2513 = vshrl.u32 %v2512, 7
  %v2514 = vsub.s32 %v2392, %v2513
  %v2515 = vrot.slane %v2335, %v2514
  %v2516 = vsel %vm2397, %v2515, %v2511
  %v2517 = vlaneseq
  %v2518 = vshrl.u32 %v2517, 7
  %v2519 = vsub.s32 %v2399, %v2518
  %v2520 = vrot.slane %v2338, %v2519
  %v2521 = vsel %vm2404, %v2520, %v2516
  %v2522 = vlaneseq
  %v2523 = vshrl.u32 %v2522, 7
  %v2524 = vsub.s32 %v2406, %v2523
  %v2525 = vrot.slane %v2341, %v2524
  %v2526 = vsel %vm2411, %v2525, %v2521
  %v2527 = vlaneseq
  %v2528 = vshrl.u32 %v2527, 7
  %v2529 = vsub.s32 %v2387, %v2528
  %v2530 = vrot.slane %v2344, %v2529
  %v2531 = vlaneseq
  %v2532 = vshrl.u32 %v2531, 7
  %v2533 = vsub.s32 %v2392, %v2532
  %v2534 = vrot.slane %v2347, %v2533
  %v2535 = vsel %vm2397, %v2534, %v2530
  %v2536 = vlaneseq
  %v2537 = vshrl.u32 %v2536, 7
  %v2538 = vsub.s32 %v2399, %v2537
  %v2539 = vrot.slane %v2350, %v2538
  %v2540 = vsel %vm2404, %v2539, %v2535
  %v2541 = vlaneseq
  %v2542 = vshrl.u32 %v2541, 7
  %v2543 = vsub.s32 %v2406, %v2542
  %v2544 = vrot.slane %v2353, %v2543
  %v2545 = vsel %vm2411, %v2544, %v2540
  %vm2546 = vcmask 1041409
  %v2547 = vsel %vm2546, %v2431, %v2412
  %vm2548 = vcmask 1042434
  %v2549 = vsel %vm2548, %v2450, %v2547
  %vm2550 = vcmask 1043459
  %v2551 = vsel %vm2550, %v2469, %v2549
  %vm2552 = vcmask 1044484
  %v2553 = vsel %vm2552, %v2488, %v2551
  %vm2554 = vcmask 1045509
  %v2555 = vsel %vm2554, %v2507, %v2553
  %vm2556 = vcmask 1046534
  %v2557 = vsel %vm2556, %v2526, %v2555
  %vm2558 = vcmask 1047559
  %v2559 = vsel %vm2558, %v2545, %v2557
  %vm2561 = vcmask 261120
  %v2562 = vsel %vm2561, %v2559, 0.0
  %2563 = vadd.xlane.f32.xlu0 %v2562
  %v2564 = vpop.xlane.xlu0 %2563
  %s2565 = scalar_lea.vmem %s7, 32
  %v2566 = vld [vmem:[%s2565] sm:$0xff]
  %v2567 = vld [vmem:[%s2565 + $0x8] sm:$0xff]
  %v2568 = vld [vmem:[%s2565 + $0x10] sm:$0xff]
  %v2569 = vld [vmem:[%s2565 + $0x18] sm:$0xff]
  %v2570 = vmul.f32 %v2189, %v2566
  %v2571 = vmul.f32 %v2190, %v2567
  %v2572 = vmul.f32 %v2191, %v2568
  %v2573 = vmul.f32 %v2192, %v2569
  %v2574 = vmul.f32 %v2193, %v2566
  %v2575 = vmul.f32 %v2194, %v2567
  %v2576 = vmul.f32 %v2195, %v2568
  %v2577 = vmul.f32 %v2196, %v2569
  %v2578 = vmul.f32 %v2197, %v2566
  %v2579 = vmul.f32 %v2198, %v2567
  %v2580 = vmul.f32 %v2199, %v2568
  %v2581 = vmul.f32 %v2200, %v2569
  %v2582 = vmul.f32 %v2201, %v2566
  %v2583 = vmul.f32 %v2202, %v2567
  %v2584 = vmul.f32 %v2203, %v2568
  %v2585 = vmul.f32 %v2204, %v2569
  %v2586 = vmul.f32 %v2205, %v2566
  %v2587 = vmul.f32 %v2206, %v2567
  %v2588 = vmul.f32 %v2207, %v2568
  %v2589 = vmul.f32 %v2208, %v2569
  %v2590 = vmul.f32 %v2209, %v2566
  %v2591 = vmul.f32 %v2210, %v2567
  %v2592 = vmul.f32 %v2211, %v2568
  %v2593 = vmul.f32 %v2212, %v2569
  %v2594 = vmul.f32 %v2213, %v2566
  %v2595 = vmul.f32 %v2214, %v2567
  %v2596 = vmul.f32 %v2215, %v2568
  %v2597 = vmul.f32 %v2216, %v2569
  %v2598 = vmul.f32 %v2217, %v2566
  %v2599 = vmul.f32 %v2218, %v2567
  %v2600 = vmul.f32 %v2219, %v2568
  %v2601 = vmul.f32 %v2220, %v2569
  %v2602 = vsel %vm2257, %v2570, 0.0
  %2603 = vadd.xlane.f32.xlu0 %v2602
  %v2604 = vpop.xlane.xlu0 %2603
  %v2605 = vsel %vm2257, %v2571, 0.0
  %2606 = vadd.xlane.f32.xlu0 %v2605
  %v2607 = vpop.xlane.xlu0 %2606
  %v2608 = vsel %vm2257, %v2572, 0.0
  %2609 = vadd.xlane.f32.xlu0 %v2608
  %v2610 = vpop.xlane.xlu0 %2609
  %v2611 = vsel %vm2257, %v2573, 0.0
  %2612 = vadd.xlane.f32.xlu0 %v2611
  %v2613 = vpop.xlane.xlu0 %2612
  %v2614 = vsel %vm2257, %v2574, 0.0
  %2615 = vadd.xlane.f32.xlu0 %v2614
  %v2616 = vpop.xlane.xlu0 %2615
  %v2617 = vsel %vm2257, %v2575, 0.0
  %2618 = vadd.xlane.f32.xlu0 %v2617
  %v2619 = vpop.xlane.xlu0 %2618
  %v2620 = vsel %vm2257, %v2576, 0.0
  %2621 = vadd.xlane.f32.xlu0 %v2620
  %v2622 = vpop.xlane.xlu0 %2621
  %v2623 = vsel %vm2257, %v2577, 0.0
  %2624 = vadd.xlane.f32.xlu0 %v2623
  %v2625 = vpop.xlane.xlu0 %2624
  %v2626 = vsel %vm2257, %v2578, 0.0
  %2627 = vadd.xlane.f32.xlu0 %v2626
  %v2628 = vpop.xlane.xlu0 %2627
  %v2629 = vsel %vm2257, %v2579, 0.0
  %2630 = vadd.xlane.f32.xlu0 %v2629
  %v2631 = vpop.xlane.xlu0 %2630
  %v2632 = vsel %vm2257, %v2580, 0.0
  %2633 = vadd.xlane.f32.xlu0 %v2632
  %v2634 = vpop.xlane.xlu0 %2633
  %v2635 = vsel %vm2257, %v2581, 0.0
  %2636 = vadd.xlane.f32.xlu0 %v2635
  %v2637 = vpop.xlane.xlu0 %2636
  %v2638 = vsel %vm2257, %v2582, 0.0
  %2639 = vadd.xlane.f32.xlu0 %v2638
  %v2640 = vpop.xlane.xlu0 %2639
  %v2641 = vsel %vm2257, %v2583, 0.0
  %2642 = vadd.xlane.f32.xlu0 %v2641
  %v2643 = vpop.xlane.xlu0 %2642
  %v2644 = vsel %vm2257, %v2584, 0.0
  %2645 = vadd.xlane.f32.xlu0 %v2644
  %v2646 = vpop.xlane.xlu0 %2645
  %v2647 = vsel %vm2257, %v2585, 0.0
  %2648 = vadd.xlane.f32.xlu0 %v2647
  %v2649 = vpop.xlane.xlu0 %2648
  %v2650 = vsel %vm2257, %v2586, 0.0
  %2651 = vadd.xlane.f32.xlu0 %v2650
  %v2652 = vpop.xlane.xlu0 %2651
  %v2653 = vsel %vm2257, %v2587, 0.0
  %2654 = vadd.xlane.f32.xlu0 %v2653
  %v2655 = vpop.xlane.xlu0 %2654
  %v2656 = vsel %vm2257, %v2588, 0.0
  %2657 = vadd.xlane.f32.xlu0 %v2656
  %v2658 = vpop.xlane.xlu0 %2657
  %v2659 = vsel %vm2257, %v2589, 0.0
  %2660 = vadd.xlane.f32.xlu0 %v2659
  %v2661 = vpop.xlane.xlu0 %2660
  %v2662 = vsel %vm2257, %v2590, 0.0
  %2663 = vadd.xlane.f32.xlu0 %v2662
  %v2664 = vpop.xlane.xlu0 %2663
  %v2665 = vsel %vm2257, %v2591, 0.0
  %2666 = vadd.xlane.f32.xlu0 %v2665
  %v2667 = vpop.xlane.xlu0 %2666
  %v2668 = vsel %vm2257, %v2592, 0.0
  %2669 = vadd.xlane.f32.xlu0 %v2668
  %v2670 = vpop.xlane.xlu0 %2669
  %v2671 = vsel %vm2257, %v2593, 0.0
  %2672 = vadd.xlane.f32.xlu0 %v2671
  %v2673 = vpop.xlane.xlu0 %2672
  %v2674 = vsel %vm2257, %v2594, 0.0
  %2675 = vadd.xlane.f32.xlu0 %v2674
  %v2676 = vpop.xlane.xlu0 %2675
  %v2677 = vsel %vm2257, %v2595, 0.0
  %2678 = vadd.xlane.f32.xlu0 %v2677
  %v2679 = vpop.xlane.xlu0 %2678
  %v2680 = vsel %vm2257, %v2596, 0.0
  %2681 = vadd.xlane.f32.xlu0 %v2680
  %v2682 = vpop.xlane.xlu0 %2681
  %v2683 = vsel %vm2257, %v2597, 0.0
  %2684 = vadd.xlane.f32.xlu0 %v2683
  %v2685 = vpop.xlane.xlu0 %2684
  %v2686 = vsel %vm2257, %v2598, 0.0
  %2687 = vadd.xlane.f32.xlu0 %v2686
  %v2688 = vpop.xlane.xlu0 %2687
  %v2689 = vsel %vm2257, %v2599, 0.0
  %2690 = vadd.xlane.f32.xlu0 %v2689
  %v2691 = vpop.xlane.xlu0 %2690
  %v2692 = vsel %vm2257, %v2600, 0.0
  %2693 = vadd.xlane.f32.xlu0 %v2692
  %v2694 = vpop.xlane.xlu0 %2693
  %v2695 = vsel %vm2257, %v2601, 0.0
  %2696 = vadd.xlane.f32.xlu0 %v2695
  %v2697 = vpop.xlane.xlu0 %2696
  %v2730 = vlaneseq
  %v2731 = vshrl.u32 %v2730, 7
  %v2732 = vsub.s32 %v2387, %v2731
  %v2733 = vrot.slane %v2604, %v2732
  %v2734 = vlaneseq
  %v2735 = vshrl.u32 %v2734, 7
  %v2736 = vsub.s32 %v2392, %v2735
  %v2737 = vrot.slane %v2607, %v2736
  %v2738 = vsel %vm2397, %v2737, %v2733
  %v2739 = vlaneseq
  %v2740 = vshrl.u32 %v2739, 7
  %v2741 = vsub.s32 %v2399, %v2740
  %v2742 = vrot.slane %v2610, %v2741
  %v2743 = vsel %vm2404, %v2742, %v2738
  %v2744 = vlaneseq
  %v2745 = vshrl.u32 %v2744, 7
  %v2746 = vsub.s32 %v2406, %v2745
  %v2747 = vrot.slane %v2613, %v2746
  %v2748 = vsel %vm2411, %v2747, %v2743
  %v2749 = vlaneseq
  %v2750 = vshrl.u32 %v2749, 7
  %v2751 = vsub.s32 %v2387, %v2750
  %v2752 = vrot.slane %v2616, %v2751
  %v2753 = vlaneseq
  %v2754 = vshrl.u32 %v2753, 7
  %v2755 = vsub.s32 %v2392, %v2754
  %v2756 = vrot.slane %v2619, %v2755
  %v2757 = vsel %vm2397, %v2756, %v2752
  %v2758 = vlaneseq
  %v2759 = vshrl.u32 %v2758, 7
  %v2760 = vsub.s32 %v2399, %v2759
  %v2761 = vrot.slane %v2622, %v2760
  %v2762 = vsel %vm2404, %v2761, %v2757
  %v2763 = vlaneseq
  %v2764 = vshrl.u32 %v2763, 7
  %v2765 = vsub.s32 %v2406, %v2764
  %v2766 = vrot.slane %v2625, %v2765
  %v2767 = vsel %vm2411, %v2766, %v2762
  %v2768 = vlaneseq
  %v2769 = vshrl.u32 %v2768, 7
  %v2770 = vsub.s32 %v2387, %v2769
  %v2771 = vrot.slane %v2628, %v2770
  %v2772 = vlaneseq
  %v2773 = vshrl.u32 %v2772, 7
  %v2774 = vsub.s32 %v2392, %v2773
  %v2775 = vrot.slane %v2631, %v2774
  %v2776 = vsel %vm2397, %v2775, %v2771
  %v2777 = vlaneseq
  %v2778 = vshrl.u32 %v2777, 7
  %v2779 = vsub.s32 %v2399, %v2778
  %v2780 = vrot.slane %v2634, %v2779
  %v2781 = vsel %vm2404, %v2780, %v2776
  %v2782 = vlaneseq
  %v2783 = vshrl.u32 %v2782, 7
  %v2784 = vsub.s32 %v2406, %v2783
  %v2785 = vrot.slane %v2637, %v2784
  %v2786 = vsel %vm2411, %v2785, %v2781
  %v2787 = vlaneseq
  %v2788 = vshrl.u32 %v2787, 7
  %v2789 = vsub.s32 %v2387, %v2788
  %v2790 = vrot.slane %v2640, %v2789
  %v2791 = vlaneseq
  %v2792 = vshrl.u32 %v2791, 7
  %v2793 = vsub.s32 %v2392, %v2792
  %v2794 = vrot.slane %v2643, %v2793
  %v2795 = vsel %vm2397, %v2794, %v2790
  %v2796 = vlaneseq
  %v2797 = vshrl.u32 %v2796, 7
  %v2798 = vsub.s32 %v2399, %v2797
  %v2799 = vrot.slane %v2646, %v2798
  %v2800 = vsel %vm2404, %v2799, %v2795
  %v2801 = vlaneseq
  %v2802 = vshrl.u32 %v2801, 7
  %v2803 = vsub.s32 %v2406, %v2802
  %v2804 = vrot.slane %v2649, %v2803
  %v2805 = vsel %vm2411, %v2804, %v2800
  %v2806 = vlaneseq
  %v2807 = vshrl.u32 %v2806, 7
  %v2808 = vsub.s32 %v2387, %v2807
  %v2809 = vrot.slane %v2652, %v2808
  %v2810 = vlaneseq
  %v2811 = vshrl.u32 %v2810, 7
  %v2812 = vsub.s32 %v2392, %v2811
  %v2813 = vrot.slane %v2655, %v2812
  %v2814 = vsel %vm2397, %v2813, %v2809
  %v2815 = vlaneseq
  %v2816 = vshrl.u32 %v2815, 7
  %v2817 = vsub.s32 %v2399, %v2816
  %v2818 = vrot.slane %v2658, %v2817
  %v2819 = vsel %vm2404, %v2818, %v2814
  %v2820 = vlaneseq
  %v2821 = vshrl.u32 %v2820, 7
  %v2822 = vsub.s32 %v2406, %v2821
  %v2823 = vrot.slane %v2661, %v2822
  %v2824 = vsel %vm2411, %v2823, %v2819
  %v2825 = vlaneseq
  %v2826 = vshrl.u32 %v2825, 7
  %v2827 = vsub.s32 %v2387, %v2826
  %v2828 = vrot.slane %v2664, %v2827
  %v2829 = vlaneseq
  %v2830 = vshrl.u32 %v2829, 7
  %v2831 = vsub.s32 %v2392, %v2830
  %v2832 = vrot.slane %v2667, %v2831
  %v2833 = vsel %vm2397, %v2832, %v2828
  %v2834 = vlaneseq
  %v2835 = vshrl.u32 %v2834, 7
  %v2836 = vsub.s32 %v2399, %v2835
  %v2837 = vrot.slane %v2670, %v2836
  %v2838 = vsel %vm2404, %v2837, %v2833
  %v2839 = vlaneseq
  %v2840 = vshrl.u32 %v2839, 7
  %v2841 = vsub.s32 %v2406, %v2840
  %v2842 = vrot.slane %v2673, %v2841
  %v2843 = vsel %vm2411, %v2842, %v2838
  %v2844 = vlaneseq
  %v2845 = vshrl.u32 %v2844, 7
  %v2846 = vsub.s32 %v2387, %v2845
  %v2847 = vrot.slane %v2676, %v2846
  %v2848 = vlaneseq
  %v2849 = vshrl.u32 %v2848, 7
  %v2850 = vsub.s32 %v2392, %v2849
  %v2851 = vrot.slane %v2679, %v2850
  %v2852 = vsel %vm2397, %v2851, %v2847
  %v2853 = vlaneseq
  %v2854 = vshrl.u32 %v2853, 7
  %v2855 = vsub.s32 %v2399, %v2854
  %v2856 = vrot.slane %v2682, %v2855
  %v2857 = vsel %vm2404, %v2856, %v2852
  %v2858 = vlaneseq
  %v2859 = vshrl.u32 %v2858, 7
  %v2860 = vsub.s32 %v2406, %v2859
  %v2861 = vrot.slane %v2685, %v2860
  %v2862 = vsel %vm2411, %v2861, %v2857
  %v2863 = vlaneseq
  %v2864 = vshrl.u32 %v2863, 7
  %v2865 = vsub.s32 %v2387, %v2864
  %v2866 = vrot.slane %v2688, %v2865
  %v2867 = vlaneseq
  %v2868 = vshrl.u32 %v2867, 7
  %v2869 = vsub.s32 %v2392, %v2868
  %v2870 = vrot.slane %v2691, %v2869
  %v2871 = vsel %vm2397, %v2870, %v2866
  %v2872 = vlaneseq
  %v2873 = vshrl.u32 %v2872, 7
  %v2874 = vsub.s32 %v2399, %v2873
  %v2875 = vrot.slane %v2694, %v2874
  %v2876 = vsel %vm2404, %v2875, %v2871
  %v2877 = vlaneseq
  %v2878 = vshrl.u32 %v2877, 7
  %v2879 = vsub.s32 %v2406, %v2878
  %v2880 = vrot.slane %v2697, %v2879
  %v2881 = vsel %vm2411, %v2880, %v2876
  %v2882 = vsel %vm2546, %v2767, %v2748
  %v2883 = vsel %vm2548, %v2786, %v2882
  %v2884 = vsel %vm2550, %v2805, %v2883
  %v2885 = vsel %vm2552, %v2824, %v2884
  %v2886 = vsel %vm2554, %v2843, %v2885
  %v2887 = vsel %vm2556, %v2862, %v2886
  %v2888 = vsel %vm2558, %v2881, %v2887
  %v2890 = vsel %vm2561, %v2888, 0.0
  %2891 = vadd.xlane.f32.xlu0 %v2890
  %v2892 = vpop.xlane.xlu0 %2891
  %vm2893 = vcmask 7168
  %v2894 = vsel %vm2893, %v2564, %v2892
  %v2895 = vld [vmem:[%s8] sm:$0x1]
  %v2897 = vlaneseq
  %v2898 = vshrl.u32 %v2897, 7
  %v2899 = vsub.s32 0, %v2898
  %v2900 = vrot.slane %v2895, %v2899
  %v2902 = vadd.f32 %v2894, %v2900
  %vm2903 = vcmask 15360
  %2904 = vst.msk [vmem:[%s9] sm:$0xff] %vm2903, %v2902
  // Predicated region
  $region45: #{tpu_custom_call.1} parent=0 // pred_check
    _
  $region46: #{tpu_custom_call.1} parent=0 // pred_check_branch
    %2906 = sbr.rel (0) target = $region48
  $region47: #{tpu_custom_call.1} parent=0 // pred_region
    _
  $region48: #{tpu_custom_call.1} parent=0 // pred_fallthru
    _
  // Predicated region
  $region49: #{tpu_custom_call.1} parent=0 // pred_check
    _
  $region50: #{tpu_custom_call.1} parent=0 // pred_check_branch
    %2908 = sbr.rel (0) target = $region52
  $region51: #{tpu_custom_call.1} parent=0 // pred_region
    _
  $region52: #{tpu_custom_call.1} parent=0 // pred_fallthru
    _

</llo_original>
